<compile_context>
chip_gen: v6e
topology: v6e:2x2x1
jax: 0.10.0
libtpu: 0.0.40
codegen_flags: <defaults>
</compile_context>

<pallas_src>
import functools
import math

import jax
import jax.numpy as jnp
from jax import lax
from jax.experimental import pallas as pl
from jax.experimental.pallas import tpu as pltpu

EPS = 1e-5  # PyTorch nn.LayerNorm default


# ---------------------------------------------------------------------------
# helpers used inside the kernel
# ---------------------------------------------------------------------------
def _layernorm(x, gamma, beta):
    mean = jnp.mean(x, axis=-1, keepdims=True)
    var = jnp.mean((x - mean) ** 2, axis=-1, keepdims=True)
    return (x - mean) * lax.rsqrt(var + EPS) * gamma + beta


def _gelu_exact(x):
    # nn.GELU() default = exact erf formulation
    return 0.5 * x * (1.0 + lax.erf(x * (1.0 / math.sqrt(2.0))))


# ---------------------------------------------------------------------------
# fused encoder kernel: grid = (batch, layer)
# ---------------------------------------------------------------------------
def encoder_kernel(num_heads, add_pos_every_layer,
                   x_ref, pos_ref,
                   wqkv_ref, wproj_ref, bproj_ref,
                   w1_ref, b1_ref, w2_ref, b2_ref,
                   g1_ref, be1_ref, g2_ref, be2_ref,
                   gf_ref, bf_ref,
                   o_ref,
                   x_acc):
    layer = pl.program_id(1)
    n_layers = pl.num_programs(1)

    # ---- initialize the resident activation at the first layer ----
    @pl.when(layer == 0)
    def _():
        init = x_ref[0]
        if not add_pos_every_layer:
            init = init + pos_ref[0]
        x_acc[...] = init

    x = x_acc[...]                              # (N, C) f32, resident in VMEM
    if add_pos_every_layer:
        x = x + pos_ref[0]

    N, C = x.shape
    hd = C // num_heads
    scale = 1.0 / math.sqrt(hd)

    # ---- attention branch: x + Proj(MHSA(LN1(x))) ----
    h = _layernorm(x, g1_ref[0], be1_ref[0]).astype(jnp.bfloat16)
    qkv = jnp.dot(h, wqkv_ref[0], preferred_element_type=jnp.float32)  # (N, 3C)

    wproj = wproj_ref[0]                        # (C, C) bf16
    attn_acc = jnp.zeros((N, C), jnp.float32)
    for hh in range(num_heads):                 # static unroll, no concatenate
        lo = hh * hd
        qh = qkv[:, lo:lo + hd].astype(jnp.bfloat16)            # (N, hd)
        kh = qkv[:, C + lo:C + lo + hd].astype(jnp.bfloat16)    # (N, hd)
        vh = qkv[:, 2 * C + lo:2 * C + lo + hd].astype(jnp.bfloat16)
        # scores = q @ k.T  (contract head dim of both, no explicit transpose)
        s = lax.dot_general(qh, kh, (((1,), (1,)), ((), ())),
                            preferred_element_type=jnp.float32) * scale
        s = s - jnp.max(s, axis=-1, keepdims=True)
        p = jnp.exp(s)
        p = p * pl.reciprocal(jnp.sum(p, axis=-1, keepdims=True), approx=True)
        oh = jnp.dot(p.astype(jnp.bfloat16), vh,
                     preferred_element_type=jnp.float32)        # (N, hd)
        # fold the output projection per head into one (N, C) accumulator
        attn_acc = attn_acc + jnp.dot(oh.astype(jnp.bfloat16),
                                      wproj[lo:lo + hd, :],
                                      preferred_element_type=jnp.float32)
    x = x + attn_acc + bproj_ref[0]

    # ---- MLP branch: x + FC2(GELU(FC1(LN2(x)))) ----
    h2 = _layernorm(x, g2_ref[0], be2_ref[0]).astype(jnp.bfloat16)
    f = jnp.dot(h2, w1_ref[0], preferred_element_type=jnp.float32) + b1_ref[0]
    f = _gelu_exact(f)
    f = jnp.dot(f.astype(jnp.bfloat16), w2_ref[0],
                preferred_element_type=jnp.float32) + b2_ref[0]
    x = x + f

    x_acc[...] = x                              # keep resident for next layer

    # ---- final LayerNorm, fused, only on the last layer iteration ----
    @pl.when(layer == n_layers - 1)
    def _():
        o_ref[0] = _layernorm(x, gf_ref[...], bf_ref[...])


# ---------------------------------------------------------------------------
# wrapper
# ---------------------------------------------------------------------------
def transformer_encoder_forward(x, pos, p, final_gamma, final_beta,
                                num_heads, add_pos_at_every_layer=False):
    """p is a dict of per-layer-stacked params (leading axis = depth)."""
    B, N, C = x.shape
    depth = p["wqkv"].shape[0]
    H = p["w1"].shape[-1]

    def xspec():
        return pl.BlockSpec((1, N, C), lambda b, l: (b, 0, 0))

    def wspec(*dims):
        nd = len(dims)
        return pl.BlockSpec((1,) + dims, lambda b, l, _nd=nd: (l,) + (0,) * _nd)

    in_specs = [
        xspec(),                                   # x
        xspec(),                                   # pos
        wspec(C, 3 * C),                           # wqkv      (bf16)
        wspec(C, C),                               # wproj     (bf16)
        wspec(1, C),                               # bproj
        wspec(C, H),                               # w1        (bf16)
        wspec(1, H),                               # b1
        wspec(H, C),                               # w2        (bf16)
        wspec(1, C),                               # b2
        wspec(1, C), wspec(1, C),                  # ln1 gamma / beta
        wspec(1, C), wspec(1, C),                  # ln2 gamma / beta
        pl.BlockSpec((1, C), lambda b, l: (0, 0)),  # final gamma
        pl.BlockSpec((1, C), lambda b, l: (0, 0)),  # final beta
    ]

    kernel = functools.partial(encoder_kernel, num_heads, add_pos_at_every_layer)

    return pl.pallas_call(
        kernel,
        out_shape=jax.ShapeDtypeStruct((B, N, C), jnp.float32),
        grid=(B, depth),
        in_specs=in_specs,
        out_specs=pl.BlockSpec((1, N, C), lambda b, l: (b, 0, 0)),
        scratch_shapes=[pltpu.VMEM((N, C), jnp.float32)],
        compiler_params=pltpu.CompilerParams(
            dimension_semantics=("parallel", "arbitrary")),
    )(x, pos,
      p["wqkv"], p["wproj"], p["bproj"],
      p["w1"], p["b1"], p["w2"], p["b2"],
      p["g1"], p["be1"], p["g2"], p["be2"],
      final_gamma, final_beta)


# ---------------------------------------------------------------------------
# pure-JAX f32 reference (for correctness check only)
# ---------------------------------------------------------------------------
def _ref_layernorm(x, g, b):
    m = jnp.mean(x, axis=-1, keepdims=True)
    v = jnp.mean((x - m) ** 2, axis=-1, keepdims=True)
    return (x - m) / jnp.sqrt(v + EPS) * g + b


def reference_forward(x, pos, p, fg, fb, num_heads):
    x = x + pos
    B, N, C = x.shape
    depth = p["wqkv"].shape[0]
    hd = C // num_heads
    for i in range(depth):
        h = _ref_layernorm(x, p["g1"][i], p["be1"][i])
        qkv = h @ p["wqkv"][i]
        q, k, v = qkv[..., :C], qkv[..., C:2 * C], qkv[..., 2 * C:]
        q = q.reshape(B, N, num_heads, hd).transpose(0, 2, 1, 3)
        k = k.reshape(B, N, num_heads, hd).transpose(0, 2, 1, 3)
        v = v.reshape(B, N, num_heads, hd).transpose(0, 2, 1, 3)
        s = jnp.einsum("bhqd,bhkd->bhqk", q, k) / math.sqrt(hd)
        a = jax.nn.softmax(s, axis=-1)
        o = jnp.einsum("bhqk,bhkd->bhqd", a, v).transpose(0, 2, 1, 3).reshape(B, N, C)
        o = o @ p["wproj"][i] + p["bproj"][i]
        x = x + o
        h2 = _ref_layernorm(x, p["g2"][i], p["be2"][i])
        f = jax.nn.gelu(h2 @ p["w1"][i] + p["b1"][i], approximate=False)
        f = f @ p["w2"][i] + p["b2"][i]
        x = x + f
    return _ref_layernorm(x, fg, fb)


# ---------------------------------------------------------------------------
# main
# ---------------------------------------------------------------------------
key = jax.random.PRNGKey(0)


def rnd(shape, scale=0.02):
    """Deterministic random f32 tensor; splits the global key on demand."""
    global key
    key, sub = jax.random.split(key)
    return (scale * jax.random.normal(sub, shape)).astype(jnp.float32)


if __name__ == "__main__":
    # small but lane-dense config (C multiple of 128)
    B, N, C = 2, 32, 128       # batch, sequence, embed_dim
    num_heads = 4              # head_dim = 32
    depth = 2
    H = int(C * 4.0)           # mlp hidden

    x = jax.random.normal(jax.random.PRNGKey(1), (B, N, C), dtype=jnp.float32)
    pos = jax.random.normal(jax.random.PRNGKey(2), (B, N, C), dtype=jnp.float32)

    def rnd_w(shape, scale=0.02):
        # matmul weights are quantized to bf16 once so the f32 reference uses
        # the exact same (bf16-representable) values
        return rnd(shape, scale).astype(jnp.bfloat16).astype(jnp.float32)

    layers = []
    for _ in range(depth):
        layers.append(dict(
            wqkv=rnd_w((C, 3 * C)),          # qkv_bias=False -> no bias
            wproj=rnd_w((C, C)),
            bproj=rnd((1, C)),
            w1=rnd_w((C, H)),
            b1=rnd((1, H)),
            w2=rnd_w((H, C)),
            b2=rnd((1, C)),
            g1=1.0 + rnd((1, C)),
            be1=rnd((1, C)),
            g2=1.0 + rnd((1, C)),
            be2=rnd((1, C)),
        ))
    stacked_f32 = {k: jnp.stack([lp[k] for lp in layers]) for k in layers[0]}

    # kernel-side params: matmul weights in bf16, everything else f32
    kernel_params = dict(stacked_f32)
    for name in ("wqkv", "wproj", "w1", "w2"):
        kernel_params[name] = stacked_f32[name].astype(jnp.bfloat16)

    final_gamma = 1.0 + rnd((1, C))
    final_beta = rnd((1, C))

    out = transformer_encoder_forward(x, pos, kernel_params,
                                      final_gamma, final_beta, num_heads)
    out = jax.block_until_ready(out)

    ref = reference_forward(x, pos, stacked_f32, final_gamma, final_beta, num_heads)
    assert out.shape == (B, N, C)
    max_err = float(jnp.max(jnp.abs(out - ref)))
    # bf16 matmul operands (f32 accumulation) -> loosened tolerance vs f32 ref
    assert max_err < 3e-2, f"Pallas output mismatch vs reference: {max_err}"

    print("KERNEL_OK")
</pallas_src>

<mosaic_0001>
module attributes {stable_mosaic.version = 11 : i64} {
  func.func @encoder_kernel(%arg0: i32, %arg1: i32, %arg2: memref<1x32x128xf32, #tpu.memory_space<vmem>>, %arg3: memref<1x32x128xf32, #tpu.memory_space<vmem>>, %arg4: memref<1x128x384xbf16, #tpu.memory_space<vmem>>, %arg5: memref<1x128x128xbf16, #tpu.memory_space<vmem>>, %arg6: memref<1x1x128xf32, #tpu.memory_space<vmem>>, %arg7: memref<1x128x512xbf16, #tpu.memory_space<vmem>>, %arg8: memref<1x1x512xf32, #tpu.memory_space<vmem>>, %arg9: memref<1x512x128xbf16, #tpu.memory_space<vmem>>, %arg10: memref<1x1x128xf32, #tpu.memory_space<vmem>>, %arg11: memref<1x1x128xf32, #tpu.memory_space<vmem>>, %arg12: memref<1x1x128xf32, #tpu.memory_space<vmem>>, %arg13: memref<1x1x128xf32, #tpu.memory_space<vmem>>, %arg14: memref<1x1x128xf32, #tpu.memory_space<vmem>>, %arg15: memref<1x128xf32, #tpu.memory_space<vmem>>, %arg16: memref<1x128xf32, #tpu.memory_space<vmem>>, %arg17: memref<1x32x128xf32, #tpu.memory_space<vmem>>, %arg18: memref<32x128xf32, #tpu.memory_space<vmem>>) attributes {dimension_semantics = [#tpu.dimension_semantics<parallel>, #tpu.dimension_semantics<arbitrary>], iteration_bounds = array<i64: 2, 2>, scalar_prefetch = 0 : i64, scratch_operands = 1 : i64, tpu.core_type = #tpu.core_type<tc>, window_params = [{transform_indices = @transform_0, window_bounds = array<i64: 1, 32, 128>}, {transform_indices = @transform_1, window_bounds = array<i64: 1, 32, 128>}, {transform_indices = @transform_2, window_bounds = array<i64: 1, 128, 384>}, {transform_indices = @transform_3, window_bounds = array<i64: 1, 128, 128>}, {transform_indices = @transform_4, window_bounds = array<i64: 1, 1, 128>}, {transform_indices = @transform_5, window_bounds = array<i64: 1, 128, 512>}, {transform_indices = @transform_6, window_bounds = array<i64: 1, 1, 512>}, {transform_indices = @transform_7, window_bounds = array<i64: 1, 512, 128>}, {transform_indices = @transform_8, window_bounds = array<i64: 1, 1, 128>}, {transform_indices = @transform_9, window_bounds = array<i64: 1, 1, 128>}, {transform_indices = @transform_10, window_bounds = array<i64: 1, 1, 128>}, {transform_indices = @transform_11, window_bounds = array<i64: 1, 1, 128>}, {transform_indices = @transform_12, window_bounds = array<i64: 1, 1, 128>}, {pipeline_mode = #tpu.pipeline_mode<synchronous>, transform_indices = @transform_13, window_bounds = array<i64: 1, 128>}, {pipeline_mode = #tpu.pipeline_mode<synchronous>, transform_indices = @transform_14, window_bounds = array<i64: 1, 128>}, {transform_indices = @transform_15, window_bounds = array<i64: 1, 32, 128>}]} {
    %c0_i32 = arith.constant 0 : i32
    %0 = arith.cmpi eq, %arg1, %c0_i32 : i32
    %1 = arith.extui %0 : i1 to i32
    %c0_i32_0 = arith.constant 0 : i32
    %2 = arith.cmpi ne, %1, %c0_i32_0 : i32
    scf.if %2 {
      %c0_78 = arith.constant 0 : index
      %c0_79 = arith.constant 0 : index
      %c0_80 = arith.constant 0 : index
      %197 = vector.load %arg2[%c0_78, %c0_79, %c0_80] : memref<1x32x128xf32, #tpu.memory_space<vmem>>, vector<1x32x128xf32>
      %198 = vector.shape_cast %197 : vector<1x32x128xf32> to vector<32x128xf32>
      %c0_81 = arith.constant 0 : index
      %c0_82 = arith.constant 0 : index
      %c0_83 = arith.constant 0 : index
      %199 = vector.load %arg3[%c0_81, %c0_82, %c0_83] : memref<1x32x128xf32, #tpu.memory_space<vmem>>, vector<1x32x128xf32>
      %200 = vector.shape_cast %199 : vector<1x32x128xf32> to vector<32x128xf32>
      %201 = arith.addf %198, %200 : vector<32x128xf32>
      %c0_84 = arith.constant 0 : index
      %c0_85 = arith.constant 0 : index
      %202 = vector.load %arg18[%c0_84, %c0_85] : memref<32x128xf32, #tpu.memory_space<vmem>>, vector<32x128xf32>
      tpu.vector_store %arg18[%c0_84, %c0_85], %201 {strides = array<i32>} : memref<32x128xf32, #tpu.memory_space<vmem>>, vector<32x128xf32>,
    } else {
    }
    %c0 = arith.constant 0 : index
    %c0_1 = arith.constant 0 : index
    %3 = vector.load %arg18[%c0, %c0_1] : memref<32x128xf32, #tpu.memory_space<vmem>>, vector<32x128xf32>
    %c0_2 = arith.constant 0 : index
    %c0_3 = arith.constant 0 : index
    %c0_4 = arith.constant 0 : index
    %4 = vector.load %arg11[%c0_2, %c0_3, %c0_4] : memref<1x1x128xf32, #tpu.memory_space<vmem>>, vector<1x1x128xf32>
    %5 = vector.shape_cast %4 : vector<1x1x128xf32> to vector<1x128xf32>
    %c0_5 = arith.constant 0 : index
    %c0_6 = arith.constant 0 : index
    %c0_7 = arith.constant 0 : index
    %6 = vector.load %arg12[%c0_5, %c0_6, %c0_7] : memref<1x1x128xf32, #tpu.memory_space<vmem>>, vector<1x1x128xf32>
    %7 = vector.shape_cast %6 : vector<1x1x128xf32> to vector<1x128xf32>
    %cst = arith.constant dense<0.000000e+00> : vector<32xf32>
    %8 = vector.multi_reduction <add>, %3, %cst [1] : vector<32x128xf32> to vector<32xf32>
    %9 = vector.shape_cast %8 : vector<32xf32> to vector<32x1xf32>
    %cst_8 = arith.constant 1.280000e+02 : f32
    %10 = vector.broadcast %cst_8 : f32 to vector<32x1xf32>
    %11 = arith.divf %9, %10 : vector<32x1xf32>
    %12 = vector.broadcast %11 : vector<32x1xf32> to vector<32x128xf32>
    %13 = arith.subf %3, %12 : vector<32x128xf32>
    %14 = arith.mulf %13, %13 : vector<32x128xf32>
    %cst_9 = arith.constant dense<0.000000e+00> : vector<32xf32>
    %15 = vector.multi_reduction <add>, %14, %cst_9 [1] : vector<32x128xf32> to vector<32xf32>
    %16 = vector.shape_cast %15 : vector<32xf32> to vector<32x1xf32>
    %cst_10 = arith.constant 1.280000e+02 : f32
    %17 = vector.broadcast %cst_10 : f32 to vector<32x1xf32>
    %18 = arith.divf %16, %17 : vector<32x1xf32>
    %19 = vector.broadcast %11 : vector<32x1xf32> to vector<32x128xf32>
    %20 = arith.subf %3, %19 : vector<32x128xf32>
    %cst_11 = arith.constant 9.99999974E-6 : f32
    %21 = vector.broadcast %cst_11 : f32 to vector<32x1xf32>
    %22 = arith.addf %18, %21 : vector<32x1xf32>
    %23 = math.rsqrt %22 : vector<32x1xf32>
    %24 = vector.broadcast %23 : vector<32x1xf32> to vector<32x128xf32>
    %25 = arith.mulf %20, %24 : vector<32x128xf32>
    %26 = vector.broadcast %5 : vector<1x128xf32> to vector<32x128xf32>
    %27 = arith.mulf %25, %26 : vector<32x128xf32>
    %28 = vector.broadcast %7 : vector<1x128xf32> to vector<32x128xf32>
    %29 = arith.addf %27, %28 : vector<32x128xf32>
    %30 = arith.truncf %29 : vector<32x128xf32> to vector<32x128xbf16>
    %c0_12 = arith.constant 0 : index
    %c0_13 = arith.constant 0 : index
    %c0_14 = arith.constant 0 : index
    %31 = vector.load %arg4[%c0_12, %c0_13, %c0_14] : memref<1x128x384xbf16, #tpu.memory_space<vmem>>, vector<1x128x384xbf16>
    %32 = vector.shape_cast %31 : vector<1x128x384xbf16> to vector<128x384xbf16>
    %cst_15 = arith.constant dense<0.000000e+00> : vector<32x384xf32>
    %33 = tpu.matmul %30, %32, %cst_15 {dimension_numbers = #tpu.dot_dimension_numbers<[1], [0], [0], [1], [0, 0, 1, 1], [], []>} : vector<32x128xbf16>, vector<128x384xbf16>, vector<32x384xf32> -> vector<32x384xf32>
    %c0_16 = arith.constant 0 : index
    %c0_17 = arith.constant 0 : index
    %c0_18 = arith.constant 0 : index
    %34 = vector.load %arg5[%c0_16, %c0_17, %c0_18] : memref<1x128x128xbf16, #tpu.memory_space<vmem>>, vector<1x128x128xbf16>
    %35 = vector.shape_cast %34 : vector<1x128x128xbf16> to vector<128x128xbf16>
    %cst_19 = arith.constant 0.000000e+00 : f32
    %36 = vector.broadcast %cst_19 : f32 to vector<32x128xf32>
    %37 = vector.extract_strided_slice %33 {offsets = [0, 0], sizes = [32, 32], strides = [1, 1]} : vector<32x384xf32> to vector<32x32xf32>
    %38 = arith.truncf %37 : vector<32x32xf32> to vector<32x32xbf16>
    %39 = vector.extract_strided_slice %33 {offsets = [0, 128], sizes = [32, 32], strides = [1, 1]} : vector<32x384xf32> to vector<32x32xf32>
    %40 = arith.truncf %39 : vector<32x32xf32> to vector<32x32xbf16>
    %41 = vector.extract_strided_slice %33 {offsets = [0, 256], sizes = [32, 32], strides = [1, 1]} : vector<32x384xf32> to vector<32x32xf32>
    %42 = arith.truncf %41 : vector<32x32xf32> to vector<32x32xbf16>
    %cst_20 = arith.constant dense<0.000000e+00> : vector<32x32xf32>
    %43 = tpu.matmul %38, %40, %cst_20 {dimension_numbers = #tpu.dot_dimension_numbers<[1], [1], [0], [0], [0, 0, 1, 0], [], []>} : vector<32x32xbf16>, vector<32x32xbf16>, vector<32x32xf32> -> vector<32x32xf32>
    %cst_21 = arith.constant 0.176776692 : f32
    %44 = vector.broadcast %cst_21 : f32 to vector<32x32xf32>
    %45 = arith.mulf %43, %44 : vector<32x32xf32>
    %cst_22 = arith.constant dense<0xFF800000> : vector<32xf32>
    %46 = vector.multi_reduction <maximumf>, %45, %cst_22 [1] : vector<32x32xf32> to vector<32xf32>
    %47 = vector.shape_cast %46 : vector<32xf32> to vector<32x1xf32>
    %48 = vector.broadcast %47 : vector<32x1xf32> to vector<32x32xf32>
    %49 = arith.subf %45, %48 : vector<32x32xf32>
    %50 = math.exp %49 : vector<32x32xf32>
    %cst_23 = arith.constant dense<0.000000e+00> : vector<32xf32>
    %51 = vector.multi_reduction <add>, %50, %cst_23 [1] : vector<32x32xf32> to vector<32xf32>
    %52 = vector.shape_cast %51 : vector<32xf32> to vector<32x1xf32>
    %53 = tpu.reciprocal %52 {approx = true} : vector<32x1xf32> -> vector<32x1xf32>
    %54 = vector.broadcast %53 : vector<32x1xf32> to vector<32x32xf32>
    %55 = arith.mulf %50, %54 : vector<32x32xf32>
    %56 = arith.truncf %55 : vector<32x32xf32> to vector<32x32xbf16>
    %cst_24 = arith.constant dense<0.000000e+00> : vector<32x32xf32>
    %57 = tpu.matmul %56, %42, %cst_24 {dimension_numbers = #tpu.dot_dimension_numbers<[1], [0], [0], [1], [0, 0, 1, 1], [], []>} : vector<32x32xbf16>, vector<32x32xbf16>, vector<32x32xf32> -> vector<32x32xf32>
    %58 = arith.truncf %57 : vector<32x32xf32> to vector<32x32xbf16>
    %59 = vector.extract_strided_slice %35 {offsets = [0, 0], sizes = [32, 128], strides = [1, 1]} : vector<128x128xbf16> to vector<32x128xbf16>
    %cst_25 = arith.constant dense<0.000000e+00> : vector<32x128xf32>
    %60 = tpu.matmul %58, %59, %cst_25 {dimension_numbers = #tpu.dot_dimension_numbers<[1], [0], [0], [1], [0, 0, 1, 1], [], []>} : vector<32x32xbf16>, vector<32x128xbf16>, vector<32x128xf32> -> vector<32x128xf32>
    %61 = arith.addf %36, %60 : vector<32x128xf32>
    %62 = vector.extract_strided_slice %33 {offsets = [0, 32], sizes = [32, 32], strides = [1, 1]} : vector<32x384xf32> to vector<32x32xf32>
    %63 = arith.truncf %62 : vector<32x32xf32> to vector<32x32xbf16>
    %64 = vector.extract_strided_slice %33 {offsets = [0, 160], sizes = [32, 32], strides = [1, 1]} : vector<32x384xf32> to vector<32x32xf32>
    %65 = arith.truncf %64 : vector<32x32xf32> to vector<32x32xbf16>
    %66 = vector.extract_strided_slice %33 {offsets = [0, 288], sizes = [32, 32], strides = [1, 1]} : vector<32x384xf32> to vector<32x32xf32>
    %67 = arith.truncf %66 : vector<32x32xf32> to vector<32x32xbf16>
    %cst_26 = arith.constant dense<0.000000e+00> : vector<32x32xf32>
    %68 = tpu.matmul %63, %65, %cst_26 {dimension_numbers = #tpu.dot_dimension_numbers<[1], [1], [0], [0], [0, 0, 1, 0], [], []>} : vector<32x32xbf16>, vector<32x32xbf16>, vector<32x32xf32> -> vector<32x32xf32>
    %cst_27 = arith.constant 0.176776692 : f32
    %69 = vector.broadcast %cst_27 : f32 to vector<32x32xf32>
    %70 = arith.mulf %68, %69 : vector<32x32xf32>
    %cst_28 = arith.constant dense<0xFF800000> : vector<32xf32>
    %71 = vector.multi_reduction <maximumf>, %70, %cst_28 [1] : vector<32x32xf32> to vector<32xf32>
    %72 = vector.shape_cast %71 : vector<32xf32> to vector<32x1xf32>
    %73 = vector.broadcast %72 : vector<32x1xf32> to vector<32x32xf32>
    %74 = arith.subf %70, %73 : vector<32x32xf32>
    %75 = math.exp %74 : vector<32x32xf32>
    %cst_29 = arith.constant dense<0.000000e+00> : vector<32xf32>
    %76 = vector.multi_reduction <add>, %75, %cst_29 [1] : vector<32x32xf32> to vector<32xf32>
    %77 = vector.shape_cast %76 : vector<32xf32> to vector<32x1xf32>
    %78 = tpu.reciprocal %77 {approx = true} : vector<32x1xf32> -> vector<32x1xf32>
    %79 = vector.broadcast %78 : vector<32x1xf32> to vector<32x32xf32>
    %80 = arith.mulf %75, %79 : vector<32x32xf32>
    %81 = arith.truncf %80 : vector<32x32xf32> to vector<32x32xbf16>
    %cst_30 = arith.constant dense<0.000000e+00> : vector<32x32xf32>
    %82 = tpu.matmul %81, %67, %cst_30 {dimension_numbers = #tpu.dot_dimension_numbers<[1], [0], [0], [1], [0, 0, 1, 1], [], []>} : vector<32x32xbf16>, vector<32x32xbf16>, vector<32x32xf32> -> vector<32x32xf32>
    %83 = arith.truncf %82 : vector<32x32xf32> to vector<32x32xbf16>
    %84 = vector.extract_strided_slice %35 {offsets = [32, 0], sizes = [32, 128], strides = [1, 1]} : vector<128x128xbf16> to vector<32x128xbf16>
    %cst_31 = arith.constant dense<0.000000e+00> : vector<32x128xf32>
    %85 = tpu.matmul %83, %84, %cst_31 {dimension_numbers = #tpu.dot_dimension_numbers<[1], [0], [0], [1], [0, 0, 1, 1], [], []>} : vector<32x32xbf16>, vector<32x128xbf16>, vector<32x128xf32> -> vector<32x128xf32>
    %86 = arith.addf %61, %85 : vector<32x128xf32>
    %87 = vector.extract_strided_slice %33 {offsets = [0, 64], sizes = [32, 32], strides = [1, 1]} : vector<32x384xf32> to vector<32x32xf32>
    %88 = arith.truncf %87 : vector<32x32xf32> to vector<32x32xbf16>
    %89 = vector.extract_strided_slice %33 {offsets = [0, 192], sizes = [32, 32], strides = [1, 1]} : vector<32x384xf32> to vector<32x32xf32>
    %90 = arith.truncf %89 : vector<32x32xf32> to vector<32x32xbf16>
    %91 = vector.extract_strided_slice %33 {offsets = [0, 320], sizes = [32, 32], strides = [1, 1]} : vector<32x384xf32> to vector<32x32xf32>
    %92 = arith.truncf %91 : vector<32x32xf32> to vector<32x32xbf16>
    %cst_32 = arith.constant dense<0.000000e+00> : vector<32x32xf32>
    %93 = tpu.matmul %88, %90, %cst_32 {dimension_numbers = #tpu.dot_dimension_numbers<[1], [1], [0], [0], [0, 0, 1, 0], [], []>} : vector<32x32xbf16>, vector<32x32xbf16>, vector<32x32xf32> -> vector<32x32xf32>
    %cst_33 = arith.constant 0.176776692 : f32
    %94 = vector.broadcast %cst_33 : f32 to vector<32x32xf32>
    %95 = arith.mulf %93, %94 : vector<32x32xf32>
    %cst_34 = arith.constant dense<0xFF800000> : vector<32xf32>
    %96 = vector.multi_reduction <maximumf>, %95, %cst_34 [1] : vector<32x32xf32> to vector<32xf32>
    %97 = vector.shape_cast %96 : vector<32xf32> to vector<32x1xf32>
    %98 = vector.broadcast %97 : vector<32x1xf32> to vector<32x32xf32>
    %99 = arith.subf %95, %98 : vector<32x32xf32>
    %100 = math.exp %99 : vector<32x32xf32>
    %cst_35 = arith.constant dense<0.000000e+00> : vector<32xf32>
    %101 = vector.multi_reduction <add>, %100, %cst_35 [1] : vector<32x32xf32> to vector<32xf32>
    %102 = vector.shape_cast %101 : vector<32xf32> to vector<32x1xf32>
    %103 = tpu.reciprocal %102 {approx = true} : vector<32x1xf32> -> vector<32x1xf32>
    %104 = vector.broadcast %103 : vector<32x1xf32> to vector<32x32xf32>
    %105 = arith.mulf %100, %104 : vector<32x32xf32>
    %106 = arith.truncf %105 : vector<32x32xf32> to vector<32x32xbf16>
    %cst_36 = arith.constant dense<0.000000e+00> : vector<32x32xf32>
    %107 = tpu.matmul %106, %92, %cst_36 {dimension_numbers = #tpu.dot_dimension_numbers<[1], [0], [0], [1], [0, 0, 1, 1], [], []>} : vector<32x32xbf16>, vector<32x32xbf16>, vector<32x32xf32> -> vector<32x32xf32>
    %108 = arith.truncf %107 : vector<32x32xf32> to vector<32x32xbf16>
    %109 = vector.extract_strided_slice %35 {offsets = [64, 0], sizes = [32, 128], strides = [1, 1]} : vector<128x128xbf16> to vector<32x128xbf16>
    %cst_37 = arith.constant dense<0.000000e+00> : vector<32x128xf32>
    %110 = tpu.matmul %108, %109, %cst_37 {dimension_numbers = #tpu.dot_dimension_numbers<[1], [0], [0], [1], [0, 0, 1, 1], [], []>} : vector<32x32xbf16>, vector<32x128xbf16>, vector<32x128xf32> -> vector<32x128xf32>
    %111 = arith.addf %86, %110 : vector<32x128xf32>
    %112 = vector.extract_strided_slice %33 {offsets = [0, 96], sizes = [32, 32], strides = [1, 1]} : vector<32x384xf32> to vector<32x32xf32>
    %113 = arith.truncf %112 : vector<32x32xf32> to vector<32x32xbf16>
    %114 = vector.extract_strided_slice %33 {offsets = [0, 224], sizes = [32, 32], strides = [1, 1]} : vector<32x384xf32> to vector<32x32xf32>
    %115 = arith.truncf %114 : vector<32x32xf32> to vector<32x32xbf16>
    %116 = vector.extract_strided_slice %33 {offsets = [0, 352], sizes = [32, 32], strides = [1, 1]} : vector<32x384xf32> to vector<32x32xf32>
    %117 = arith.truncf %116 : vector<32x32xf32> to vector<32x32xbf16>
    %cst_38 = arith.constant dense<0.000000e+00> : vector<32x32xf32>
    %118 = tpu.matmul %113, %115, %cst_38 {dimension_numbers = #tpu.dot_dimension_numbers<[1], [1], [0], [0], [0, 0, 1, 0], [], []>} : vector<32x32xbf16>, vector<32x32xbf16>, vector<32x32xf32> -> vector<32x32xf32>
    %cst_39 = arith.constant 0.176776692 : f32
    %119 = vector.broadcast %cst_39 : f32 to vector<32x32xf32>
    %120 = arith.mulf %118, %119 : vector<32x32xf32>
    %cst_40 = arith.constant dense<0xFF800000> : vector<32xf32>
    %121 = vector.multi_reduction <maximumf>, %120, %cst_40 [1] : vector<32x32xf32> to vector<32xf32>
    %122 = vector.shape_cast %121 : vector<32xf32> to vector<32x1xf32>
    %123 = vector.broadcast %122 : vector<32x1xf32> to vector<32x32xf32>
    %124 = arith.subf %120, %123 : vector<32x32xf32>
    %125 = math.exp %124 : vector<32x32xf32>
    %cst_41 = arith.constant dense<0.000000e+00> : vector<32xf32>
    %126 = vector.multi_reduction <add>, %125, %cst_41 [1] : vector<32x32xf32> to vector<32xf32>
    %127 = vector.shape_cast %126 : vector<32xf32> to vector<32x1xf32>
    %128 = tpu.reciprocal %127 {approx = true} : vector<32x1xf32> -> vector<32x1xf32>
    %129 = vector.broadcast %128 : vector<32x1xf32> to vector<32x32xf32>
    %130 = arith.mulf %125, %129 : vector<32x32xf32>
    %131 = arith.truncf %130 : vector<32x32xf32> to vector<32x32xbf16>
    %cst_42 = arith.constant dense<0.000000e+00> : vector<32x32xf32>
    %132 = tpu.matmul %131, %117, %cst_42 {dimension_numbers = #tpu.dot_dimension_numbers<[1], [0], [0], [1], [0, 0, 1, 1], [], []>} : vector<32x32xbf16>, vector<32x32xbf16>, vector<32x32xf32> -> vector<32x32xf32>
    %133 = arith.truncf %132 : vector<32x32xf32> to vector<32x32xbf16>
    %134 = vector.extract_strided_slice %35 {offsets = [96, 0], sizes = [32, 128], strides = [1, 1]} : vector<128x128xbf16> to vector<32x128xbf16>
    %cst_43 = arith.constant dense<0.000000e+00> : vector<32x128xf32>
    %135 = tpu.matmul %133, %134, %cst_43 {dimension_numbers = #tpu.dot_dimension_numbers<[1], [0], [0], [1], [0, 0, 1, 1], [], []>} : vector<32x32xbf16>, vector<32x128xbf16>, vector<32x128xf32> -> vector<32x128xf32>
    %136 = arith.addf %111, %135 : vector<32x128xf32>
    %137 = arith.addf %3, %136 : vector<32x128xf32>
    %c0_44 = arith.constant 0 : index
    %c0_45 = arith.constant 0 : index
    %c0_46 = arith.constant 0 : index
    %138 = vector.load %arg6[%c0_44, %c0_45, %c0_46] : memref<1x1x128xf32, #tpu.memory_space<vmem>>, vector<1x1x128xf32>
    %139 = vector.shape_cast %138 : vector<1x1x128xf32> to vector<1x128xf32>
    %140 = vector.broadcast %139 : vector<1x128xf32> to vector<32x128xf32>
    %141 = arith.addf %137, %140 : vector<32x128xf32>
    %c0_47 = arith.constant 0 : index
    %c0_48 = arith.constant 0 : index
    %c0_49 = arith.constant 0 : index
    %142 = vector.load %arg13[%c0_47, %c0_48, %c0_49] : memref<1x1x128xf32, #tpu.memory_space<vmem>>, vector<1x1x128xf32>
    %143 = vector.shape_cast %142 : vector<1x1x128xf32> to vector<1x128xf32>
    %c0_50 = arith.constant 0 : index
    %c0_51 = arith.constant 0 : index
    %c0_52 = arith.constant 0 : index
    %144 = vector.load %arg14[%c0_50, %c0_51, %c0_52] : memref<1x1x128xf32, #tpu.memory_space<vmem>>, vector<1x1x128xf32>
    %145 = vector.shape_cast %144 : vector<1x1x128xf32> to vector<1x128xf32>
    %cst_53 = arith.constant dense<0.000000e+00> : vector<32xf32>
    %146 = vector.multi_reduction <add>, %141, %cst_53 [1] : vector<32x128xf32> to vector<32xf32>
    %147 = vector.shape_cast %146 : vector<32xf32> to vector<32x1xf32>
    %cst_54 = arith.constant 1.280000e+02 : f32
    %148 = vector.broadcast %cst_54 : f32 to vector<32x1xf32>
    %149 = arith.divf %147, %148 : vector<32x1xf32>
    %150 = vector.broadcast %149 : vector<32x1xf32> to vector<32x128xf32>
    %151 = arith.subf %141, %150 : vector<32x128xf32>
    %152 = arith.mulf %151, %151 : vector<32x128xf32>
    %cst_55 = arith.constant dense<0.000000e+00> : vector<32xf32>
    %153 = vector.multi_reduction <add>, %152, %cst_55 [1] : vector<32x128xf32> to vector<32xf32>
    %154 = vector.shape_cast %153 : vector<32xf32> to vector<32x1xf32>
    %cst_56 = arith.constant 1.280000e+02 : f32
    %155 = vector.broadcast %cst_56 : f32 to vector<32x1xf32>
    %156 = arith.divf %154, %155 : vector<32x1xf32>
    %157 = vector.broadcast %149 : vector<32x1xf32> to vector<32x128xf32>
    %158 = arith.subf %141, %157 : vector<32x128xf32>
    %cst_57 = arith.constant 9.99999974E-6 : f32
    %159 = vector.broadcast %cst_57 : f32 to vector<32x1xf32>
    %160 = arith.addf %156, %159 : vector<32x1xf32>
    %161 = math.rsqrt %160 : vector<32x1xf32>
    %162 = vector.broadcast %161 : vector<32x1xf32> to vector<32x128xf32>
    %163 = arith.mulf %158, %162 : vector<32x128xf32>
    %164 = vector.broadcast %143 : vector<1x128xf32> to vector<32x128xf32>
    %165 = arith.mulf %163, %164 : vector<32x128xf32>
    %166 = vector.broadcast %145 : vector<1x128xf32> to vector<32x128xf32>
    %167 = arith.addf %165, %166 : vector<32x128xf32>
    %168 = arith.truncf %167 : vector<32x128xf32> to vector<32x128xbf16>
    %c0_58 = arith.constant 0 : index
    %c0_59 = arith.constant 0 : index
    %c0_60 = arith.constant 0 : index
    %169 = vector.load %arg7[%c0_58, %c0_59, %c0_60] : memref<1x128x512xbf16, #tpu.memory_space<vmem>>, vector<1x128x512xbf16>
    %170 = vector.shape_cast %169 : vector<1x128x512xbf16> to vector<128x512xbf16>
    %cst_61 = arith.constant dense<0.000000e+00> : vector<32x512xf32>
    %171 = tpu.matmul %168, %170, %cst_61 {dimension_numbers = #tpu.dot_dimension_numbers<[1], [0], [0], [1], [0, 0, 1, 1], [], []>} : vector<32x128xbf16>, vector<128x512xbf16>, vector<32x512xf32> -> vector<32x512xf32>
    %c0_62 = arith.constant 0 : index
    %c0_63 = arith.constant 0 : index
    %c0_64 = arith.constant 0 : index
    %172 = vector.load %arg8[%c0_62, %c0_63, %c0_64] : memref<1x1x512xf32, #tpu.memory_space<vmem>>, vector<1x1x512xf32>
    %173 = vector.shape_cast %172 : vector<1x1x512xf32> to vector<1x512xf32>
    %174 = vector.broadcast %173 : vector<1x512xf32> to vector<32x512xf32>
    %175 = arith.addf %171, %174 : vector<32x512xf32>
    %cst_65 = arith.constant 5.000000e-01 : f32
    %176 = vector.broadcast %cst_65 : f32 to vector<32x512xf32>
    %177 = arith.mulf %176, %175 : vector<32x512xf32>
    %cst_66 = arith.constant 0.707106769 : f32
    %178 = vector.broadcast %cst_66 : f32 to vector<32x512xf32>
    %179 = arith.mulf %175, %178 : vector<32x512xf32>
    %180 = math.erf %179 : vector<32x512xf32>
    %cst_67 = arith.constant 1.000000e+00 : f32
    %181 = vector.broadcast %cst_67 : f32 to vector<32x512xf32>
    %182 = arith.addf %181, %180 : vector<32x512xf32>
    %183 = arith.mulf %177, %182 : vector<32x512xf32>
    %184 = arith.truncf %183 : vector<32x512xf32> to vector<32x512xbf16>
    %c0_68 = arith.constant 0 : index
    %c0_69 = arith.constant 0 : index
    %c0_70 = arith.constant 0 : index
    %185 = vector.load %arg9[%c0_68, %c0_69, %c0_70] : memref<1x512x128xbf16, #tpu.memory_space<vmem>>, vector<1x512x128xbf16>
    %186 = vector.shape_cast %185 : vector<1x512x128xbf16> to vector<512x128xbf16>
    %cst_71 = arith.constant dense<0.000000e+00> : vector<32x128xf32>
    %187 = tpu.matmul %184, %186, %cst_71 {dimension_numbers = #tpu.dot_dimension_numbers<[1], [0], [0], [1], [0, 0, 1, 1], [], []>} : vector<32x512xbf16>, vector<512x128xbf16>, vector<32x128xf32> -> vector<32x128xf32>
    %c0_72 = arith.constant 0 : index
    %c0_73 = arith.constant 0 : index
    %c0_74 = arith.constant 0 : index
    %188 = vector.load %arg10[%c0_72, %c0_73, %c0_74] : memref<1x1x128xf32, #tpu.memory_space<vmem>>, vector<1x1x128xf32>
    %189 = vector.shape_cast %188 : vector<1x1x128xf32> to vector<1x128xf32>
    %190 = vector.broadcast %189 : vector<1x128xf32> to vector<32x128xf32>
    %191 = arith.addf %187, %190 : vector<32x128xf32>
    %192 = arith.addf %141, %191 : vector<32x128xf32>
    %c0_75 = arith.constant 0 : index
    %c0_76 = arith.constant 0 : index
    %193 = vector.load %arg18[%c0_75, %c0_76] : memref<32x128xf32, #tpu.memory_space<vmem>>, vector<32x128xf32>
    tpu.vector_store %arg18[%c0_75, %c0_76], %192 {strides = array<i32>} : memref<32x128xf32, #tpu.memory_space<vmem>>, vector<32x128xf32>,
    %c1_i32 = arith.constant 1 : i32
    %194 = arith.cmpi eq, %arg1, %c1_i32 : i32
    %195 = arith.extui %194 : i1 to i32
    %c0_i32_77 = arith.constant 0 : i32
    %196 = arith.cmpi ne, %195, %c0_i32_77 : i32
    scf.if %196 {
      %c0_78 = arith.constant 0 : index
      %c0_79 = arith.constant 0 : index
      %197 = vector.load %arg15[%c0_78, %c0_79] : memref<1x128xf32, #tpu.memory_space<vmem>>, vector<1x128xf32>
      %c0_80 = arith.constant 0 : index
      %c0_81 = arith.constant 0 : index
      %198 = vector.load %arg16[%c0_80, %c0_81] : memref<1x128xf32, #tpu.memory_space<vmem>>, vector<1x128xf32>
      %cst_82 = arith.constant dense<0.000000e+00> : vector<32xf32>
      %199 = vector.multi_reduction <add>, %192, %cst_82 [1] : vector<32x128xf32> to vector<32xf32>
      %200 = vector.shape_cast %199 : vector<32xf32> to vector<32x1xf32>
      %cst_83 = arith.constant 1.280000e+02 : f32
      %201 = vector.broadcast %cst_83 : f32 to vector<32x1xf32>
      %202 = arith.divf %200, %201 : vector<32x1xf32>
      %203 = vector.broadcast %202 : vector<32x1xf32> to vector<32x128xf32>
      %204 = arith.subf %192, %203 : vector<32x128xf32>
      %205 = arith.mulf %204, %204 : vector<32x128xf32>
      %cst_84 = arith.constant dense<0.000000e+00> : vector<32xf32>
      %206 = vector.multi_reduction <add>, %205, %cst_84 [1] : vector<32x128xf32> to vector<32xf32>
      %207 = vector.shape_cast %206 : vector<32xf32> to vector<32x1xf32>
      %cst_85 = arith.constant 1.280000e+02 : f32
      %208 = vector.broadcast %cst_85 : f32 to vector<32x1xf32>
      %209 = arith.divf %207, %208 : vector<32x1xf32>
      %210 = vector.broadcast %202 : vector<32x1xf32> to vector<32x128xf32>
      %211 = arith.subf %192, %210 : vector<32x128xf32>
      %cst_86 = arith.constant 9.99999974E-6 : f32
      %212 = vector.broadcast %cst_86 : f32 to vector<32x1xf32>
      %213 = arith.addf %209, %212 : vector<32x1xf32>
      %214 = math.rsqrt %213 : vector<32x1xf32>
      %215 = vector.broadcast %214 : vector<32x1xf32> to vector<32x128xf32>
      %216 = arith.mulf %211, %215 : vector<32x128xf32>
      %217 = vector.broadcast %197 : vector<1x128xf32> to vector<32x128xf32>
      %218 = arith.mulf %216, %217 : vector<32x128xf32>
      %219 = vector.broadcast %198 : vector<1x128xf32> to vector<32x128xf32>
      %220 = arith.addf %218, %219 : vector<32x128xf32>
      %c0_87 = arith.constant 0 : index
      %c0_88 = arith.constant 0 : index
      %c0_89 = arith.constant 0 : index
      %221 = vector.load %arg17[%c0_87, %c0_88, %c0_89] : memref<1x32x128xf32, #tpu.memory_space<vmem>>, vector<1x32x128xf32>
      %222 = vector.shape_cast %221 : vector<1x32x128xf32> to vector<32x128xf32>
      %223 = vector.shape_cast %220 : vector<32x128xf32> to vector<1x32x128xf32>
      tpu.vector_store %arg17[%c0_87, %c0_88, %c0_89], %223 {strides = array<i32>} : memref<1x32x128xf32, #tpu.memory_space<vmem>>, vector<1x32x128xf32>,
    } else {
    }
    return
  }
  func.func @transform_0(%arg0: i32, %arg1: i32) -> (i32, i32, i32) {
    %c0_i32 = arith.constant 0 : i32
    %c0_i32_0 = arith.constant 0 : i32
    %c0_i32_1 = arith.constant 0 : i32
    return %arg0, %c0_i32, %c0_i32_0 : i32, i32, i32
  }
  func.func @transform_1(%arg0: i32, %arg1: i32) -> (i32, i32, i32) {
    %c0_i32 = arith.constant 0 : i32
    %c0_i32_0 = arith.constant 0 : i32
    %c0_i32_1 = arith.constant 0 : i32
    return %arg0, %c0_i32, %c0_i32_0 : i32, i32, i32
  }
  func.func @transform_2(%arg0: i32, %arg1: i32) -> (i32, i32, i32) {
    %c0_i32 = arith.constant 0 : i32
    %c0_i32_0 = arith.constant 0 : i32
    %c0_i32_1 = arith.constant 0 : i32
    return %arg1, %c0_i32, %c0_i32_0 : i32, i32, i32
  }
  func.func @transform_3(%arg0: i32, %arg1: i32) -> (i32, i32, i32) {
    %c0_i32 = arith.constant 0 : i32
    %c0_i32_0 = arith.constant 0 : i32
    %c0_i32_1 = arith.constant 0 : i32
    return %arg1, %c0_i32, %c0_i32_0 : i32, i32, i32
  }
  func.func @transform_4(%arg0: i32, %arg1: i32) -> (i32, i32, i32) {
    %c0_i32 = arith.constant 0 : i32
    %c0_i32_0 = arith.constant 0 : i32
    %c0_i32_1 = arith.constant 0 : i32
    return %arg1, %c0_i32, %c0_i32_0 : i32, i32, i32
  }
  func.func @transform_5(%arg0: i32, %arg1: i32) -> (i32, i32, i32) {
    %c0_i32 = arith.constant 0 : i32
    %c0_i32_0 = arith.constant 0 : i32
    %c0_i32_1 = arith.constant 0 : i32
    return %arg1, %c0_i32, %c0_i32_0 : i32, i32, i32
  }
  func.func @transform_6(%arg0: i32, %arg1: i32) -> (i32, i32, i32) {
    %c0_i32 = arith.constant 0 : i32
    %c0_i32_0 = arith.constant 0 : i32
    %c0_i32_1 = arith.constant 0 : i32
    return %arg1, %c0_i32, %c0_i32_0 : i32, i32, i32
  }
  func.func @transform_7(%arg0: i32, %arg1: i32) -> (i32, i32, i32) {
    %c0_i32 = arith.constant 0 : i32
    %c0_i32_0 = arith.constant 0 : i32
    %c0_i32_1 = arith.constant 0 : i32
    return %arg1, %c0_i32, %c0_i32_0 : i32, i32, i32
  }
  func.func @transform_8(%arg0: i32, %arg1: i32) -> (i32, i32, i32) {
    %c0_i32 = arith.constant 0 : i32
    %c0_i32_0 = arith.constant 0 : i32
    %c0_i32_1 = arith.constant 0 : i32
    return %arg1, %c0_i32, %c0_i32_0 : i32, i32, i32
  }
  func.func @transform_9(%arg0: i32, %arg1: i32) -> (i32, i32, i32) {
    %c0_i32 = arith.constant 0 : i32
    %c0_i32_0 = arith.constant 0 : i32
    %c0_i32_1 = arith.constant 0 : i32
    return %arg1, %c0_i32, %c0_i32_0 : i32, i32, i32
  }
  func.func @transform_10(%arg0: i32, %arg1: i32) -> (i32, i32, i32) {
    %c0_i32 = arith.constant 0 : i32
    %c0_i32_0 = arith.constant 0 : i32
    %c0_i32_1 = arith.constant 0 : i32
    return %arg1, %c0_i32, %c0_i32_0 : i32, i32, i32
  }
  func.func @transform_11(%arg0: i32, %arg1: i32) -> (i32, i32, i32) {
    %c0_i32 = arith.constant 0 : i32
    %c0_i32_0 = arith.constant 0 : i32
    %c0_i32_1 = arith.constant 0 : i32
    return %arg1, %c0_i32, %c0_i32_0 : i32, i32, i32
  }
  func.func @transform_12(%arg0: i32, %arg1: i32) -> (i32, i32, i32) {
    %c0_i32 = arith.constant 0 : i32
    %c0_i32_0 = arith.constant 0 : i32
    %c0_i32_1 = arith.constant 0 : i32
    return %arg1, %c0_i32, %c0_i32_0 : i32, i32, i32
  }
  func.func @transform_13(%arg0: i32, %arg1: i32) -> (i32, i32) {
    %c0_i32 = arith.constant 0 : i32
    %c0_i32_0 = arith.constant 0 : i32
    %c0_i32_1 = arith.constant 0 : i32
    return %c0_i32, %c0_i32_0 : i32, i32
  }
  func.func @transform_14(%arg0: i32, %arg1: i32) -> (i32, i32) {
    %c0_i32 = arith.constant 0 : i32
    %c0_i32_0 = arith.constant 0 : i32
    %c0_i32_1 = arith.constant 0 : i32
    return %c0_i32, %c0_i32_0 : i32, i32
  }
  func.func @transform_15(%arg0: i32, %arg1: i32) -> (i32, i32, i32) {
    %c0_i32 = arith.constant 0 : i32
    %c0_i32_0 = arith.constant 0 : i32
    %c0_i32_1 = arith.constant 0 : i32
    return %arg0, %c0_i32, %c0_i32_0 : i32, i32, i32
  }
}

</mosaic_0001>

<llo_original>
// kernel: tpu_custom_call.1
$region0: #{tpu_custom_call.1}
  #allocation0 [shape = 'u32[]', space=smem, size = 0x4, offset = 0x4, fixed_abs, tag = 'smem constant byte address 0x4 - core index']
  #allocation1 [shape = 'u32[144,128]{1,0:T(1,128)}', space=vmem, size = 0x12000, scoped, tag = 'internal scratch']
  #allocation2 [shape = 'f32[32,128]{1,0:T(8,128)}', space=vmem, size = 0x4000, scoped, tag = 'scratch operand']
  %s0 = inlined_call_operand.hbm [shape: f32[2,32,128], index: 0, kind: input, shape index: {}]
  %s1 = inlined_call_operand.hbm [shape: f32[2,32,128], index: 1, kind: input, shape index: {}]
  %s2 = inlined_call_operand.hbm [shape: bf16[2,128,384], index: 2, kind: input, shape index: {}]
  %s3 = inlined_call_operand.hbm [shape: bf16[2,128,128], index: 3, kind: input, shape index: {}]
  %s4 = inlined_call_operand.vmem [shape: f32[2,1,128], index: 4, kind: input, shape index: {}]
  %s5 = inlined_call_operand.hbm [shape: bf16[2,128,512], index: 5, kind: input, shape index: {}]
  %s6 = inlined_call_operand.vmem [shape: f32[2,1,512], index: 6, kind: input, shape index: {}]
  %s7 = inlined_call_operand.hbm [shape: bf16[2,512,128], index: 7, kind: input, shape index: {}]
  %s8 = inlined_call_operand.vmem [shape: f32[2,1,128], index: 8, kind: input, shape index: {}]
  %s9 = inlined_call_operand.vmem [shape: f32[2,1,128], index: 9, kind: input, shape index: {}]
  %s10 = inlined_call_operand.vmem [shape: f32[2,1,128], index: 10, kind: input, shape index: {}]
  %s11 = inlined_call_operand.vmem [shape: f32[2,1,128], index: 11, kind: input, shape index: {}]
  %s12 = inlined_call_operand.vmem [shape: f32[2,1,128], index: 12, kind: input, shape index: {}]
  %s13 = inlined_call_operand.vmem [shape: f32[1,128], index: 13, kind: input, shape index: {}]
  %s14 = inlined_call_operand.vmem [shape: f32[1,128], index: 14, kind: input, shape index: {}]
  %s15 = inlined_call_operand.hbm [shape: f32[2,32,128], index: 15, kind: output, shape index: {}]
  %s16 = sld [smem:[#allocation0]]
  $region125: #{tpu_custom_call.1} parent=0
    _
  %s18 = ssub.s32 1, %s16
  %s19 = scalar_select 0, %s18, %s16
  $region1: #{tpu_custom_call.1} parent=0
    #allocation3 [shape = 'u8[32768]{0}', space=vmem, size = 0x8000, scoped, tag = 'input window, operand 0']
    #allocation4 [shape = 's32[2]{0}', space=sflag, size = 0x8, scoped, tag = 'scoped memory for tpu_custom_call.1']
    #allocation5 [shape = 's32[2]{0}', space=sflag, size = 0x8, scoped, tag = 'scoped memory for tpu_custom_call.1']
    #allocation6 [shape = 'u8[32768]{0}', space=vmem, size = 0x8000, scoped, tag = 'input window, operand 1']
    #allocation7 [shape = 's32[2]{0}', space=sflag, size = 0x8, scoped, tag = 'scoped memory for tpu_custom_call.1']
    #allocation8 [shape = 'u8[196608]{0}', space=vmem, size = 0x30000, scoped, tag = 'input window, operand 2']
    #allocation9 [shape = 'u8[65536]{0}', space=vmem, size = 0x10000, scoped, tag = 'input window, operand 3']
    #allocation10 [shape = 's32[2]{0}', space=sflag, size = 0x8, scoped, tag = 'scoped memory for tpu_custom_call.1']
    #allocation11 [shape = 'u8[262144]{0}', space=vmem, size = 0x40000, scoped, tag = 'input window, operand 5']
    #allocation12 [shape = 'u8[262144]{0}', space=vmem, size = 0x40000, scoped, tag = 'input window, operand 7']
    #allocation13 [shape = 's32[2]{0}', space=sflag, size = 0x8, scoped, tag = 'scoped memory for tpu_custom_call.1']
    #allocation14 [shape = 'u8[32768]{0}', space=vmem, size = 0x8000, scoped, tag = 'output window, operand 0']
    %20 = vsyncpa [#allocation4], 0
    %s21 = scalar_lea.sflag [#allocation4], 1
    %22 = vsyncpa %s21, 0
    %23 = vsyncpa [#allocation7], 0
    %s24 = scalar_lea.sflag [#allocation7], 1
    %25 = vsyncpa %s24, 0
    %26 = vsyncpa [#allocation10], 0
    %s27 = scalar_lea.sflag [#allocation10], 1
    %28 = vsyncpa %s27, 0
    %29 = vsyncpa [#allocation13], 0
    %s30 = scalar_lea.sflag [#allocation13], 1
    %31 = vsyncpa %s30, 0
    %32 = vsyncpa [#allocation5], 0
    %s33 = scalar_lea.sflag [#allocation5], 1
    %34 = vsyncpa %s33, 0
    loop: start=0, step=1, limit=6
    $region2: #{tpu_custom_call.1} parent=1 // loop_pre_header
      _
    $region3: #{tpu_custom_call.1} parent=1 // loop_header
      %s36 = sphi 0, %s40
      %p37 = scmp.ge.s32.totalorder %s36, 6
      %s43 = sphi 0, %s55
      %s44 = sphi 0, %s51
      %s45 = sphi 0, %s43
      %s46 = sphi 0, %s44
      %s47 = sphi 0, %s45
      %s48 = sphi 0, %s46
      %s58 = sphi 0, %s60
      %s61 = sphi 0, %s58
      %s62 = sphi 0, %s61
      %s78 = sphi 0, %s62
      %s84 = sphi 0, %s86
      %s87 = sphi 0, %s84
      %s88 = sphi 0, %s87
      %s104 = sphi 0, %s88
      %s110 = sphi 0, %s112
      %s113 = sphi 0, %s110
      %s114 = sphi 0, %s113
      %s130 = sphi 0, %s114
      %s136 = sphi 0, %s138
      %s139 = sphi 0, %s136
      %s140 = sphi 0, %s139
      %s156 = sphi 0, %s140
      %s162 = sphi 0, %s164
      %s165 = sphi 0, %s162
      %s166 = sphi 0, %s165
      %s182 = sphi 0, %s166
      %s188 = sphi 0, %s190
      %s191 = sphi 0, %s188
      %s192 = sphi 0, %s191
      %s208 = sphi 0, %s192
      %s214 = sphi 0, %s216
      %s217 = sphi 0, %s214
      %s218 = sphi 0, %s217
      %s234 = sphi 0, %s218
      %s240 = sphi 0, %s242
      %s243 = sphi 0, %s240
      %s244 = sphi 0, %s243
      %s260 = sphi 0, %s244
      %s266 = sphi 0, %s268
      %s269 = sphi 0, %s266
      %s270 = sphi 0, %s269
      %s286 = sphi 0, %s270
      %s292 = sphi 0, %s294
      %s295 = sphi 0, %s292
      %s296 = sphi 0, %s295
      %s312 = sphi 0, %s296
      %s318 = sphi 0, %s320
      %s321 = sphi 0, %s318
      %s322 = sphi 0, %s321
      %s338 = sphi 0, %s322
      %s344 = sphi 0, %s346
      %s347 = sphi 0, %s344
      %s348 = sphi 0, %s347
      %s364 = sphi 0, %s348
      %s370 = sphi 0, %s372
      %s373 = sphi 0, %s370
      %s374 = sphi 0, %s373
      %s390 = sphi 0, %s374
      %s394 = sphi 0, %s394
      %s396 = sphi 0, %s394
      %s397 = sphi 0, %s396
      %s411 = sphi 0, %s397
      %s415 = sphi 0, %s415
      %s417 = sphi 0, %s415
      %s418 = sphi 0, %s417
      %s432 = sphi 0, %s418
      %s438 = sphi 0, %s440
      %s441 = sphi 0, %s438
      %s442 = sphi 0, %s441
      %s458 = sphi 0, %s442
    $region4: #{tpu_custom_call.1} parent=1 // loop_header_branch
      %39 = sbr.rel (%p37) target = $region8
    $region5: #{tpu_custom_call.1} parent=1 // loop_body
      %s41 = ssub.s32 %s36, 1
      %s42 = ssub.s32 %s36, 2
      %s49 = sadd.s32 1, %s44
      %p50 = scmp.ge.s32.totalorder %s49, 2
      %s51 = scalar_select %p50, 0, %s49
      %s52 = sadd.s32 1, %s43
      %s53 = scalar_select %p50, %s52, %s43
      %p54 = scmp.ge.s32.totalorder %s53, 2
      %s55 = scalar_select %p54, 0, %s53
      %s56 = ssub.s32 %s43, %s55
      %p57 = scmp.eq.s32.totalorder %s56, 0
      %s59 = sadd.s32 %s58, 1
      %s60 = scalar_select %p57, %s58, %s59
      %p63 = pneg %p57
      %p64 = scmp.eq.s32.totalorder %s36, 3
      %p65 = por %p63, %p64
      %p66 = scmp.ne.s32.totalorder %s58, %s61
      %p67 = scmp.eq.s32.totalorder %s36, 0
      %p68 = por %p66, %p67
      %p69 = scmp.ne.s32.totalorder %s58, %s61
      %p70 = scmp.eq.s32.totalorder %s41, 3
      %p71 = por %p69, %p70
      %p72 = scmp.ne.s32.totalorder %s61, %s62
      %p73 = scmp.eq.s32.totalorder %s41, 0
      %p74 = por %p72, %p73
      %p75 = scmp.ne.s32.totalorder %s61, %s62
      %p76 = scmp.eq.s32.totalorder %s42, 3
      %p77 = por %p75, %p76
      %p79 = scmp.ne.s32.totalorder %s62, %s78
      %p80 = scmp.eq.s32.totalorder %s42, 0
      %p81 = por %p79, %p80
      %s82 = ssub.s32 %s43, %s55
      %p83 = scmp.eq.s32.totalorder %s82, 0
      %s85 = sadd.s32 %s84, 1
      %s86 = scalar_select %p83, %s84, %s85
      %p89 = pneg %p83
      %p90 = scmp.eq.s32.totalorder %s36, 3
      %p91 = por %p89, %p90
      %p92 = scmp.ne.s32.totalorder %s84, %s87
      %p93 = scmp.eq.s32.totalorder %s36, 0
      %p94 = por %p92, %p93
      %p95 = scmp.ne.s32.totalorder %s84, %s87
      %p96 = scmp.eq.s32.totalorder %s41, 3
      %p97 = por %p95, %p96
      %p98 = scmp.ne.s32.totalorder %s87, %s88
      %p99 = scmp.eq.s32.totalorder %s41, 0
      %p100 = por %p98, %p99
      %p101 = scmp.ne.s32.totalorder %s87, %s88
      %p102 = scmp.eq.s32.totalorder %s42, 3
      %p103 = por %p101, %p102
      %p105 = scmp.ne.s32.totalorder %s88, %s104
      %p106 = scmp.eq.s32.totalorder %s42, 0
      %p107 = por %p105, %p106
      %s108 = ssub.s32 %s44, %s51
      %p109 = scmp.eq.s32.totalorder %s108, 0
      %s111 = sadd.s32 %s110, 1
      %s112 = scalar_select %p109, %s110, %s111
      %p115 = pneg %p109
      %p116 = scmp.eq.s32.totalorder %s36, 3
      %p117 = por %p115, %p116
      %p118 = scmp.ne.s32.totalorder %s110, %s113
      %p119 = scmp.eq.s32.totalorder %s36, 0
      %p120 = por %p118, %p119
      %p121 = scmp.ne.s32.totalorder %s110, %s113
      %p122 = scmp.eq.s32.totalorder %s41, 3
      %p123 = por %p121, %p122
      %p124 = scmp.ne.s32.totalorder %s113, %s114
      %p125 = scmp.eq.s32.totalorder %s41, 0
      %p126 = por %p124, %p125
      %p127 = scmp.ne.s32.totalorder %s113, %s114
      %p128 = scmp.eq.s32.totalorder %s42, 3
      %p129 = por %p127, %p128
      %p131 = scmp.ne.s32.totalorder %s114, %s130
      %p132 = scmp.eq.s32.totalorder %s42, 0
      %p133 = por %p131, %p132
      %s134 = ssub.s32 %s44, %s51
      %p135 = scmp.eq.s32.totalorder %s134, 0
      %s137 = sadd.s32 %s136, 1
      %s138 = scalar_select %p135, %s136, %s137
      %p141 = pneg %p135
      %p142 = scmp.eq.s32.totalorder %s36, 3
      %p143 = por %p141, %p142
      %p144 = scmp.ne.s32.totalorder %s136, %s139
      %p145 = scmp.eq.s32.totalorder %s36, 0
      %p146 = por %p144, %p145
      %p147 = scmp.ne.s32.totalorder %s136, %s139
      %p148 = scmp.eq.s32.totalorder %s41, 3
      %p149 = por %p147, %p148
      %p150 = scmp.ne.s32.totalorder %s139, %s140
      %p151 = scmp.eq.s32.totalorder %s41, 0
      %p152 = por %p150, %p151
      %p153 = scmp.ne.s32.totalorder %s139, %s140
      %p154 = scmp.eq.s32.totalorder %s42, 3
      %p155 = por %p153, %p154
      %p157 = scmp.ne.s32.totalorder %s140, %s156
      %p158 = scmp.eq.s32.totalorder %s42, 0
      %p159 = por %p157, %p158
      %s160 = ssub.s32 %s44, %s51
      %p161 = scmp.eq.s32.totalorder %s160, 0
      %s163 = sadd.s32 %s162, 1
      %s164 = scalar_select %p161, %s162, %s163
      %p167 = pneg %p161
      %p168 = scmp.eq.s32.totalorder %s36, 3
      %p169 = por %p167, %p168
      %p170 = scmp.ne.s32.totalorder %s162, %s165
      %p171 = scmp.eq.s32.totalorder %s36, 0
      %p172 = por %p170, %p171
      %p173 = scmp.ne.s32.totalorder %s162, %s165
      %p174 = scmp.eq.s32.totalorder %s41, 3
      %p175 = por %p173, %p174
      %p176 = scmp.ne.s32.totalorder %s165, %s166
      %p177 = scmp.eq.s32.totalorder %s41, 0
      %p178 = por %p176, %p177
      %p179 = scmp.ne.s32.totalorder %s165, %s166
      %p180 = scmp.eq.s32.totalorder %s42, 3
      %p181 = por %p179, %p180
      %p183 = scmp.ne.s32.totalorder %s166, %s182
      %p184 = scmp.eq.s32.totalorder %s42, 0
      %p185 = por %p183, %p184
      %s186 = ssub.s32 %s44, %s51
      %p187 = scmp.eq.s32.totalorder %s186, 0
      %s189 = sadd.s32 %s188, 1
      %s190 = scalar_select %p187, %s188, %s189
      %p193 = pneg %p187
      %p194 = scmp.eq.s32.totalorder %s36, 3
      %p195 = por %p193, %p194
      %p196 = scmp.ne.s32.totalorder %s188, %s191
      %p197 = scmp.eq.s32.totalorder %s36, 0
      %p198 = por %p196, %p197
      %p199 = scmp.ne.s32.totalorder %s188, %s191
      %p200 = scmp.eq.s32.totalorder %s41, 3
      %p201 = por %p199, %p200
      %p202 = scmp.ne.s32.totalorder %s191, %s192
      %p203 = scmp.eq.s32.totalorder %s41, 0
      %p204 = por %p202, %p203
      %p205 = scmp.ne.s32.totalorder %s191, %s192
      %p206 = scmp.eq.s32.totalorder %s42, 3
      %p207 = por %p205, %p206
      %p209 = scmp.ne.s32.totalorder %s192, %s208
      %p210 = scmp.eq.s32.totalorder %s42, 0
      %p211 = por %p209, %p210
      %s212 = ssub.s32 %s44, %s51
      %p213 = scmp.eq.s32.totalorder %s212, 0
      %s215 = sadd.s32 %s214, 1
      %s216 = scalar_select %p213, %s214, %s215
      %p219 = pneg %p213
      %p220 = scmp.eq.s32.totalorder %s36, 3
      %p221 = por %p219, %p220
      %p222 = scmp.ne.s32.totalorder %s214, %s217
      %p223 = scmp.eq.s32.totalorder %s36, 0
      %p224 = por %p222, %p223
      %p225 = scmp.ne.s32.totalorder %s214, %s217
      %p226 = scmp.eq.s32.totalorder %s41, 3
      %p227 = por %p225, %p226
      %p228 = scmp.ne.s32.totalorder %s217, %s218
      %p229 = scmp.eq.s32.totalorder %s41, 0
      %p230 = por %p228, %p229
      %p231 = scmp.ne.s32.totalorder %s217, %s218
      %p232 = scmp.eq.s32.totalorder %s42, 3
      %p233 = por %p231, %p232
      %p235 = scmp.ne.s32.totalorder %s218, %s234
      %p236 = scmp.eq.s32.totalorder %s42, 0
      %p237 = por %p235, %p236
      %s238 = ssub.s32 %s44, %s51
      %p239 = scmp.eq.s32.totalorder %s238, 0
      %s241 = sadd.s32 %s240, 1
      %s242 = scalar_select %p239, %s240, %s241
      %p245 = pneg %p239
      %p246 = scmp.eq.s32.totalorder %s36, 3
      %p247 = por %p245, %p246
      %p248 = scmp.ne.s32.totalorder %s240, %s243
      %p249 = scmp.eq.s32.totalorder %s36, 0
      %p250 = por %p248, %p249
      %p251 = scmp.ne.s32.totalorder %s240, %s243
      %p252 = scmp.eq.s32.totalorder %s41, 3
      %p253 = por %p251, %p252
      %p254 = scmp.ne.s32.totalorder %s243, %s244
      %p255 = scmp.eq.s32.totalorder %s41, 0
      %p256 = por %p254, %p255
      %p257 = scmp.ne.s32.totalorder %s243, %s244
      %p258 = scmp.eq.s32.totalorder %s42, 3
      %p259 = por %p257, %p258
      %p261 = scmp.ne.s32.totalorder %s244, %s260
      %p262 = scmp.eq.s32.totalorder %s42, 0
      %p263 = por %p261, %p262
      %s264 = ssub.s32 %s44, %s51
      %p265 = scmp.eq.s32.totalorder %s264, 0
      %s267 = sadd.s32 %s266, 1
      %s268 = scalar_select %p265, %s266, %s267
      %p271 = pneg %p265
      %p272 = scmp.eq.s32.totalorder %s36, 3
      %p273 = por %p271, %p272
      %p274 = scmp.ne.s32.totalorder %s266, %s269
      %p275 = scmp.eq.s32.totalorder %s36, 0
      %p276 = por %p274, %p275
      %p277 = scmp.ne.s32.totalorder %s266, %s269
      %p278 = scmp.eq.s32.totalorder %s41, 3
      %p279 = por %p277, %p278
      %p280 = scmp.ne.s32.totalorder %s269, %s270
      %p281 = scmp.eq.s32.totalorder %s41, 0
      %p282 = por %p280, %p281
      %p283 = scmp.ne.s32.totalorder %s269, %s270
      %p284 = scmp.eq.s32.totalorder %s42, 3
      %p285 = por %p283, %p284
      %p287 = scmp.ne.s32.totalorder %s270, %s286
      %p288 = scmp.eq.s32.totalorder %s42, 0
      %p289 = por %p287, %p288
      %s290 = ssub.s32 %s44, %s51
      %p291 = scmp.eq.s32.totalorder %s290, 0
      %s293 = sadd.s32 %s292, 1
      %s294 = scalar_select %p291, %s292, %s293
      %p297 = pneg %p291
      %p298 = scmp.eq.s32.totalorder %s36, 3
      %p299 = por %p297, %p298
      %p300 = scmp.ne.s32.totalorder %s292, %s295
      %p301 = scmp.eq.s32.totalorder %s36, 0
      %p302 = por %p300, %p301
      %p303 = scmp.ne.s32.totalorder %s292, %s295
      %p304 = scmp.eq.s32.totalorder %s41, 3
      %p305 = por %p303, %p304
      %p306 = scmp.ne.s32.totalorder %s295, %s296
      %p307 = scmp.eq.s32.totalorder %s41, 0
      %p308 = por %p306, %p307
      %p309 = scmp.ne.s32.totalorder %s295, %s296
      %p310 = scmp.eq.s32.totalorder %s42, 3
      %p311 = por %p309, %p310
      %p313 = scmp.ne.s32.totalorder %s296, %s312
      %p314 = scmp.eq.s32.totalorder %s42, 0
      %p315 = por %p313, %p314
      %s316 = ssub.s32 %s44, %s51
      %p317 = scmp.eq.s32.totalorder %s316, 0
      %s319 = sadd.s32 %s318, 1
      %s320 = scalar_select %p317, %s318, %s319
      %p323 = pneg %p317
      %p324 = scmp.eq.s32.totalorder %s36, 3
      %p325 = por %p323, %p324
      %p326 = scmp.ne.s32.totalorder %s318, %s321
      %p327 = scmp.eq.s32.totalorder %s36, 0
      %p328 = por %p326, %p327
      %p329 = scmp.ne.s32.totalorder %s318, %s321
      %p330 = scmp.eq.s32.totalorder %s41, 3
      %p331 = por %p329, %p330
      %p332 = scmp.ne.s32.totalorder %s321, %s322
      %p333 = scmp.eq.s32.totalorder %s41, 0
      %p334 = por %p332, %p333
      %p335 = scmp.ne.s32.totalorder %s321, %s322
      %p336 = scmp.eq.s32.totalorder %s42, 3
      %p337 = por %p335, %p336
      %p339 = scmp.ne.s32.totalorder %s322, %s338
      %p340 = scmp.eq.s32.totalorder %s42, 0
      %p341 = por %p339, %p340
      %s342 = ssub.s32 %s44, %s51
      %p343 = scmp.eq.s32.totalorder %s342, 0
      %s345 = sadd.s32 %s344, 1
      %s346 = scalar_select %p343, %s344, %s345
      %p349 = pneg %p343
      %p350 = scmp.eq.s32.totalorder %s36, 3
      %p351 = por %p349, %p350
      %p352 = scmp.ne.s32.totalorder %s344, %s347
      %p353 = scmp.eq.s32.totalorder %s36, 0
      %p354 = por %p352, %p353
      %p355 = scmp.ne.s32.totalorder %s344, %s347
      %p356 = scmp.eq.s32.totalorder %s41, 3
      %p357 = por %p355, %p356
      %p358 = scmp.ne.s32.totalorder %s347, %s348
      %p359 = scmp.eq.s32.totalorder %s41, 0
      %p360 = por %p358, %p359
      %p361 = scmp.ne.s32.totalorder %s347, %s348
      %p362 = scmp.eq.s32.totalorder %s42, 3
      %p363 = por %p361, %p362
      %p365 = scmp.ne.s32.totalorder %s348, %s364
      %p366 = scmp.eq.s32.totalorder %s42, 0
      %p367 = por %p365, %p366
      %s368 = ssub.s32 %s44, %s51
      %p369 = scmp.eq.s32.totalorder %s368, 0
      %s371 = sadd.s32 %s370, 1
      %s372 = scalar_select %p369, %s370, %s371
      %p375 = pneg %p369
      %p376 = scmp.eq.s32.totalorder %s36, 3
      %p377 = por %p375, %p376
      %p378 = scmp.ne.s32.totalorder %s370, %s373
      %p379 = scmp.eq.s32.totalorder %s36, 0
      %p380 = por %p378, %p379
      %p381 = scmp.ne.s32.totalorder %s370, %s373
      %p382 = scmp.eq.s32.totalorder %s41, 3
      %p383 = por %p381, %p382
      %p384 = scmp.ne.s32.totalorder %s373, %s374
      %p385 = scmp.eq.s32.totalorder %s41, 0
      %p386 = por %p384, %p385
      %p387 = scmp.ne.s32.totalorder %s373, %s374
      %p388 = scmp.eq.s32.totalorder %s42, 3
      %p389 = por %p387, %p388
      %p391 = scmp.ne.s32.totalorder %s374, %s390
      %p392 = scmp.eq.s32.totalorder %s42, 0
      %p393 = por %p391, %p392
      %s395 = sadd.s32 %s394, 1
      %p398 = scmp.eq.s32.totalorder %s36, 3
      %p399 = scmp.ne.s32.totalorder %s394, %s396
      %p400 = scmp.eq.s32.totalorder %s36, 0
      %p401 = por %p399, %p400
      %p402 = scmp.ne.s32.totalorder %s394, %s396
      %p403 = scmp.eq.s32.totalorder %s41, 3
      %p404 = por %p402, %p403
      %p405 = scmp.ne.s32.totalorder %s396, %s397
      %p406 = scmp.eq.s32.totalorder %s41, 0
      %p407 = por %p405, %p406
      %p408 = scmp.ne.s32.totalorder %s396, %s397
      %p409 = scmp.eq.s32.totalorder %s42, 3
      %p410 = por %p408, %p409
      %p412 = scmp.ne.s32.totalorder %s397, %s411
      %p413 = scmp.eq.s32.totalorder %s42, 0
      %p414 = por %p412, %p413
      %s416 = sadd.s32 %s415, 1
      %p419 = scmp.eq.s32.totalorder %s36, 3
      %p420 = scmp.ne.s32.totalorder %s415, %s417
      %p421 = scmp.eq.s32.totalorder %s36, 0
      %p422 = por %p420, %p421
      %p423 = scmp.ne.s32.totalorder %s415, %s417
      %p424 = scmp.eq.s32.totalorder %s41, 3
      %p425 = por %p423, %p424
      %p426 = scmp.ne.s32.totalorder %s417, %s418
      %p427 = scmp.eq.s32.totalorder %s41, 0
      %p428 = por %p426, %p427
      %p429 = scmp.ne.s32.totalorder %s417, %s418
      %p430 = scmp.eq.s32.totalorder %s42, 3
      %p431 = por %p429, %p430
      %p433 = scmp.ne.s32.totalorder %s418, %s432
      %p434 = scmp.eq.s32.totalorder %s42, 0
      %p435 = por %p433, %p434
      %s436 = ssub.s32 %s43, %s55
      %p437 = scmp.eq.s32.totalorder %s436, 0
      %s439 = sadd.s32 %s438, 1
      %s440 = scalar_select %p437, %s438, %s439
      %p443 = pneg %p437
      %p444 = scmp.eq.s32.totalorder %s36, 3
      %p445 = por %p443, %p444
      %p446 = scmp.ne.s32.totalorder %s438, %s441
      %p447 = scmp.eq.s32.totalorder %s36, 0
      %p448 = por %p446, %p447
      %p449 = scmp.ne.s32.totalorder %s438, %s441
      %p450 = scmp.eq.s32.totalorder %s41, 3
      %p451 = por %p449, %p450
      %p452 = scmp.ne.s32.totalorder %s441, %s442
      %p453 = scmp.eq.s32.totalorder %s41, 0
      %p454 = por %p452, %p453
      %p455 = scmp.ne.s32.totalorder %s441, %s442
      %p456 = scmp.eq.s32.totalorder %s42, 3
      %p457 = por %p455, %p456
      %p459 = scmp.ne.s32.totalorder %s442, %s458
      %p460 = scmp.eq.s32.totalorder %s42, 0
      %p461 = por %p459, %p460
      %p462 = scmp.le.s32.totalorder 1, %s36
      %p463 = scmp.lt.s32.totalorder %s36, 5
      %p464 = pnand %p462, %p463
      %p465 = pneg %p464
      // Predicated region
      $region9: #{tpu_custom_call.1} parent=5 // pred_check
        _
      $region10: #{tpu_custom_call.1} parent=5 // pred_check_branch
        %467 = sbr.rel (%p464) target = $region12
      $region11: #{tpu_custom_call.1} parent=5 // pred_region
        %s468 = ssub.s32 %s36, 1
        // Predicated region
        $region13: #{tpu_custom_call.1} parent=11 // pred_check
          %p469 = pneg %p407
        $region14: #{tpu_custom_call.1} parent=11 // pred_check_branch
          %471 = sbr.rel (%p469) target = $region16
        $region15: #{tpu_custom_call.1} parent=11 // pred_region
          _
        $region16: #{tpu_custom_call.1} parent=11 // pred_fallthru
          _
        // Predicated region
        $region17: #{tpu_custom_call.1} parent=11 // pred_check
          %p472 = pneg %p428
        $region18: #{tpu_custom_call.1} parent=11 // pred_check_branch
          %474 = sbr.rel (%p472) target = $region20
        $region19: #{tpu_custom_call.1} parent=11 // pred_region
          _
        $region20: #{tpu_custom_call.1} parent=11 // pred_fallthru
          _
      $region12: #{tpu_custom_call.1} parent=5 // pred_fallthru
        _
      %p475 = scmp.lt.s32.totalorder %s36, 4
      // Predicated region
      $region21: #{tpu_custom_call.1} parent=5 // pred_check
        %p476 = pneg %p475
      $region22: #{tpu_custom_call.1} parent=5 // pred_check_branch
        %478 = sbr.rel (%p476) target = $region24
      $region23: #{tpu_custom_call.1} parent=5 // pred_region
        // Predicated region
        $region25: #{tpu_custom_call.1} parent=23 // pred_check
          %p479 = pneg %p68
        $region26: #{tpu_custom_call.1} parent=23 // pred_check_branch
          %481 = sbr.rel (%p479) target = $region28
        $region27: #{tpu_custom_call.1} parent=23 // pred_region
          %s482 = sand.u32 %s58, 1
          %s483 = scalar_lea.sflag [#allocation4], %s482
          %s484 = sand.u32 %s58, 1
          %s485 = smul.addr %s484, 32
          %s486 = scalar_lea.vmem [#allocation3], %s485
          %s488 = ssub.s32 512, 512
          %489 = vsyncadd %s483, %s488
          %s490 = smul.addr %s43, 4
          %s491 = smul.addr %s490, 128
          %s492 = scalar_lea.hbm %s0, %s491
          %s493 = sshll.u32 %s486, 4
          %s494 = int_to_ptr.vmem [resolvable:$true] %s493
          %499 = dma.hbm_to_vmem [thread:$0]  %s492, 512, %s494, %s483, 128, 128, 8
        $region28: #{tpu_custom_call.1} parent=23 // pred_fallthru
          _
        // Predicated region
        $region29: #{tpu_custom_call.1} parent=23 // pred_check
          %p500 = pneg %p94
        $region30: #{tpu_custom_call.1} parent=23 // pred_check_branch
          %502 = sbr.rel (%p500) target = $region32
        $region31: #{tpu_custom_call.1} parent=23 // pred_region
          %s503 = sand.u32 %s36, 1
          %s504 = scalar_lea.sflag [#allocation7], %s503
          %s505 = sand.u32 %s84, 1
          %s506 = smul.addr %s505, 32
          %s507 = scalar_lea.vmem [#allocation6], %s506
          %s509 = ssub.s32 512, 512
          %510 = vsyncadd %s504, %s509
          %s511 = smul.addr %s43, 4
          %s512 = smul.addr %s511, 128
          %s513 = scalar_lea.hbm %s1, %s512
          %s514 = sshll.u32 %s507, 4
          %s515 = int_to_ptr.vmem [resolvable:$true] %s514
          %520 = dma.hbm_to_vmem [thread:$0]  %s513, 512, %s515, %s504, 128, 128, 8
        $region32: #{tpu_custom_call.1} parent=23 // pred_fallthru
          _
        // Predicated region
        $region33: #{tpu_custom_call.1} parent=23 // pred_check
          %p521 = pneg %p120
        $region34: #{tpu_custom_call.1} parent=23 // pred_check_branch
          %523 = sbr.rel (%p521) target = $region36
        $region35: #{tpu_custom_call.1} parent=23 // pred_region
          %s524 = sand.u32 %s36, 1
          %s525 = scalar_lea.sflag [#allocation7], %s524
          %s526 = sand.u32 %s110, 1
          %s527 = smul.addr %s526, 192
          %s528 = scalar_lea.vmem [#allocation8], %s527
          %s530 = ssub.s32 3072, 3072
          %531 = vsyncadd %s525, %s530
          %s532 = smul.addr %s44, 48
          %s533 = smul.addr %s532, 64
          %s534 = scalar_lea.hbm %s2, %s533
          %s535 = sshll.u32 %s528, 4
          %s536 = int_to_ptr.vmem [resolvable:$true] %s535
          %541 = dma.hbm_to_vmem [thread:$0]  %s534, 3072, %s536, %s525, 192, 192, 12
        $region36: #{tpu_custom_call.1} parent=23 // pred_fallthru
          _
        // Predicated region
        $region37: #{tpu_custom_call.1} parent=23 // pred_check
          %p542 = pneg %p146
        $region38: #{tpu_custom_call.1} parent=23 // pred_check_branch
          %544 = sbr.rel (%p542) target = $region40
        $region39: #{tpu_custom_call.1} parent=23 // pred_region
          %s545 = sand.u32 %s36, 1
          %s546 = scalar_lea.sflag [#allocation10], %s545
          %s547 = sand.u32 %s136, 1
          %s548 = smul.addr %s547, 64
          %s549 = scalar_lea.vmem [#allocation9], %s548
          %s551 = ssub.s32 1024, 1024
          %552 = vsyncadd %s546, %s551
          %s553 = smul.addr %s44, 16
          %s554 = smul.addr %s553, 64
          %s555 = scalar_lea.hbm %s3, %s554
          %s556 = sshll.u32 %s549, 4
          %s557 = int_to_ptr.vmem [resolvable:$true] %s556
          %562 = dma.hbm_to_vmem [thread:$0]  %s555, 1024, %s557, %s546, 64, 64, 4
        $region40: #{tpu_custom_call.1} parent=23 // pred_fallthru
          _
        // Predicated region
        $region41: #{tpu_custom_call.1} parent=23 // pred_check
          %p563 = pneg %p172
        $region42: #{tpu_custom_call.1} parent=23 // pred_check_branch
          %565 = sbr.rel (%p563) target = $region44
        $region43: #{tpu_custom_call.1} parent=23 // pred_region
          %p566 = scmp.lt.s32.totalorder %s44, 1
          %s567 = scalar_select %p566, %s44, 1
          %s568 = scalar_lea.vmem %s4, %s567
        $region44: #{tpu_custom_call.1} parent=23 // pred_fallthru
          _
        // Predicated region
        $region45: #{tpu_custom_call.1} parent=23 // pred_check
          %p569 = pneg %p198
        $region46: #{tpu_custom_call.1} parent=23 // pred_check_branch
          %571 = sbr.rel (%p569) target = $region48
        $region47: #{tpu_custom_call.1} parent=23 // pred_region
          %s572 = sand.u32 %s36, 1
          %s573 = scalar_lea.sflag [#allocation10], %s572
          %s574 = sand.u32 %s188, 1
          %s575 = smul.addr %s574, 256
          %s576 = scalar_lea.vmem [#allocation11], %s575
          %s578 = ssub.s32 4096, 4096
          %579 = vsyncadd %s573, %s578
          %s580 = smul.addr %s44, 64
          %s581 = smul.addr %s580, 64
          %s582 = scalar_lea.hbm %s5, %s581
          %s583 = sshll.u32 %s576, 4
          %s584 = int_to_ptr.vmem [resolvable:$true] %s583
          %589 = dma.hbm_to_vmem [thread:$0]  %s582, 4096, %s584, %s573, 256, 256, 16
        $region48: #{tpu_custom_call.1} parent=23 // pred_fallthru
          _
        // Predicated region
        $region49: #{tpu_custom_call.1} parent=23 // pred_check
          %p590 = pneg %p224
        $region50: #{tpu_custom_call.1} parent=23 // pred_check_branch
          %592 = sbr.rel (%p590) target = $region52
        $region51: #{tpu_custom_call.1} parent=23 // pred_region
          %p593 = scmp.lt.s32.totalorder %s44, 1
          %s594 = scalar_select %p593, %s44, 1
          %s595 = smul.addr %s594, 4
          %s596 = scalar_lea.vmem %s6, %s595
        $region52: #{tpu_custom_call.1} parent=23 // pred_fallthru
          _
        // Predicated region
        $region53: #{tpu_custom_call.1} parent=23 // pred_check
          %p597 = pneg %p250
        $region54: #{tpu_custom_call.1} parent=23 // pred_check_branch
          %599 = sbr.rel (%p597) target = $region56
        $region55: #{tpu_custom_call.1} parent=23 // pred_region
          %s600 = sand.u32 %s240, 1
          %s601 = scalar_lea.sflag [#allocation13], %s600
          %s602 = sand.u32 %s240, 1
          %s603 = smul.addr %s602, 256
          %s604 = scalar_lea.vmem [#allocation12], %s603
          %s606 = ssub.s32 4096, 4096
          %607 = vsyncadd %s601, %s606
          %s608 = smul.addr %s44, 64
          %s609 = smul.addr %s608, 64
          %s610 = scalar_lea.hbm %s7, %s609
          %s611 = sshll.u32 %s604, 4
          %s612 = int_to_ptr.vmem [resolvable:$true] %s611
          %617 = dma.hbm_to_vmem [thread:$0]  %s610, 4096, %s612, %s601, 64, 64, 4
        $region56: #{tpu_custom_call.1} parent=23 // pred_fallthru
          _
        // Predicated region
        $region57: #{tpu_custom_call.1} parent=23 // pred_check
          %p618 = pneg %p276
        $region58: #{tpu_custom_call.1} parent=23 // pred_check_branch
          %620 = sbr.rel (%p618) target = $region60
        $region59: #{tpu_custom_call.1} parent=23 // pred_region
          %p621 = scmp.lt.s32.totalorder %s44, 1
          %s622 = scalar_select %p621, %s44, 1
          %s623 = scalar_lea.vmem %s8, %s622
        $region60: #{tpu_custom_call.1} parent=23 // pred_fallthru
          _
        // Predicated region
        $region61: #{tpu_custom_call.1} parent=23 // pred_check
          %p624 = pneg %p302
        $region62: #{tpu_custom_call.1} parent=23 // pred_check_branch
          %626 = sbr.rel (%p624) target = $region64
        $region63: #{tpu_custom_call.1} parent=23 // pred_region
          %p627 = scmp.lt.s32.totalorder %s44, 1
          %s628 = scalar_select %p627, %s44, 1
          %s629 = scalar_lea.vmem %s9, %s628
        $region64: #{tpu_custom_call.1} parent=23 // pred_fallthru
          _
        // Predicated region
        $region65: #{tpu_custom_call.1} parent=23 // pred_check
          %p630 = pneg %p328
        $region66: #{tpu_custom_call.1} parent=23 // pred_check_branch
          %632 = sbr.rel (%p630) target = $region68
        $region67: #{tpu_custom_call.1} parent=23 // pred_region
          %p633 = scmp.lt.s32.totalorder %s44, 1
          %s634 = scalar_select %p633, %s44, 1
          %s635 = scalar_lea.vmem %s10, %s634
        $region68: #{tpu_custom_call.1} parent=23 // pred_fallthru
          _
        // Predicated region
        $region69: #{tpu_custom_call.1} parent=23 // pred_check
          %p636 = pneg %p354
        $region70: #{tpu_custom_call.1} parent=23 // pred_check_branch
          %638 = sbr.rel (%p636) target = $region72
        $region71: #{tpu_custom_call.1} parent=23 // pred_region
          %p639 = scmp.lt.s32.totalorder %s44, 1
          %s640 = scalar_select %p639, %s44, 1
          %s641 = scalar_lea.vmem %s11, %s640
        $region72: #{tpu_custom_call.1} parent=23 // pred_fallthru
          _
        // Predicated region
        $region73: #{tpu_custom_call.1} parent=23 // pred_check
          %p642 = pneg %p380
        $region74: #{tpu_custom_call.1} parent=23 // pred_check_branch
          %644 = sbr.rel (%p642) target = $region76
        $region75: #{tpu_custom_call.1} parent=23 // pred_region
          %p645 = scmp.lt.s32.totalorder %s44, 1
          %s646 = scalar_select %p645, %s44, 1
          %s647 = scalar_lea.vmem %s12, %s646
        $region76: #{tpu_custom_call.1} parent=23 // pred_fallthru
          _
      $region24: #{tpu_custom_call.1} parent=5 // pred_fallthru
        _
      %p648 = scmp.le.s32.totalorder 1, %s36
      %p649 = scmp.lt.s32.totalorder %s36, 5
      %p650 = pnand %p648, %p649
      %p651 = pneg %p650
      // Predicated region
      $region77: #{tpu_custom_call.1} parent=5 // pred_check
        _
      $region78: #{tpu_custom_call.1} parent=5 // pred_check_branch
        %653 = sbr.rel (%p650) target = $region80
      $region79: #{tpu_custom_call.1} parent=5 // pred_region
        %s654 = ssub.s32 %s36, 1
        %s655 = sand.u32 %s61, 1
        %s656 = scalar_lea.sflag [#allocation4], %s655
        %s657 = sand.u32 %s61, 1
        %s658 = smul.addr %s657, 32
        %s659 = scalar_lea.vmem [#allocation3], %s658
        // Predicated region
        $region81: #{tpu_custom_call.1} parent=79 // pred_check
          %p660 = pneg %p74
        $region82: #{tpu_custom_call.1} parent=79 // pred_check_branch
          %662 = sbr.rel (%p660) target = $region84
        $region83: #{tpu_custom_call.1} parent=79 // pred_region
          %663 = dma.done %s656, 512
        $region84: #{tpu_custom_call.1} parent=79 // pred_fallthru
          _
        %s664 = sand.u32 %s41, 1
        %s665 = scalar_lea.sflag [#allocation7], %s664
        %s666 = sand.u32 %s87, 1
        %s667 = smul.addr %s666, 32
        %s668 = scalar_lea.vmem [#allocation6], %s667
        // Predicated region
        $region85: #{tpu_custom_call.1} parent=79 // pred_check
          %p669 = pneg %p100
        $region86: #{tpu_custom_call.1} parent=79 // pred_check_branch
          %671 = sbr.rel (%p669) target = $region88
        $region87: #{tpu_custom_call.1} parent=79 // pred_region
          %672 = dma.done %s665, 512
        $region88: #{tpu_custom_call.1} parent=79 // pred_fallthru
          _
        %s673 = sand.u32 %s41, 1
        %s674 = scalar_lea.sflag [#allocation7], %s673
        %s675 = sand.u32 %s113, 1
        %s676 = smul.addr %s675, 192
        %s677 = scalar_lea.vmem [#allocation8], %s676
        // Predicated region
        $region89: #{tpu_custom_call.1} parent=79 // pred_check
          %p678 = pneg %p126
        $region90: #{tpu_custom_call.1} parent=79 // pred_check_branch
          %680 = sbr.rel (%p678) target = $region92
        $region91: #{tpu_custom_call.1} parent=79 // pred_region
          %681 = dma.done %s674, 3072
        $region92: #{tpu_custom_call.1} parent=79 // pred_fallthru
          _
        %s682 = sand.u32 %s41, 1
        %s683 = scalar_lea.sflag [#allocation10], %s682
        %s684 = sand.u32 %s139, 1
        %s685 = smul.addr %s684, 64
        %s686 = scalar_lea.vmem [#allocation9], %s685
        // Predicated region
        $region93: #{tpu_custom_call.1} parent=79 // pred_check
          %p687 = pneg %p152
        $region94: #{tpu_custom_call.1} parent=79 // pred_check_branch
          %689 = sbr.rel (%p687) target = $region96
        $region95: #{tpu_custom_call.1} parent=79 // pred_region
          %690 = dma.done %s683, 1024
        $region96: #{tpu_custom_call.1} parent=79 // pred_fallthru
          _
        %s691 = sand.u32 %s41, 1
        %s692 = scalar_lea.sflag [#allocation10], %s691
        %s693 = sand.u32 %s191, 1
        %s694 = smul.addr %s693, 256
        %s695 = scalar_lea.vmem [#allocation11], %s694
        // Predicated region
        $region97: #{tpu_custom_call.1} parent=79 // pred_check
          %p696 = pneg %p204
        $region98: #{tpu_custom_call.1} parent=79 // pred_check_branch
          %698 = sbr.rel (%p696) target = $region100
        $region99: #{tpu_custom_call.1} parent=79 // pred_region
          %699 = dma.done %s692, 4096
        $region100: #{tpu_custom_call.1} parent=79 // pred_fallthru
          _
        %s700 = sand.u32 %s243, 1
        %s701 = scalar_lea.sflag [#allocation13], %s700
        %s702 = sand.u32 %s243, 1
        %s703 = smul.addr %s702, 256
        %s704 = scalar_lea.vmem [#allocation12], %s703
        // Predicated region
        $region101: #{tpu_custom_call.1} parent=79 // pred_check
          %p705 = pneg %p256
        $region102: #{tpu_custom_call.1} parent=79 // pred_check_branch
          %707 = sbr.rel (%p705) target = $region104
        $region103: #{tpu_custom_call.1} parent=79 // pred_region
          %708 = dma.done %s701, 4096
        $region104: #{tpu_custom_call.1} parent=79 // pred_fallthru
          _
        %s709 = sand.u32 %s61, 1
        %s710 = scalar_lea.sflag [#allocation4], %s709
        %s711 = sand.u32 %s61, 1
        %s712 = smul.addr %s711, 32
        %s713 = scalar_lea.vmem [#allocation3], %s712
        %p714 = pneg %p74
        %p715 = pneg %p71
        %s716 = sand.u32 %s41, 1
        %s717 = scalar_lea.sflag [#allocation7], %s716
        %s718 = sand.u32 %s87, 1
        %s719 = smul.addr %s718, 32
        %s720 = scalar_lea.vmem [#allocation6], %s719
        %p721 = pneg %p100
        %p722 = pneg %p97
        %s723 = sand.u32 %s41, 1
        %s724 = scalar_lea.sflag [#allocation7], %s723
        %s725 = sand.u32 %s113, 1
        %s726 = smul.addr %s725, 192
        %s727 = scalar_lea.vmem [#allocation8], %s726
        %p728 = pneg %p126
        %p729 = pneg %p123
        %s730 = sand.u32 %s41, 1
        %s731 = scalar_lea.sflag [#allocation10], %s730
        %s732 = sand.u32 %s139, 1
        %s733 = smul.addr %s732, 64
        %s734 = scalar_lea.vmem [#allocation9], %s733
        %p735 = pneg %p152
        %p736 = pneg %p149
        %p737 = scmp.lt.s32.totalorder %s46, 1
        %s738 = scalar_select %p737, %s46, 1
        %s739 = scalar_lea.vmem %s4, %s738
        %p740 = pneg %p178
        %p741 = pneg %p175
        %s742 = sand.u32 %s41, 1
        %s743 = scalar_lea.sflag [#allocation10], %s742
        %s744 = sand.u32 %s191, 1
        %s745 = smul.addr %s744, 256
        %s746 = scalar_lea.vmem [#allocation11], %s745
        %p747 = pneg %p204
        %p748 = pneg %p201
        %p749 = scmp.lt.s32.totalorder %s46, 1
        %s750 = scalar_select %p749, %s46, 1
        %s751 = smul.addr %s750, 4
        %s752 = scalar_lea.vmem %s6, %s751
        %p753 = pneg %p230
        %p754 = pneg %p227
        %s755 = sand.u32 %s243, 1
        %s756 = scalar_lea.sflag [#allocation13], %s755
        %s757 = sand.u32 %s243, 1
        %s758 = smul.addr %s757, 256
        %s759 = scalar_lea.vmem [#allocation12], %s758
        %p760 = pneg %p256
        %p761 = pneg %p253
        %p762 = scmp.lt.s32.totalorder %s46, 1
        %s763 = scalar_select %p762, %s46, 1
        %s764 = scalar_lea.vmem %s8, %s763
        %p765 = pneg %p282
        %p766 = pneg %p279
        %p767 = scmp.lt.s32.totalorder %s46, 1
        %s768 = scalar_select %p767, %s46, 1
        %s769 = scalar_lea.vmem %s9, %s768
        %p770 = pneg %p308
        %p771 = pneg %p305
        %p772 = scmp.lt.s32.totalorder %s46, 1
        %s773 = scalar_select %p772, %s46, 1
        %s774 = scalar_lea.vmem %s10, %s773
        %p775 = pneg %p334
        %p776 = pneg %p331
        %p777 = scmp.lt.s32.totalorder %s46, 1
        %s778 = scalar_select %p777, %s46, 1
        %s779 = scalar_lea.vmem %s11, %s778
        %p780 = pneg %p360
        %p781 = pneg %p357
        %p782 = scmp.lt.s32.totalorder %s46, 1
        %s783 = scalar_select %p782, %s46, 1
        %s784 = scalar_lea.vmem %s12, %s783
        %p785 = pneg %p386
        %p786 = pneg %p383
        %p787 = pneg %p407
        %p788 = pneg %p404
        %p789 = pneg %p428
        %p790 = pneg %p425
        %p791 = pneg %p454
        %p792 = pneg %p451
        %s793 = sand.u32 %s441, 1
        %s794 = scalar_lea.sflag [#allocation5], %s793
        %s795 = sand.u32 %s441, 1
        %s796 = smul.addr %s795, 32
        %s797 = scalar_lea.vmem [#allocation14], %s796
        %p798 = scmp.lt.s32.totalorder %s46, 1
        %s799 = scalar_select %p798, %s46, 1
        %s800 = scalar_lea.vmem %s4, %s799
        %p801 = scmp.lt.s32.totalorder %s46, 1
        %s802 = scalar_select %p801, %s46, 1
        %s803 = smul.addr %s802, 4
        %s804 = scalar_lea.vmem %s6, %s803
        %p805 = scmp.lt.s32.totalorder %s46, 1
        %s806 = scalar_select %p805, %s46, 1
        %s807 = scalar_lea.vmem %s8, %s806
        %p808 = scmp.lt.s32.totalorder %s46, 1
        %s809 = scalar_select %p808, %s46, 1
        %s810 = scalar_lea.vmem %s9, %s809
        %p811 = scmp.lt.s32.totalorder %s46, 1
        %s812 = scalar_select %p811, %s46, 1
        %s813 = scalar_lea.vmem %s10, %s812
        %p814 = scmp.lt.s32.totalorder %s46, 1
        %s815 = scalar_select %p814, %s46, 1
        %s816 = scalar_lea.vmem %s11, %s815
        %p817 = scmp.lt.s32.totalorder %s46, 1
        %s818 = scalar_select %p817, %s46, 1
        %s819 = scalar_lea.vmem %s12, %s818
        %p821 = scmp.eq.s32.totalorder %s46, 0
        // Predicated region
        $region105: #{tpu_custom_call.1} parent=79 // pred_check
          %p822 = pneg %p821
        $region106: #{tpu_custom_call.1} parent=79 // pred_check_branch
          %824 = sbr.rel (%p822) target = $region108
        $region107: #{tpu_custom_call.1} parent=79 // pred_region
          %v825 = vld [vmem:[%s659] sm:$0xff]
          %v826 = vld [vmem:[%s659 + $0x8] sm:$0xff]
          %v827 = vld [vmem:[%s659 + $0x10] sm:$0xff]
          %v828 = vld [vmem:[%s659 + $0x18] sm:$0xff]
          %v829 = vld [vmem:[%s668] sm:$0xff]
          %v830 = vld [vmem:[%s668 + $0x8] sm:$0xff]
          %v831 = vld [vmem:[%s668 + $0x10] sm:$0xff]
          %v832 = vld [vmem:[%s668 + $0x18] sm:$0xff]
          %v833 = vadd.f32 %v825, %v829
          %v834 = vadd.f32 %v826, %v830
          %v835 = vadd.f32 %v827, %v831
          %v836 = vadd.f32 %v828, %v832
          %837 = vst [vmem:[#allocation2] sm:$0xff] %v833
          %838 = vst [vmem:[#allocation2 + $0x8] sm:$0xff] %v834
          %839 = vst [vmem:[#allocation2 + $0x10] sm:$0xff] %v835
          %840 = vst [vmem:[#allocation2 + $0x18] sm:$0xff] %v836
        $region108: #{tpu_custom_call.1} parent=79 // pred_fallthru
          _
        %v841 = vld [vmem:[#allocation2] sm:$0xff]
        %v842 = vld [vmem:[#allocation2 + $0x8] sm:$0xff]
        %v843 = vld [vmem:[#allocation2 + $0x10] sm:$0xff]
        %v844 = vld [vmem:[#allocation2 + $0x18] sm:$0xff]
        %v845 = vld [vmem:[%s810] sm:$0x1]
        %v846 = vld [vmem:[%s813] sm:$0x1]
        %847 = vadd.xlane.f32.xlu0 %v841
        %v848 = vpop.xlane.xlu0 %847
        %849 = vadd.xlane.f32.xlu0 %v842
        %v850 = vpop.xlane.xlu0 %849
        %851 = vadd.xlane.f32.xlu0 %v843
        %v852 = vpop.xlane.xlu0 %851
        %853 = vadd.xlane.f32.xlu0 %v844
        %v854 = vpop.xlane.xlu0 %853
        %v855 = vrcp.pop 128.0
        %v856 = vmul.f32 %v848, %v855
        %v857 = vmul.f32 %v850, %v855
        %v858 = vmul.f32 %v852, %v855
        %v859 = vmul.f32 %v854, %v855
        %v860 = vsub.f32 %v841, %v856
        %v861 = vsub.f32 %v842, %v857
        %v862 = vsub.f32 %v843, %v858
        %v863 = vsub.f32 %v844, %v859
        %v864 = vmul.f32 %v860, %v860
        %v865 = vmul.f32 %v861, %v861
        %v866 = vmul.f32 %v862, %v862
        %v867 = vmul.f32 %v863, %v863
        %868 = vadd.xlane.f32.xlu0 %v864
        %v869 = vpop.xlane.xlu0 %868
        %870 = vadd.xlane.f32.xlu0 %v865
        %v871 = vpop.xlane.xlu0 %870
        %872 = vadd.xlane.f32.xlu0 %v866
        %v873 = vpop.xlane.xlu0 %872
        %874 = vadd.xlane.f32.xlu0 %v867
        %v875 = vpop.xlane.xlu0 %874
        %v876 = vmul.f32 %v869, %v855
        %v877 = vmul.f32 %v871, %v855
        %v878 = vmul.f32 %v873, %v855
        %v879 = vmul.f32 %v875, %v855
        %v880 = vadd.f32 %v876, 1e-05
        %v881 = vadd.f32 %v877, 1e-05
        %v882 = vadd.f32 %v878, 1e-05
        %v883 = vadd.f32 %v879, 1e-05
        %v884 = vrsqrt.pop %v880
        %v885 = vrsqrt.pop %v881
        %v886 = vrsqrt.pop %v882
        %v887 = vrsqrt.pop %v883
        %v888 = vmul.f32 %v860, %v884
        %v889 = vmul.f32 %v861, %v885
        %v890 = vmul.f32 %v862, %v886
        %v891 = vmul.f32 %v863, %v887
        %v893 = vlaneseq
        %v894 = vshrl.u32 %v893, 7
        %v895 = vsub.s32 0, %v894
        %v896 = vrot.slane %v845, %v895
        %v898 = vmul.f32 %v888, %v896
        %v899 = vmul.f32 %v889, %v896
        %v900 = vmul.f32 %v890, %v896
        %v901 = vmul.f32 %v891, %v896
        %v903 = vlaneseq
        %v904 = vshrl.u32 %v903, 7
        %v905 = vsub.s32 0, %v904
        %v906 = vrot.slane %v846, %v905
        %v908 = vadd.f32 %v898, %v906
        %v909 = vadd.f32 %v899, %v906
        %v910 = vadd.f32 %v900, %v906
        %v911 = vadd.f32 %v901, %v906
        %v912 = vpack.c.bf16 %v909, %v908
        %v913 = vpack.c.bf16 %v911, %v910
        %v914 = vld [vmem:[%s677] sm:$0xff]
        %v915 = vld [vmem:[%s677 + $0x8] sm:$0xf]
        %v916 = vld [vmem:[%s677 + $0xc] sm:$0xff]
        %v917 = vld [vmem:[%s677 + $0x14] sm:$0xf]
        %v918 = vld [vmem:[%s677 + $0x18] sm:$0xff]
        %v919 = vld [vmem:[%s677 + $0x20] sm:$0xf]
        %v920 = vld [vmem:[%s677 + $0x24] sm:$0xff]
        %v921 = vld [vmem:[%s677 + $0x2c] sm:$0xf]
        %v922 = vld [vmem:[%s677 + $0x30] sm:$0xff]
        %v923 = vld [vmem:[%s677 + $0x38] sm:$0xf]
        %v924 = vld [vmem:[%s677 + $0x3c] sm:$0xff]
        %v925 = vld [vmem:[%s677 + $0x44] sm:$0xf]
        %v926 = vld [vmem:[%s677 + $0x48] sm:$0xff]
        %v927 = vld [vmem:[%s677 + $0x50] sm:$0xf]
        %v928 = vld [vmem:[%s677 + $0x54] sm:$0xff]
        %v929 = vld [vmem:[%s677 + $0x5c] sm:$0xf]
        %v930 = vld [vmem:[%s677 + $0x60] sm:$0xff]
        %v931 = vld [vmem:[%s677 + $0x68] sm:$0xf]
        %v932 = vld [vmem:[%s677 + $0x6c] sm:$0xff]
        %v933 = vld [vmem:[%s677 + $0x74] sm:$0xf]
        %v934 = vld [vmem:[%s677 + $0x78] sm:$0xff]
        %v935 = vld [vmem:[%s677 + $0x80] sm:$0xf]
        %v936 = vld [vmem:[%s677 + $0x84] sm:$0xff]
        %v937 = vld [vmem:[%s677 + $0x8c] sm:$0xf]
        %v938 = vld [vmem:[%s677 + $0x90] sm:$0xff]
        %v939 = vld [vmem:[%s677 + $0x98] sm:$0xf]
        %v940 = vld [vmem:[%s677 + $0x9c] sm:$0xff]
        %v941 = vld [vmem:[%s677 + $0xa4] sm:$0xf]
        %v942 = vld [vmem:[%s677 + $0xa8] sm:$0xff]
        %v943 = vld [vmem:[%s677 + $0xb0] sm:$0xf]
        %v944 = vld [vmem:[%s677 + $0xb4] sm:$0xff]
        %v945 = vld [vmem:[%s677 + $0xbc] sm:$0xf]
        %v978 = vunpack.c.l.b16 %v914
        %v979 = vunpack.c.h.b16 %v914
        %v980 = vunpack.c.l.b16 %v915
        %v981 = vunpack.c.l.b16 %v916
        %v982 = vunpack.c.h.b16 %v916
        %v983 = vunpack.c.l.b16 %v917
        %v984 = vunpack.c.l.b16 %v918
        %v985 = vunpack.c.h.b16 %v918
        %v986 = vunpack.c.l.b16 %v919
        %v987 = vunpack.c.l.b16 %v920
        %v988 = vunpack.c.h.b16 %v920
        %v989 = vunpack.c.l.b16 %v921
        %v990 = vunpack.c.l.b16 %v922
        %v991 = vunpack.c.h.b16 %v922
        %v992 = vunpack.c.l.b16 %v923
        %v993 = vunpack.c.l.b16 %v924
        %v994 = vunpack.c.h.b16 %v924
        %v995 = vunpack.c.l.b16 %v925
        %v996 = vunpack.c.l.b16 %v926
        %v997 = vunpack.c.h.b16 %v926
        %v998 = vunpack.c.l.b16 %v927
        %v999 = vunpack.c.l.b16 %v928
        %v1000 = vunpack.c.h.b16 %v928
        %v1001 = vunpack.c.l.b16 %v929
        %v1002 = vunpack.c.l.b16 %v930
        %v1003 = vunpack.c.h.b16 %v930
        %v1004 = vunpack.c.l.b16 %v931
        %v1005 = vunpack.c.l.b16 %v932
        %v1006 = vunpack.c.h.b16 %v932
        %v1007 = vunpack.c.l.b16 %v933
        %v1008 = vunpack.c.l.b16 %v934
        %v1009 = vunpack.c.h.b16 %v934
        %v1010 = vunpack.c.l.b16 %v935
        %v1011 = vunpack.c.l.b16 %v936
        %v1012 = vunpack.c.h.b16 %v936
        %v1013 = vunpack.c.l.b16 %v937
        %v1014 = vunpack.c.l.b16 %v938
        %v1015 = vunpack.c.h.b16 %v938
        %v1016 = vunpack.c.l.b16 %v939
        %v1017 = vunpack.c.l.b16 %v940
        %v1018 = vunpack.c.h.b16 %v940
        %v1019 = vunpack.c.l.b16 %v941
        %v1020 = vunpack.c.l.b16 %v942
        %v1021 = vunpack.c.h.b16 %v942
        %v1022 = vunpack.c.l.b16 %v943
        %v1023 = vunpack.c.l.b16 %v944
        %v1024 = vunpack.c.h.b16 %v944
        %v1025 = vunpack.c.l.b16 %v945
        %v1026 = vpack.c.b16 %v981, %v978
        %v1027 = vpack.c.b16 %v982, %v979
        %v1028 = vpack.c.b16 %v983, %v980
        %v1029 = vpack.c.b16 %v987, %v984
        %v1030 = vpack.c.b16 %v988, %v985
        %v1031 = vpack.c.b16 %v989, %v986
        %v1032 = vpack.c.b16 %v993, %v990
        %v1033 = vpack.c.b16 %v994, %v991
        %v1034 = vpack.c.b16 %v995, %v992
        %v1035 = vpack.c.b16 %v999, %v996
        %v1036 = vpack.c.b16 %v1000, %v997
        %v1037 = vpack.c.b16 %v1001, %v998
        %v1038 = vpack.c.b16 %v1005, %v1002
        %v1039 = vpack.c.b16 %v1006, %v1003
        %v1040 = vpack.c.b16 %v1007, %v1004
        %v1041 = vpack.c.b16 %v1011, %v1008
        %v1042 = vpack.c.b16 %v1012, %v1009
        %v1043 = vpack.c.b16 %v1013, %v1010
        %v1044 = vpack.c.b16 %v1017, %v1014
        %v1045 = vpack.c.b16 %v1018, %v1015
        %v1046 = vpack.c.b16 %v1019, %v1016
        %v1047 = vpack.c.b16 %v1023, %v1020
        %v1048 = vpack.c.b16 %v1024, %v1021
        %v1049 = vpack.c.b16 %v1025, %v1022
        %1074 = vmatprep.subr.bf16.mxu0 %v1048
        %1075 = vmatpush1.bf16.msra.mxu0 %v1047
        %1076 = vmatprep.subr.bf16.mxu0 %v1045
        %1077 = vmatpush1.bf16.msra.mxu0 %v1044
        %1078 = vmatprep.subr.bf16.mxu0 %v1042
        %1079 = vmatpush1.bf16.msra.mxu0 %v1041
        %1080 = vmatprep.subr.bf16.mxu0 %v1039
        %1081 = vmatpush1.bf16.msra.mxu0 %v1038
        %1082 = vmatprep.subr.bf16.mxu0 %v1036
        %1083 = vmatpush1.bf16.msra.mxu0 %v1035
        %1084 = vmatprep.subr.bf16.mxu0 %v1033
        %1085 = vmatpush1.bf16.msra.mxu0 %v1032
        %1086 = vmatprep.subr.bf16.mxu0 %v1030
        %1087 = vmatpush1.bf16.msra.mxu0 %v1029
        %1088 = vmatprep.subr.bf16.mxu0 %v1027
        %1089 = vmatpush1.bf16.msra.mxu0 %v1026
        %1090 = vmatprep.subr.bf16.mxu0 0
        %1091 = vmatpush2.bf16.msra.mxu0 0
        %1092 = vmatprep.subr.bf16.mxu0 0
        %1093 = vmatpush2.bf16.msra.mxu0 0
        %1094 = vmatprep.subr.bf16.mxu0 0
        %1095 = vmatpush2.bf16.msra.mxu0 0
        %1096 = vmatprep.subr.bf16.mxu0 0
        %1097 = vmatpush2.bf16.msra.mxu0 0
        %1098 = vmatprep.subr.bf16.mxu0 0
        %1099 = vmatpush2.bf16.msra.mxu0 0
        %1100 = vmatprep.subr.bf16.mxu0 0
        %1101 = vmatpush2.bf16.msra.mxu0 0
        %1102 = vmatprep.subr.bf16.mxu0 0
        %1103 = vmatpush2.bf16.msra.mxu0 0
        %1104 = vmatprep.subr.bf16.mxu0 0
        %1105 = vmatpush2.bf16.msra.mxu0 0
        %1106 = vmatprep.mubr.bf16.mxu0 0
        %1107 = vmatmul.mubr.bf16.gmra.mxu0 %v912
        %v1108 = vpop.f32.mrf.mxu0
        %v1109 = vadd.f32 0.0, %v1108
        %v1110 = vpop.f32.mrf.mxu0
        %v1111 = vadd.f32 0.0, %v1110
        %v1112 = vpop.f32.mrf.mxu0
        %v1113 = vadd.f32 0.0, %v1112
        %v1114 = vpop.f32.mrf.mxu0
        %v1115 = vadd.f32 0.0, %v1114
        %1116 = vmatprep.mubr.bf16.mxu0 0
        %1117 = vmatmul.mubr.bf16.gmra.mxu0 %v913
        %v1118 = vpop.f32.mrf.mxu0
        %v1119 = vadd.f32 0.0, %v1118
        %v1120 = vpop.f32.mrf.mxu0
        %v1121 = vadd.f32 0.0, %v1120
        %v1122 = vpop.f32.mrf.mxu0
        %v1123 = vadd.f32 0.0, %v1122
        %v1124 = vpop.f32.mrf.mxu0
        %v1125 = vadd.f32 0.0, %v1124
        %1126 = vdwg.mxu0
        %1127 = vmatprep.subr.bf16.mxu0 0
        %1128 = vmatpush1.bf16.msra.mxu0 %v1049
        %1129 = vmatprep.subr.bf16.mxu0 0
        %1130 = vmatpush1.bf16.msra.mxu0 %v1046
        %1131 = vmatprep.subr.bf16.mxu0 0
        %1132 = vmatpush1.bf16.msra.mxu0 %v1043
        %1133 = vmatprep.subr.bf16.mxu0 0
        %1134 = vmatpush1.bf16.msra.mxu0 %v1040
        %1135 = vmatprep.subr.bf16.mxu0 0
        %1136 = vmatpush1.bf16.msra.mxu0 %v1037
        %1137 = vmatprep.subr.bf16.mxu0 0
        %1138 = vmatpush1.bf16.msra.mxu0 %v1034
        %1139 = vmatprep.subr.bf16.mxu0 0
        %1140 = vmatpush1.bf16.msra.mxu0 %v1031
        %1141 = vmatprep.subr.bf16.mxu0 0
        %1142 = vmatpush1.bf16.msra.mxu0 %v1028
        %1143 = vmatprep.subr.bf16.mxu0 0
        %1144 = vmatpush2.bf16.msra.mxu0 0
        %1145 = vmatprep.subr.bf16.mxu0 0
        %1146 = vmatpush2.bf16.msra.mxu0 0
        %1147 = vmatprep.subr.bf16.mxu0 0
        %1148 = vmatpush2.bf16.msra.mxu0 0
        %1149 = vmatprep.subr.bf16.mxu0 0
        %1150 = vmatpush2.bf16.msra.mxu0 0
        %1151 = vmatprep.subr.bf16.mxu0 0
        %1152 = vmatpush2.bf16.msra.mxu0 0
        %1153 = vmatprep.subr.bf16.mxu0 0
        %1154 = vmatpush2.bf16.msra.mxu0 0
        %1155 = vmatprep.subr.bf16.mxu0 0
        %1156 = vmatpush2.bf16.msra.mxu0 0
        %1157 = vmatprep.subr.bf16.mxu0 0
        %1158 = vmatpush2.bf16.msra.mxu0 0
        %1159 = vmatprep.mubr.bf16.mxu0 0
        %1160 = vmatmul.mubr.bf16.gmra.mxu0 %v912
        %v1161 = vpop.f32.mrf.mxu0
        %v1162 = vadd.f32 0.0, %v1161
        %v1163 = vpop.f32.mrf.mxu0
        %v1164 = vpop.f32.mrf.mxu0
        %v1165 = vadd.f32 0.0, %v1164
        %v1166 = vpop.f32.mrf.mxu0
        %1167 = vmatprep.mubr.bf16.mxu0 0
        %1168 = vmatmul.mubr.bf16.gmra.mxu0 %v913
        %v1169 = vpop.f32.mrf.mxu0
        %v1170 = vadd.f32 0.0, %v1169
        %v1171 = vpop.f32.mrf.mxu0
        %v1172 = vpop.f32.mrf.mxu0
        %v1173 = vadd.f32 0.0, %v1172
        %v1174 = vpop.f32.mrf.mxu0
        %1175 = vdwg.mxu0
        %v1176 = vld [vmem:[%s686] sm:$0xf]
        %v1177 = vld [vmem:[%s686 + $0x4] sm:$0xf]
        %v1178 = vld [vmem:[%s686 + $0x8] sm:$0xf]
        %v1179 = vld [vmem:[%s686 + $0xc] sm:$0xf]
        %v1180 = vld [vmem:[%s686 + $0x10] sm:$0xf]
        %v1181 = vld [vmem:[%s686 + $0x14] sm:$0xf]
        %v1182 = vld [vmem:[%s686 + $0x18] sm:$0xf]
        %v1183 = vld [vmem:[%s686 + $0x1c] sm:$0xf]
        %v1184 = vld [vmem:[%s686 + $0x20] sm:$0xf]
        %v1185 = vld [vmem:[%s686 + $0x24] sm:$0xf]
        %v1186 = vld [vmem:[%s686 + $0x28] sm:$0xf]
        %v1187 = vld [vmem:[%s686 + $0x2c] sm:$0xf]
        %v1188 = vld [vmem:[%s686 + $0x30] sm:$0xf]
        %v1189 = vld [vmem:[%s686 + $0x34] sm:$0xf]
        %v1190 = vld [vmem:[%s686 + $0x38] sm:$0xf]
        %v1191 = vld [vmem:[%s686 + $0x3c] sm:$0xf]
        %v1192 = vpack.c.bf16 %v1113, %v1109
        %v1193 = vpack.c.bf16 %v1123, %v1119
        %v1194 = vpack.c.bf16 %v1115, %v1111
        %v1195 = vpack.c.bf16 %v1125, %v1121
        %v1196 = vpack.c.bf16 %v1165, %v1162
        %v1197 = vpack.c.bf16 %v1173, %v1170
        %vm1198 = vcmask 261120
        %v1200 = vsel %vm1198, %v1192, 0
        %v1203 = vsel %vm1198, %v1193, 0
        %v1206 = vsel %vm1198, %v1194, 0
        %v1209 = vsel %vm1198, %v1195, 0
        %1211 = vmatprep.subr.bf16.mxu0 0
        %1212 = vmatpush1.bf16.xpose.msra.mxu0 0
        %1213 = vmatprep.subr.bf16.mxu0 0
        %1214 = vmatpush1.bf16.xpose.msra.mxu0 0
        %1215 = vmatprep.subr.bf16.mxu0 0
        %1216 = vmatpush1.bf16.xpose.msra.mxu0 0
        %1217 = vmatprep.subr.bf16.mxu0 0
        %1218 = vmatpush1.bf16.xpose.msra.mxu0 0
        %1219 = vmatprep.subr.bf16.mxu0 0
        %1220 = vmatpush1.bf16.xpose.msra.mxu0 0
        %1221 = vmatprep.subr.bf16.mxu0 0
        %1222 = vmatpush1.bf16.xpose.msra.mxu0 0
        %1223 = vmatprep.subr.bf16.mxu0 0
        %1224 = vmatpush1.bf16.xpose.msra.mxu0 %v1209
        %1225 = vmatprep.subr.bf16.mxu0 0
        %1226 = vmatpush1.bf16.xpose.msra.mxu0 %v1206
        %1227 = vmatprep.subr.bf16.mxu0 0
        %1228 = vmatpush2.bf16.xpose.msra.mxu0 0
        %1229 = vmatprep.subr.bf16.mxu0 0
        %1230 = vmatpush2.bf16.xpose.msra.mxu0 0
        %1231 = vmatprep.subr.bf16.mxu0 0
        %1232 = vmatpush2.bf16.xpose.msra.mxu0 0
        %1233 = vmatprep.subr.bf16.mxu0 0
        %1234 = vmatpush2.bf16.xpose.msra.mxu0 0
        %1235 = vmatprep.subr.bf16.mxu0 0
        %1236 = vmatpush2.bf16.xpose.msra.mxu0 0
        %1237 = vmatprep.subr.bf16.mxu0 0
        %1238 = vmatpush2.bf16.xpose.msra.mxu0 0
        %1239 = vmatprep.subr.bf16.mxu0 0
        %1240 = vmatpush2.bf16.xpose.msra.mxu0 0
        %1241 = vmatprep.subr.bf16.mxu0 0
        %1242 = vmatpush2.bf16.xpose.msra.mxu0 0
        %1243 = vmatprep.mubr.bf16.mxu0 0
        %1244 = vmatmul.mubr.bf16.gmra.mxu0 %v1200
        %v1245 = vpop.f32.mrf.mxu0
        %v1246 = vadd.f32 0.0, %v1245
        %v1247 = vpop.f32.mrf.mxu0
        %v1248 = vpop.f32.mrf.mxu0
        %v1249 = vadd.f32 0.0, %v1248
        %v1250 = vpop.f32.mrf.mxu0
        %1251 = vmatprep.mubr.bf16.mxu0 0
        %1252 = vmatmul.mubr.bf16.gmra.mxu0 %v1203
        %v1253 = vpop.f32.mrf.mxu0
        %v1254 = vadd.f32 0.0, %v1253
        %v1255 = vpop.f32.mrf.mxu0
        %v1256 = vpop.f32.mrf.mxu0
        %v1257 = vadd.f32 0.0, %v1256
        %v1258 = vpop.f32.mrf.mxu0
        %1259 = vdwg.mxu0
        %v1260 = vmul.f32 %v1246, 0.17677669
        %v1261 = vmul.f32 %v1249, 0.17677669
        %v1262 = vmul.f32 %v1254, 0.17677669
        %v1263 = vmul.f32 %v1257, 0.17677669
        %v1264 = vsel %vm1198, %v1260, -inf
        %1265 = vmax.xlane.f32.xlu0 %v1264
        %v1266 = vpop.xlane.xlu0 %1265
        %v1267 = vsel %vm1198, %v1261, -inf
        %1268 = vmax.xlane.f32.xlu0 %v1267
        %v1269 = vpop.xlane.xlu0 %1268
        %v1270 = vsel %vm1198, %v1262, -inf
        %1271 = vmax.xlane.f32.xlu0 %v1270
        %v1272 = vpop.xlane.xlu0 %1271
        %v1273 = vsel %vm1198, %v1263, -inf
        %1274 = vmax.xlane.f32.xlu0 %v1273
        %v1275 = vpop.xlane.xlu0 %1274
        %v1276 = vsub.f32 %v1260, %v1266
        %v1277 = vsub.f32 %v1261, %v1269
        %v1278 = vsub.f32 %v1262, %v1272
        %v1279 = vsub.f32 %v1263, %v1275
        %v1280 = vmul.f32 %v1276, 1.442695
        %v1281 = vpow.pop %v1280
        %v1282 = vmul.f32 %v1277, 1.442695
        %v1283 = vpow.pop %v1282
        %v1284 = vmul.f32 %v1278, 1.442695
        %v1285 = vpow.pop %v1284
        %v1286 = vmul.f32 %v1279, 1.442695
        %v1287 = vpow.pop %v1286
        %v1288 = vsel %vm1198, %v1281, 0.0
        %1289 = vadd.xlane.f32.xlu0 %v1288
        %v1290 = vpop.xlane.xlu0 %1289
        %v1291 = vsel %vm1198, %v1283, 0.0
        %1292 = vadd.xlane.f32.xlu0 %v1291
        %v1293 = vpop.xlane.xlu0 %1292
        %v1294 = vsel %vm1198, %v1285, 0.0
        %1295 = vadd.xlane.f32.xlu0 %v1294
        %v1296 = vpop.xlane.xlu0 %1295
        %v1297 = vsel %vm1198, %v1287, 0.0
        %1298 = vadd.xlane.f32.xlu0 %v1297
        %v1299 = vpop.xlane.xlu0 %1298
        %v1300 = vrcp.pop %v1290
        %v1301 = vrcp.pop %v1293
        %v1302 = vrcp.pop %v1296
        %v1303 = vrcp.pop %v1299
        %v1304 = vmul.f32 %v1281, %v1300
        %v1305 = vmul.f32 %v1283, %v1301
        %v1306 = vmul.f32 %v1285, %v1302
        %v1307 = vmul.f32 %v1287, %v1303
        %v1308 = vpack.c.bf16 %v1305, %v1304
        %v1309 = vpack.c.bf16 %v1307, %v1306
        %v1311 = vsel %vm1198, %v1308, 0
        %v1314 = vsel %vm1198, %v1309, 0
        %1316 = vmatprep.subr.bf16.mxu0 0
        %1317 = vmatpush1.bf16.msra.mxu0 0
        %1318 = vmatprep.subr.bf16.mxu0 0
        %1319 = vmatpush1.bf16.msra.mxu0 0
        %1320 = vmatprep.subr.bf16.mxu0 0
        %1321 = vmatpush1.bf16.msra.mxu0 0
        %1322 = vmatprep.subr.bf16.mxu0 0
        %1323 = vmatpush1.bf16.msra.mxu0 0
        %1324 = vmatprep.subr.bf16.mxu0 0
        %1325 = vmatpush1.bf16.msra.mxu0 0
        %1326 = vmatprep.subr.bf16.mxu0 0
        %1327 = vmatpush1.bf16.msra.mxu0 0
        %1328 = vmatprep.subr.bf16.mxu0 0
        %1329 = vmatpush1.bf16.msra.mxu0 %v1197
        %1330 = vmatprep.subr.bf16.mxu0 0
        %1331 = vmatpush1.bf16.msra.mxu0 %v1196
        %1332 = vmatprep.subr.bf16.mxu0 0
        %1333 = vmatpush2.bf16.msra.mxu0 0
        %1334 = vmatprep.subr.bf16.mxu0 0
        %1335 = vmatpush2.bf16.msra.mxu0 0
        %1336 = vmatprep.subr.bf16.mxu0 0
        %1337 = vmatpush2.bf16.msra.mxu0 0
        %1338 = vmatprep.subr.bf16.mxu0 0
        %1339 = vmatpush2.bf16.msra.mxu0 0
        %1340 = vmatprep.subr.bf16.mxu0 0
        %1341 = vmatpush2.bf16.msra.mxu0 0
        %1342 = vmatprep.subr.bf16.mxu0 0
        %1343 = vmatpush2.bf16.msra.mxu0 0
        %1344 = vmatprep.subr.bf16.mxu0 0
        %1345 = vmatpush2.bf16.msra.mxu0 0
        %1346 = vmatprep.subr.bf16.mxu0 0
        %1347 = vmatpush2.bf16.msra.mxu0 0
        %1348 = vmatprep.mubr.bf16.mxu0 0
        %1349 = vmatmul.mubr.bf16.gmra.mxu0 %v1311
        %v1350 = vpop.f32.mrf.mxu0
        %v1351 = vadd.f32 0.0, %v1350
        %v1352 = vpop.f32.mrf.mxu0
        %v1353 = vpop.f32.mrf.mxu0
        %v1354 = vadd.f32 0.0, %v1353
        %v1355 = vpop.f32.mrf.mxu0
        %1356 = vmatprep.mubr.bf16.mxu0 0
        %1357 = vmatmul.mubr.bf16.gmra.mxu0 %v1314
        %v1358 = vpop.f32.mrf.mxu0
        %v1359 = vadd.f32 0.0, %v1358
        %v1360 = vpop.f32.mrf.mxu0
        %v1361 = vpop.f32.mrf.mxu0
        %v1362 = vadd.f32 0.0, %v1361
        %v1363 = vpop.f32.mrf.mxu0
        %1364 = vdwg.mxu0
        %v1365 = vpack.c.bf16 %v1354, %v1351
        %v1366 = vpack.c.bf16 %v1362, %v1359
        %1369 = vrot.lane.b32.xlu0 %v1192, 96
        %v1370 = vpop.permute.xlu0 %1369
        %1371 = vrot.lane.b32.xlu0 %v1193, 96
        %v1372 = vpop.permute.xlu0 %1371
        %1375 = vrot.lane.b32.xlu0 %v1194, 96
        %v1376 = vpop.permute.xlu0 %1375
        %1377 = vrot.lane.b32.xlu0 %v1195, 96
        %v1378 = vpop.permute.xlu0 %1377
        %v1380 = vsel %vm1198, %v1370, 0
        %v1383 = vsel %vm1198, %v1372, 0
        %v1386 = vsel %vm1198, %v1376, 0
        %v1389 = vsel %vm1198, %v1378, 0
        %1391 = vmatprep.subr.bf16.mxu0 0
        %1392 = vmatpush1.bf16.xpose.msra.mxu0 0
        %1393 = vmatprep.subr.bf16.mxu0 0
        %1394 = vmatpush1.bf16.xpose.msra.mxu0 0
        %1395 = vmatprep.subr.bf16.mxu0 0
        %1396 = vmatpush1.bf16.xpose.msra.mxu0 0
        %1397 = vmatprep.subr.bf16.mxu0 0
        %1398 = vmatpush1.bf16.xpose.msra.mxu0 0
        %1399 = vmatprep.subr.bf16.mxu0 0
        %1400 = vmatpush1.bf16.xpose.msra.mxu0 0
        %1401 = vmatprep.subr.bf16.mxu0 0
        %1402 = vmatpush1.bf16.xpose.msra.mxu0 0
        %1403 = vmatprep.subr.bf16.mxu0 0
        %1404 = vmatpush1.bf16.xpose.msra.mxu0 %v1389
        %1405 = vmatprep.subr.bf16.mxu0 0
        %1406 = vmatpush1.bf16.xpose.msra.mxu0 %v1386
        %1407 = vmatprep.subr.bf16.mxu0 0
        %1408 = vmatpush2.bf16.xpose.msra.mxu0 0
        %1409 = vmatprep.subr.bf16.mxu0 0
        %1410 = vmatpush2.bf16.xpose.msra.mxu0 0
        %1411 = vmatprep.subr.bf16.mxu0 0
        %1412 = vmatpush2.bf16.xpose.msra.mxu0 0
        %1413 = vmatprep.subr.bf16.mxu0 0
        %1414 = vmatpush2.bf16.xpose.msra.mxu0 0
        %1415 = vmatprep.subr.bf16.mxu0 0
        %1416 = vmatpush2.bf16.xpose.msra.mxu0 0
        %1417 = vmatprep.subr.bf16.mxu0 0
        %1418 = vmatpush2.bf16.xpose.msra.mxu0 0
        %1419 = vmatprep.subr.bf16.mxu0 0
        %1420 = vmatpush2.bf16.xpose.msra.mxu0 0
        %1421 = vmatprep.subr.bf16.mxu0 0
        %1422 = vmatpush2.bf16.xpose.msra.mxu0 0
        %1423 = vmatprep.mubr.bf16.mxu0 0
        %1424 = vmatmul.mubr.bf16.gmra.mxu0 %v1380
        %v1425 = vpop.f32.mrf.mxu0
        %v1426 = vadd.f32 0.0, %v1425
        %v1427 = vpop.f32.mrf.mxu0
        %v1428 = vpop.f32.mrf.mxu0
        %v1429 = vadd.f32 0.0, %v1428
        %v1430 = vpop.f32.mrf.mxu0
        %1431 = vmatprep.mubr.bf16.mxu0 0
        %1432 = vmatmul.mubr.bf16.gmra.mxu0 %v1383
        %v1433 = vpop.f32.mrf.mxu0
        %v1434 = vadd.f32 0.0, %v1433
        %v1435 = vpop.f32.mrf.mxu0
        %v1436 = vpop.f32.mrf.mxu0
        %v1437 = vadd.f32 0.0, %v1436
        %v1438 = vpop.f32.mrf.mxu0
        %1439 = vdwg.mxu0
        %v1440 = vmul.f32 %v1426, 0.17677669
        %v1441 = vmul.f32 %v1429, 0.17677669
        %v1442 = vmul.f32 %v1434, 0.17677669
        %v1443 = vmul.f32 %v1437, 0.17677669
        %v1444 = vsel %vm1198, %v1440, -inf
        %1445 = vmax.xlane.f32.xlu0 %v1444
        %v1446 = vpop.xlane.xlu0 %1445
        %v1447 = vsel %vm1198, %v1441, -inf
        %1448 = vmax.xlane.f32.xlu0 %v1447
        %v1449 = vpop.xlane.xlu0 %1448
        %v1450 = vsel %vm1198, %v1442, -inf
        %1451 = vmax.xlane.f32.xlu0 %v1450
        %v1452 = vpop.xlane.xlu0 %1451
        %v1453 = vsel %vm1198, %v1443, -inf
        %1454 = vmax.xlane.f32.xlu0 %v1453
        %v1455 = vpop.xlane.xlu0 %1454
        %v1456 = vsub.f32 %v1440, %v1446
        %v1457 = vsub.f32 %v1441, %v1449
        %v1458 = vsub.f32 %v1442, %v1452
        %v1459 = vsub.f32 %v1443, %v1455
        %v1460 = vmul.f32 %v1456, 1.442695
        %v1461 = vpow.pop %v1460
        %v1462 = vmul.f32 %v1457, 1.442695
        %v1463 = vpow.pop %v1462
        %v1464 = vmul.f32 %v1458, 1.442695
        %v1465 = vpow.pop %v1464
        %v1466 = vmul.f32 %v1459, 1.442695
        %v1467 = vpow.pop %v1466
        %v1468 = vsel %vm1198, %v1461, 0.0
        %1469 = vadd.xlane.f32.xlu0 %v1468
        %v1470 = vpop.xlane.xlu0 %1469
        %v1471 = vsel %vm1198, %v1463, 0.0
        %1472 = vadd.xlane.f32.xlu0 %v1471
        %v1473 = vpop.xlane.xlu0 %1472
        %v1474 = vsel %vm1198, %v1465, 0.0
        %1475 = vadd.xlane.f32.xlu0 %v1474
        %v1476 = vpop.xlane.xlu0 %1475
        %v1477 = vsel %vm1198, %v1467, 0.0
        %1478 = vadd.xlane.f32.xlu0 %v1477
        %v1479 = vpop.xlane.xlu0 %1478
        %v1480 = vrcp.pop %v1470
        %v1481 = vrcp.pop %v1473
        %v1482 = vrcp.pop %v1476
        %v1483 = vrcp.pop %v1479
        %v1484 = vmul.f32 %v1461, %v1480
        %v1485 = vmul.f32 %v1463, %v1481
        %v1486 = vmul.f32 %v1465, %v1482
        %v1487 = vmul.f32 %v1467, %v1483
        %v1488 = vpack.c.bf16 %v1485, %v1484
        %v1489 = vpack.c.bf16 %v1487, %v1486
        %1492 = vrot.lane.b32.xlu0 %v1196, 96
        %v1493 = vpop.permute.xlu0 %1492
        %1494 = vrot.lane.b32.xlu0 %v1197, 96
        %v1495 = vpop.permute.xlu0 %1494
        %v1499 = vsel %vm1198, %v1488, 0
        %v1502 = vsel %vm1198, %v1489, 0
        %1504 = vmatprep.subr.bf16.mxu0 0
        %1505 = vmatpush1.bf16.msra.mxu0 0
        %1506 = vmatprep.subr.bf16.mxu0 0
        %1507 = vmatpush1.bf16.msra.mxu0 0
        %1508 = vmatprep.subr.bf16.mxu0 0
        %1509 = vmatpush1.bf16.msra.mxu0 0
        %1510 = vmatprep.subr.bf16.mxu0 0
        %1511 = vmatpush1.bf16.msra.mxu0 0
        %1512 = vmatprep.subr.bf16.mxu0 0
        %1513 = vmatpush1.bf16.msra.mxu0 0
        %1514 = vmatprep.subr.bf16.mxu0 0
        %1515 = vmatpush1.bf16.msra.mxu0 0
        %1516 = vmatprep.subr.bf16.mxu0 0
        %1517 = vmatpush1.bf16.msra.mxu0 %v1495
        %1518 = vmatprep.subr.bf16.mxu0 0
        %1519 = vmatpush1.bf16.msra.mxu0 %v1493
        %1520 = vmatprep.subr.bf16.mxu0 0
        %1521 = vmatpush2.bf16.msra.mxu0 0
        %1522 = vmatprep.subr.bf16.mxu0 0
        %1523 = vmatpush2.bf16.msra.mxu0 0
        %1524 = vmatprep.subr.bf16.mxu0 0
        %1525 = vmatpush2.bf16.msra.mxu0 0
        %1526 = vmatprep.subr.bf16.mxu0 0
        %1527 = vmatpush2.bf16.msra.mxu0 0
        %1528 = vmatprep.subr.bf16.mxu0 0
        %1529 = vmatpush2.bf16.msra.mxu0 0
        %1530 = vmatprep.subr.bf16.mxu0 0
        %1531 = vmatpush2.bf16.msra.mxu0 0
        %1532 = vmatprep.subr.bf16.mxu0 0
        %1533 = vmatpush2.bf16.msra.mxu0 0
        %1534 = vmatprep.subr.bf16.mxu0 0
        %1535 = vmatpush2.bf16.msra.mxu0 0
        %1536 = vmatprep.mubr.bf16.mxu0 0
        %1537 = vmatmul.mubr.bf16.gmra.mxu0 %v1499
        %v1538 = vpop.f32.mrf.mxu0
        %v1539 = vadd.f32 0.0, %v1538
        %v1540 = vpop.f32.mrf.mxu0
        %v1541 = vpop.f32.mrf.mxu0
        %v1542 = vadd.f32 0.0, %v1541
        %v1543 = vpop.f32.mrf.mxu0
        %1544 = vmatprep.mubr.bf16.mxu0 0
        %1545 = vmatmul.mubr.bf16.gmra.mxu0 %v1502
        %v1546 = vpop.f32.mrf.mxu0
        %v1547 = vadd.f32 0.0, %v1546
        %v1548 = vpop.f32.mrf.mxu0
        %v1549 = vpop.f32.mrf.mxu0
        %v1550 = vadd.f32 0.0, %v1549
        %v1551 = vpop.f32.mrf.mxu0
        %1552 = vdwg.mxu0
        %v1553 = vpack.c.bf16 %v1542, %v1539
        %v1554 = vpack.c.bf16 %v1550, %v1547
        %v1559 = vunpack.c.l.b16 %v1180
        %v1560 = vunpack.c.l.b16 %v1181
        %v1561 = vunpack.c.l.b16 %v1182
        %v1562 = vunpack.c.l.b16 %v1183
        %v1563 = vpack.c.b16 %v1560, %v1559
        %v1564 = vpack.c.b16 %v1562, %v1561
        %v1568 = vsel %vm1198, %v1553, 0
        %v1571 = vsel %vm1198, %v1554, 0
        %1573 = vmatprep.subr.bf16.mxu0 0
        %1574 = vmatpush1.bf16.msra.mxu0 0
        %1575 = vmatprep.subr.bf16.mxu0 0
        %1576 = vmatpush1.bf16.msra.mxu0 0
        %1577 = vmatprep.subr.bf16.mxu0 0
        %1578 = vmatpush1.bf16.msra.mxu0 0
        %1579 = vmatprep.subr.bf16.mxu0 0
        %1580 = vmatpush1.bf16.msra.mxu0 0
        %1581 = vmatprep.subr.bf16.mxu0 0
        %1582 = vmatpush1.bf16.msra.mxu0 0
        %1583 = vmatprep.subr.bf16.mxu0 0
        %1584 = vmatpush1.bf16.msra.mxu0 0
        %1585 = vmatprep.subr.bf16.mxu0 0
        %1586 = vmatpush1.bf16.msra.mxu0 %v1564
        %1587 = vmatprep.subr.bf16.mxu0 0
        %1588 = vmatpush1.bf16.msra.mxu0 %v1563
        %1589 = vmatprep.subr.bf16.mxu0 0
        %1590 = vmatpush2.bf16.msra.mxu0 0
        %1591 = vmatprep.subr.bf16.mxu0 0
        %1592 = vmatpush2.bf16.msra.mxu0 0
        %1593 = vmatprep.subr.bf16.mxu0 0
        %1594 = vmatpush2.bf16.msra.mxu0 0
        %1595 = vmatprep.subr.bf16.mxu0 0
        %1596 = vmatpush2.bf16.msra.mxu0 0
        %1597 = vmatprep.subr.bf16.mxu0 0
        %1598 = vmatpush2.bf16.msra.mxu0 0
        %1599 = vmatprep.subr.bf16.mxu0 0
        %1600 = vmatpush2.bf16.msra.mxu0 0
        %1601 = vmatprep.subr.bf16.mxu0 0
        %1602 = vmatpush2.bf16.msra.mxu0 0
        %1603 = vmatprep.subr.bf16.mxu0 0
        %1604 = vmatpush2.bf16.msra.mxu0 0
        %1605 = vmatprep.mubr.bf16.mxu0 0
        %1606 = vmatmul.mubr.bf16.gmra.mxu0 %v1568
        %v1607 = vpop.f32.mrf.mxu0
        %v1608 = vadd.f32 0.0, %v1607
        %v1609 = vpop.f32.mrf.mxu0
        %v1610 = vpop.f32.mrf.mxu0
        %v1611 = vadd.f32 0.0, %v1610
        %v1612 = vpop.f32.mrf.mxu0
        %1613 = vmatprep.mubr.bf16.mxu0 0
        %1614 = vmatmul.mubr.bf16.gmra.mxu0 %v1571
        %v1615 = vpop.f32.mrf.mxu0
        %v1616 = vadd.f32 0.0, %v1615
        %v1617 = vpop.f32.mrf.mxu0
        %v1618 = vpop.f32.mrf.mxu0
        %v1619 = vadd.f32 0.0, %v1618
        %v1620 = vpop.f32.mrf.mxu0
        %1621 = vdwg.mxu0
        %v1626 = vunpack.c.l.b16 %v1176
        %v1627 = vunpack.c.l.b16 %v1177
        %v1628 = vunpack.c.l.b16 %v1178
        %v1629 = vunpack.c.l.b16 %v1179
        %v1630 = vpack.c.b16 %v1627, %v1626
        %v1631 = vpack.c.b16 %v1629, %v1628
        %v1635 = vsel %vm1198, %v1365, 0
        %v1638 = vsel %vm1198, %v1366, 0
        %1640 = vmatprep.subr.bf16.mxu0 0
        %1641 = vmatpush1.bf16.msra.mxu0 0
        %1642 = vmatprep.subr.bf16.mxu0 0
        %1643 = vmatpush1.bf16.msra.mxu0 0
        %1644 = vmatprep.subr.bf16.mxu0 0
        %1645 = vmatpush1.bf16.msra.mxu0 0
        %1646 = vmatprep.subr.bf16.mxu0 0
        %1647 = vmatpush1.bf16.msra.mxu0 0
        %1648 = vmatprep.subr.bf16.mxu0 0
        %1649 = vmatpush1.bf16.msra.mxu0 0
        %1650 = vmatprep.subr.bf16.mxu0 0
        %1651 = vmatpush1.bf16.msra.mxu0 0
        %1652 = vmatprep.subr.bf16.mxu0 0
        %1653 = vmatpush1.bf16.msra.mxu0 %v1631
        %1654 = vmatprep.subr.bf16.mxu0 0
        %1655 = vmatpush1.bf16.msra.mxu0 %v1630
        %1656 = vmatprep.subr.bf16.mxu0 0
        %1657 = vmatpush2.bf16.msra.mxu0 0
        %1658 = vmatprep.subr.bf16.mxu0 0
        %1659 = vmatpush2.bf16.msra.mxu0 0
        %1660 = vmatprep.subr.bf16.mxu0 0
        %1661 = vmatpush2.bf16.msra.mxu0 0
        %1662 = vmatprep.subr.bf16.mxu0 0
        %1663 = vmatpush2.bf16.msra.mxu0 0
        %1664 = vmatprep.subr.bf16.mxu0 0
        %1665 = vmatpush2.bf16.msra.mxu0 0
        %1666 = vmatprep.subr.bf16.mxu0 0
        %1667 = vmatpush2.bf16.msra.mxu0 0
        %1668 = vmatprep.subr.bf16.mxu0 0
        %1669 = vmatpush2.bf16.msra.mxu0 0
        %1670 = vmatprep.subr.bf16.mxu0 0
        %1671 = vmatpush2.bf16.msra.mxu0 0
        %1672 = vmatprep.mubr.bf16.mxu0 0
        %1673 = vmatmul.mubr.bf16.gmra.mxu0 %v1635
        %v1674 = vpop.f32.mrf.mxu0
        %v1675 = vadd.f32 %v1608, %v1674
        %v1676 = vpop.f32.mrf.mxu0
        %v1677 = vpop.f32.mrf.mxu0
        %v1678 = vadd.f32 %v1611, %v1677
        %v1679 = vpop.f32.mrf.mxu0
        %1680 = vmatprep.mubr.bf16.mxu0 0
        %1681 = vmatmul.mubr.bf16.gmra.mxu0 %v1638
        %v1682 = vpop.f32.mrf.mxu0
        %v1683 = vadd.f32 %v1616, %v1682
        %v1684 = vpop.f32.mrf.mxu0
        %v1685 = vpop.f32.mrf.mxu0
        %v1686 = vadd.f32 %v1619, %v1685
        %v1687 = vpop.f32.mrf.mxu0
        %1688 = vdwg.mxu0
        %1689 = vrot.lane.b32.xlu0 %v1192, 64
        %v1690 = vpop.permute.xlu0 %1689
        %1691 = vrot.lane.b32.xlu0 %v1193, 64
        %v1692 = vpop.permute.xlu0 %1691
        %1693 = vrot.lane.b32.xlu0 %v1194, 64
        %v1694 = vpop.permute.xlu0 %1693
        %1695 = vrot.lane.b32.xlu0 %v1195, 64
        %v1696 = vpop.permute.xlu0 %1695
        %v1698 = vsel %vm1198, %v1690, 0
        %v1701 = vsel %vm1198, %v1692, 0
        %v1704 = vsel %vm1198, %v1694, 0
        %v1707 = vsel %vm1198, %v1696, 0
        %1709 = vmatprep.subr.bf16.mxu0 0
        %1710 = vmatpush1.bf16.xpose.msra.mxu0 0
        %1711 = vmatprep.subr.bf16.mxu0 0
        %1712 = vmatpush1.bf16.xpose.msra.mxu0 0
        %1713 = vmatprep.subr.bf16.mxu0 0
        %1714 = vmatpush1.bf16.xpose.msra.mxu0 0
        %1715 = vmatprep.subr.bf16.mxu0 0
        %1716 = vmatpush1.bf16.xpose.msra.mxu0 0
        %1717 = vmatprep.subr.bf16.mxu0 0
        %1718 = vmatpush1.bf16.xpose.msra.mxu0 0
        %1719 = vmatprep.subr.bf16.mxu0 0
        %1720 = vmatpush1.bf16.xpose.msra.mxu0 0
        %1721 = vmatprep.subr.bf16.mxu0 0
        %1722 = vmatpush1.bf16.xpose.msra.mxu0 %v1707
        %1723 = vmatprep.subr.bf16.mxu0 0
        %1724 = vmatpush1.bf16.xpose.msra.mxu0 %v1704
        %1725 = vmatprep.subr.bf16.mxu0 0
        %1726 = vmatpush2.bf16.xpose.msra.mxu0 0
        %1727 = vmatprep.subr.bf16.mxu0 0
        %1728 = vmatpush2.bf16.xpose.msra.mxu0 0
        %1729 = vmatprep.subr.bf16.mxu0 0
        %1730 = vmatpush2.bf16.xpose.msra.mxu0 0
        %1731 = vmatprep.subr.bf16.mxu0 0
        %1732 = vmatpush2.bf16.xpose.msra.mxu0 0
        %1733 = vmatprep.subr.bf16.mxu0 0
        %1734 = vmatpush2.bf16.xpose.msra.mxu0 0
        %1735 = vmatprep.subr.bf16.mxu0 0
        %1736 = vmatpush2.bf16.xpose.msra.mxu0 0
        %1737 = vmatprep.subr.bf16.mxu0 0
        %1738 = vmatpush2.bf16.xpose.msra.mxu0 0
        %1739 = vmatprep.subr.bf16.mxu0 0
        %1740 = vmatpush2.bf16.xpose.msra.mxu0 0
        %1741 = vmatprep.mubr.bf16.mxu0 0
        %1742 = vmatmul.mubr.bf16.gmra.mxu0 %v1698
        %v1743 = vpop.f32.mrf.mxu0
        %v1744 = vadd.f32 0.0, %v1743
        %v1745 = vpop.f32.mrf.mxu0
        %v1746 = vpop.f32.mrf.mxu0
        %v1747 = vadd.f32 0.0, %v1746
        %v1748 = vpop.f32.mrf.mxu0
        %1749 = vmatprep.mubr.bf16.mxu0 0
        %1750 = vmatmul.mubr.bf16.gmra.mxu0 %v1701
        %v1751 = vpop.f32.mrf.mxu0
        %v1752 = vadd.f32 0.0, %v1751
        %v1753 = vpop.f32.mrf.mxu0
        %v1754 = vpop.f32.mrf.mxu0
        %v1755 = vadd.f32 0.0, %v1754
        %v1756 = vpop.f32.mrf.mxu0
        %1757 = vdwg.mxu0
        %v1758 = vmul.f32 %v1744, 0.17677669
        %v1759 = vmul.f32 %v1747, 0.17677669
        %v1760 = vmul.f32 %v1752, 0.17677669
        %v1761 = vmul.f32 %v1755, 0.17677669
        %v1762 = vsel %vm1198, %v1758, -inf
        %1763 = vmax.xlane.f32.xlu0 %v1762
        %v1764 = vpop.xlane.xlu0 %1763
        %v1765 = vsel %vm1198, %v1759, -inf
        %1766 = vmax.xlane.f32.xlu0 %v1765
        %v1767 = vpop.xlane.xlu0 %1766
        %v1768 = vsel %vm1198, %v1760, -inf
        %1769 = vmax.xlane.f32.xlu0 %v1768
        %v1770 = vpop.xlane.xlu0 %1769
        %v1771 = vsel %vm1198, %v1761, -inf
        %1772 = vmax.xlane.f32.xlu0 %v1771
        %v1773 = vpop.xlane.xlu0 %1772
        %v1774 = vsub.f32 %v1758, %v1764
        %v1775 = vsub.f32 %v1759, %v1767
        %v1776 = vsub.f32 %v1760, %v1770
        %v1777 = vsub.f32 %v1761, %v1773
        %v1778 = vmul.f32 %v1774, 1.442695
        %v1779 = vpow.pop %v1778
        %v1780 = vmul.f32 %v1775, 1.442695
        %v1781 = vpow.pop %v1780
        %v1782 = vmul.f32 %v1776, 1.442695
        %v1783 = vpow.pop %v1782
        %v1784 = vmul.f32 %v1777, 1.442695
        %v1785 = vpow.pop %v1784
        %v1786 = vsel %vm1198, %v1779, 0.0
        %1787 = vadd.xlane.f32.xlu0 %v1786
        %v1788 = vpop.xlane.xlu0 %1787
        %v1789 = vsel %vm1198, %v1781, 0.0
        %1790 = vadd.xlane.f32.xlu0 %v1789
        %v1791 = vpop.xlane.xlu0 %1790
        %v1792 = vsel %vm1198, %v1783, 0.0
        %1793 = vadd.xlane.f32.xlu0 %v1792
        %v1794 = vpop.xlane.xlu0 %1793
        %v1795 = vsel %vm1198, %v1785, 0.0
        %1796 = vadd.xlane.f32.xlu0 %v1795
        %v1797 = vpop.xlane.xlu0 %1796
        %v1798 = vrcp.pop %v1788
        %v1799 = vrcp.pop %v1791
        %v1800 = vrcp.pop %v1794
        %v1801 = vrcp.pop %v1797
        %v1802 = vmul.f32 %v1779, %v1798
        %v1803 = vmul.f32 %v1781, %v1799
        %v1804 = vmul.f32 %v1783, %v1800
        %v1805 = vmul.f32 %v1785, %v1801
        %v1806 = vpack.c.bf16 %v1803, %v1802
        %v1807 = vpack.c.bf16 %v1805, %v1804
        %1808 = vrot.lane.b32.xlu0 %v1196, 64
        %v1809 = vpop.permute.xlu0 %1808
        %1810 = vrot.lane.b32.xlu0 %v1197, 64
        %v1811 = vpop.permute.xlu0 %1810
        %v1815 = vsel %vm1198, %v1806, 0
        %v1818 = vsel %vm1198, %v1807, 0
        %1820 = vmatprep.subr.bf16.mxu0 0
        %1821 = vmatpush1.bf16.msra.mxu0 0
        %1822 = vmatprep.subr.bf16.mxu0 0
        %1823 = vmatpush1.bf16.msra.mxu0 0
        %1824 = vmatprep.subr.bf16.mxu0 0
        %1825 = vmatpush1.bf16.msra.mxu0 0
        %1826 = vmatprep.subr.bf16.mxu0 0
        %1827 = vmatpush1.bf16.msra.mxu0 0
        %1828 = vmatprep.subr.bf16.mxu0 0
        %1829 = vmatpush1.bf16.msra.mxu0 0
        %1830 = vmatprep.subr.bf16.mxu0 0
        %1831 = vmatpush1.bf16.msra.mxu0 0
        %1832 = vmatprep.subr.bf16.mxu0 0
        %1833 = vmatpush1.bf16.msra.mxu0 %v1811
        %1834 = vmatprep.subr.bf16.mxu0 0
        %1835 = vmatpush1.bf16.msra.mxu0 %v1809
        %1836 = vmatprep.subr.bf16.mxu0 0
        %1837 = vmatpush2.bf16.msra.mxu0 0
        %1838 = vmatprep.subr.bf16.mxu0 0
        %1839 = vmatpush2.bf16.msra.mxu0 0
        %1840 = vmatprep.subr.bf16.mxu0 0
        %1841 = vmatpush2.bf16.msra.mxu0 0
        %1842 = vmatprep.subr.bf16.mxu0 0
        %1843 = vmatpush2.bf16.msra.mxu0 0
        %1844 = vmatprep.subr.bf16.mxu0 0
        %1845 = vmatpush2.bf16.msra.mxu0 0
        %1846 = vmatprep.subr.bf16.mxu0 0
        %1847 = vmatpush2.bf16.msra.mxu0 0
        %1848 = vmatprep.subr.bf16.mxu0 0
        %1849 = vmatpush2.bf16.msra.mxu0 0
        %1850 = vmatprep.subr.bf16.mxu0 0
        %1851 = vmatpush2.bf16.msra.mxu0 0
        %1852 = vmatprep.mubr.bf16.mxu0 0
        %1853 = vmatmul.mubr.bf16.gmra.mxu0 %v1815
        %v1854 = vpop.f32.mrf.mxu0
        %v1855 = vadd.f32 0.0, %v1854
        %v1856 = vpop.f32.mrf.mxu0
        %v1857 = vpop.f32.mrf.mxu0
        %v1858 = vadd.f32 0.0, %v1857
        %v1859 = vpop.f32.mrf.mxu0
        %1860 = vmatprep.mubr.bf16.mxu0 0
        %1861 = vmatmul.mubr.bf16.gmra.mxu0 %v1818
        %v1862 = vpop.f32.mrf.mxu0
        %v1863 = vadd.f32 0.0, %v1862
        %v1864 = vpop.f32.mrf.mxu0
        %v1865 = vpop.f32.mrf.mxu0
        %v1866 = vadd.f32 0.0, %v1865
        %v1867 = vpop.f32.mrf.mxu0
        %1868 = vdwg.mxu0
        %v1869 = vpack.c.bf16 %v1858, %v1855
        %v1870 = vpack.c.bf16 %v1866, %v1863
        %v1875 = vunpack.c.l.b16 %v1184
        %v1876 = vunpack.c.l.b16 %v1185
        %v1877 = vunpack.c.l.b16 %v1186
        %v1878 = vunpack.c.l.b16 %v1187
        %v1879 = vpack.c.b16 %v1876, %v1875
        %v1880 = vpack.c.b16 %v1878, %v1877
        %v1884 = vsel %vm1198, %v1869, 0
        %v1887 = vsel %vm1198, %v1870, 0
        %1889 = vmatprep.subr.bf16.mxu0 0
        %1890 = vmatpush1.bf16.msra.mxu0 0
        %1891 = vmatprep.subr.bf16.mxu0 0
        %1892 = vmatpush1.bf16.msra.mxu0 0
        %1893 = vmatprep.subr.bf16.mxu0 0
        %1894 = vmatpush1.bf16.msra.mxu0 0
        %1895 = vmatprep.subr.bf16.mxu0 0
        %1896 = vmatpush1.bf16.msra.mxu0 0
        %1897 = vmatprep.subr.bf16.mxu0 0
        %1898 = vmatpush1.bf16.msra.mxu0 0
        %1899 = vmatprep.subr.bf16.mxu0 0
        %1900 = vmatpush1.bf16.msra.mxu0 0
        %1901 = vmatprep.subr.bf16.mxu0 0
        %1902 = vmatpush1.bf16.msra.mxu0 %v1880
        %1903 = vmatprep.subr.bf16.mxu0 0
        %1904 = vmatpush1.bf16.msra.mxu0 %v1879
        %1905 = vmatprep.subr.bf16.mxu0 0
        %1906 = vmatpush2.bf16.msra.mxu0 0
        %1907 = vmatprep.subr.bf16.mxu0 0
        %1908 = vmatpush2.bf16.msra.mxu0 0
        %1909 = vmatprep.subr.bf16.mxu0 0
        %1910 = vmatpush2.bf16.msra.mxu0 0
        %1911 = vmatprep.subr.bf16.mxu0 0
        %1912 = vmatpush2.bf16.msra.mxu0 0
        %1913 = vmatprep.subr.bf16.mxu0 0
        %1914 = vmatpush2.bf16.msra.mxu0 0
        %1915 = vmatprep.subr.bf16.mxu0 0
        %1916 = vmatpush2.bf16.msra.mxu0 0
        %1917 = vmatprep.subr.bf16.mxu0 0
        %1918 = vmatpush2.bf16.msra.mxu0 0
        %1919 = vmatprep.subr.bf16.mxu0 0
        %1920 = vmatpush2.bf16.msra.mxu0 0
        %1921 = vmatprep.mubr.bf16.mxu0 0
        %1922 = vmatmul.mubr.bf16.gmra.mxu0 %v1884
        %v1923 = vpop.f32.mrf.mxu0
        %v1924 = vadd.f32 0.0, %v1923
        %v1925 = vpop.f32.mrf.mxu0
        %v1926 = vpop.f32.mrf.mxu0
        %v1927 = vadd.f32 0.0, %v1926
        %v1928 = vpop.f32.mrf.mxu0
        %1929 = vmatprep.mubr.bf16.mxu0 0
        %1930 = vmatmul.mubr.bf16.gmra.mxu0 %v1887
        %v1931 = vpop.f32.mrf.mxu0
        %v1932 = vadd.f32 0.0, %v1931
        %v1933 = vpop.f32.mrf.mxu0
        %v1934 = vpop.f32.mrf.mxu0
        %v1935 = vadd.f32 0.0, %v1934
        %v1936 = vpop.f32.mrf.mxu0
        %1937 = vdwg.mxu0
        %v1938 = vadd.f32 %v1675, %v1924
        %v1939 = vadd.f32 %v1678, %v1927
        %v1940 = vadd.f32 %v1683, %v1932
        %v1941 = vadd.f32 %v1686, %v1935
        %1942 = vrot.lane.b32.xlu0 %v1192, 32
        %v1943 = vpop.permute.xlu0 %1942
        %1944 = vrot.lane.b32.xlu0 %v1193, 32
        %v1945 = vpop.permute.xlu0 %1944
        %1946 = vrot.lane.b32.xlu0 %v1194, 32
        %v1947 = vpop.permute.xlu0 %1946
        %1948 = vrot.lane.b32.xlu0 %v1195, 32
        %v1949 = vpop.permute.xlu0 %1948
        %v1951 = vsel %vm1198, %v1943, 0
        %v1954 = vsel %vm1198, %v1945, 0
        %v1957 = vsel %vm1198, %v1947, 0
        %v1960 = vsel %vm1198, %v1949, 0
        %1962 = vmatprep.subr.bf16.mxu0 0
        %1963 = vmatpush1.bf16.xpose.msra.mxu0 0
        %1964 = vmatprep.subr.bf16.mxu0 0
        %1965 = vmatpush1.bf16.xpose.msra.mxu0 0
        %1966 = vmatprep.subr.bf16.mxu0 0
        %1967 = vmatpush1.bf16.xpose.msra.mxu0 0
        %1968 = vmatprep.subr.bf16.mxu0 0
        %1969 = vmatpush1.bf16.xpose.msra.mxu0 0
        %1970 = vmatprep.subr.bf16.mxu0 0
        %1971 = vmatpush1.bf16.xpose.msra.mxu0 0
        %1972 = vmatprep.subr.bf16.mxu0 0
        %1973 = vmatpush1.bf16.xpose.msra.mxu0 0
        %1974 = vmatprep.subr.bf16.mxu0 0
        %1975 = vmatpush1.bf16.xpose.msra.mxu0 %v1960
        %1976 = vmatprep.subr.bf16.mxu0 0
        %1977 = vmatpush1.bf16.xpose.msra.mxu0 %v1957
        %1978 = vmatprep.subr.bf16.mxu0 0
        %1979 = vmatpush2.bf16.xpose.msra.mxu0 0
        %1980 = vmatprep.subr.bf16.mxu0 0
        %1981 = vmatpush2.bf16.xpose.msra.mxu0 0
        %1982 = vmatprep.subr.bf16.mxu0 0
        %1983 = vmatpush2.bf16.xpose.msra.mxu0 0
        %1984 = vmatprep.subr.bf16.mxu0 0
        %1985 = vmatpush2.bf16.xpose.msra.mxu0 0
        %1986 = vmatprep.subr.bf16.mxu0 0
        %1987 = vmatpush2.bf16.xpose.msra.mxu0 0
        %1988 = vmatprep.subr.bf16.mxu0 0
        %1989 = vmatpush2.bf16.xpose.msra.mxu0 0
        %1990 = vmatprep.subr.bf16.mxu0 0
        %1991 = vmatpush2.bf16.xpose.msra.mxu0 0
        %1992 = vmatprep.subr.bf16.mxu0 0
        %1993 = vmatpush2.bf16.xpose.msra.mxu0 0
        %1994 = vmatprep.mubr.bf16.mxu0 0
        %1995 = vmatmul.mubr.bf16.gmra.mxu0 %v1951
        %v1996 = vpop.f32.mrf.mxu0
        %v1997 = vadd.f32 0.0, %v1996
        %v1998 = vpop.f32.mrf.mxu0
        %v1999 = vpop.f32.mrf.mxu0
        %v2000 = vadd.f32 0.0, %v1999
        %v2001 = vpop.f32.mrf.mxu0
        %2002 = vmatprep.mubr.bf16.mxu0 0
        %2003 = vmatmul.mubr.bf16.gmra.mxu0 %v1954
        %v2004 = vpop.f32.mrf.mxu0
        %v2005 = vadd.f32 0.0, %v2004
        %v2006 = vpop.f32.mrf.mxu0
        %v2007 = vpop.f32.mrf.mxu0
        %v2008 = vadd.f32 0.0, %v2007
        %v2009 = vpop.f32.mrf.mxu0
        %2010 = vdwg.mxu0
        %v2011 = vmul.f32 %v1997, 0.17677669
        %v2012 = vmul.f32 %v2000, 0.17677669
        %v2013 = vmul.f32 %v2005, 0.17677669
        %v2014 = vmul.f32 %v2008, 0.17677669
        %v2015 = vsel %vm1198, %v2011, -inf
        %2016 = vmax.xlane.f32.xlu0 %v2015
        %v2017 = vpop.xlane.xlu0 %2016
        %v2018 = vsel %vm1198, %v2012, -inf
        %2019 = vmax.xlane.f32.xlu0 %v2018
        %v2020 = vpop.xlane.xlu0 %2019
        %v2021 = vsel %vm1198, %v2013, -inf
        %2022 = vmax.xlane.f32.xlu0 %v2021
        %v2023 = vpop.xlane.xlu0 %2022
        %v2024 = vsel %vm1198, %v2014, -inf
        %2025 = vmax.xlane.f32.xlu0 %v2024
        %v2026 = vpop.xlane.xlu0 %2025
        %v2027 = vsub.f32 %v2011, %v2017
        %v2028 = vsub.f32 %v2012, %v2020
        %v2029 = vsub.f32 %v2013, %v2023
        %v2030 = vsub.f32 %v2014, %v2026
        %v2031 = vmul.f32 %v2027, 1.442695
        %v2032 = vpow.pop %v2031
        %v2033 = vmul.f32 %v2028, 1.442695
        %v2034 = vpow.pop %v2033
        %v2035 = vmul.f32 %v2029, 1.442695
        %v2036 = vpow.pop %v2035
        %v2037 = vmul.f32 %v2030, 1.442695
        %v2038 = vpow.pop %v2037
        %v2039 = vsel %vm1198, %v2032, 0.0
        %2040 = vadd.xlane.f32.xlu0 %v2039
        %v2041 = vpop.xlane.xlu0 %2040
        %v2042 = vsel %vm1198, %v2034, 0.0
        %2043 = vadd.xlane.f32.xlu0 %v2042
        %v2044 = vpop.xlane.xlu0 %2043
        %v2045 = vsel %vm1198, %v2036, 0.0
        %2046 = vadd.xlane.f32.xlu0 %v2045
        %v2047 = vpop.xlane.xlu0 %2046
        %v2048 = vsel %vm1198, %v2038, 0.0
        %2049 = vadd.xlane.f32.xlu0 %v2048
        %v2050 = vpop.xlane.xlu0 %2049
        %v2051 = vrcp.pop %v2041
        %v2052 = vrcp.pop %v2044
        %v2053 = vrcp.pop %v2047
        %v2054 = vrcp.pop %v2050
        %v2055 = vmul.f32 %v2032, %v2051
        %v2056 = vmul.f32 %v2034, %v2052
        %v2057 = vmul.f32 %v2036, %v2053
        %v2058 = vmul.f32 %v2038, %v2054
        %v2059 = vpack.c.bf16 %v2056, %v2055
        %v2060 = vpack.c.bf16 %v2058, %v2057
        %2061 = vrot.lane.b32.xlu0 %v1196, 32
        %v2062 = vpop.permute.xlu0 %2061
        %2063 = vrot.lane.b32.xlu0 %v1197, 32
        %v2064 = vpop.permute.xlu0 %2063
        %v2068 = vsel %vm1198, %v2059, 0
        %v2071 = vsel %vm1198, %v2060, 0
        %2073 = vmatprep.subr.bf16.mxu0 0
        %2074 = vmatpush1.bf16.msra.mxu0 0
        %2075 = vmatprep.subr.bf16.mxu0 0
        %2076 = vmatpush1.bf16.msra.mxu0 0
        %2077 = vmatprep.subr.bf16.mxu0 0
        %2078 = vmatpush1.bf16.msra.mxu0 0
        %2079 = vmatprep.subr.bf16.mxu0 0
        %2080 = vmatpush1.bf16.msra.mxu0 0
        %2081 = vmatprep.subr.bf16.mxu0 0
        %2082 = vmatpush1.bf16.msra.mxu0 0
        %2083 = vmatprep.subr.bf16.mxu0 0
        %2084 = vmatpush1.bf16.msra.mxu0 0
        %2085 = vmatprep.subr.bf16.mxu0 0
        %2086 = vmatpush1.bf16.msra.mxu0 %v2064
        %2087 = vmatprep.subr.bf16.mxu0 0
        %2088 = vmatpush1.bf16.msra.mxu0 %v2062
        %2089 = vmatprep.subr.bf16.mxu0 0
        %2090 = vmatpush2.bf16.msra.mxu0 0
        %2091 = vmatprep.subr.bf16.mxu0 0
        %2092 = vmatpush2.bf16.msra.mxu0 0
        %2093 = vmatprep.subr.bf16.mxu0 0
        %2094 = vmatpush2.bf16.msra.mxu0 0
        %2095 = vmatprep.subr.bf16.mxu0 0
        %2096 = vmatpush2.bf16.msra.mxu0 0
        %2097 = vmatprep.subr.bf16.mxu0 0
        %2098 = vmatpush2.bf16.msra.mxu0 0
        %2099 = vmatprep.subr.bf16.mxu0 0
        %2100 = vmatpush2.bf16.msra.mxu0 0
        %2101 = vmatprep.subr.bf16.mxu0 0
        %2102 = vmatpush2.bf16.msra.mxu0 0
        %2103 = vmatprep.subr.bf16.mxu0 0
        %2104 = vmatpush2.bf16.msra.mxu0 0
        %2105 = vmatprep.mubr.bf16.mxu0 0
        %2106 = vmatmul.mubr.bf16.gmra.mxu0 %v2068
        %v2107 = vpop.f32.mrf.mxu0
        %v2108 = vadd.f32 0.0, %v2107
        %v2109 = vpop.f32.mrf.mxu0
        %v2110 = vpop.f32.mrf.mxu0
        %v2111 = vadd.f32 0.0, %v2110
        %v2112 = vpop.f32.mrf.mxu0
        %2113 = vmatprep.mubr.bf16.mxu0 0
        %2114 = vmatmul.mubr.bf16.gmra.mxu0 %v2071
        %v2115 = vpop.f32.mrf.mxu0
        %v2116 = vadd.f32 0.0, %v2115
        %v2117 = vpop.f32.mrf.mxu0
        %v2118 = vpop.f32.mrf.mxu0
        %v2119 = vadd.f32 0.0, %v2118
        %v2120 = vpop.f32.mrf.mxu0
        %2121 = vdwg.mxu0
        %v2122 = vpack.c.bf16 %v2111, %v2108
        %v2123 = vpack.c.bf16 %v2119, %v2116
        %v2128 = vunpack.c.l.b16 %v1188
        %v2129 = vunpack.c.l.b16 %v1189
        %v2130 = vunpack.c.l.b16 %v1190
        %v2131 = vunpack.c.l.b16 %v1191
        %v2132 = vpack.c.b16 %v2129, %v2128
        %v2133 = vpack.c.b16 %v2131, %v2130
        %v2137 = vsel %vm1198, %v2122, 0
        %v2140 = vsel %vm1198, %v2123, 0
        %2142 = vmatprep.subr.bf16.mxu0 0
        %2143 = vmatpush1.bf16.msra.mxu0 0
        %2144 = vmatprep.subr.bf16.mxu0 0
        %2145 = vmatpush1.bf16.msra.mxu0 0
        %2146 = vmatprep.subr.bf16.mxu0 0
        %2147 = vmatpush1.bf16.msra.mxu0 0
        %2148 = vmatprep.subr.bf16.mxu0 0
        %2149 = vmatpush1.bf16.msra.mxu0 0
        %2150 = vmatprep.subr.bf16.mxu0 0
        %2151 = vmatpush1.bf16.msra.mxu0 0
        %2152 = vmatprep.subr.bf16.mxu0 0
        %2153 = vmatpush1.bf16.msra.mxu0 0
        %2154 = vmatprep.subr.bf16.mxu0 0
        %2155 = vmatpush1.bf16.msra.mxu0 %v2133
        %2156 = vmatprep.subr.bf16.mxu0 0
        %2157 = vmatpush1.bf16.msra.mxu0 %v2132
        %2158 = vmatprep.subr.bf16.mxu0 0
        %2159 = vmatpush2.bf16.msra.mxu0 0
        %2160 = vmatprep.subr.bf16.mxu0 0
        %2161 = vmatpush2.bf16.msra.mxu0 0
        %2162 = vmatprep.subr.bf16.mxu0 0
        %2163 = vmatpush2.bf16.msra.mxu0 0
        %2164 = vmatprep.subr.bf16.mxu0 0
        %2165 = vmatpush2.bf16.msra.mxu0 0
        %2166 = vmatprep.subr.bf16.mxu0 0
        %2167 = vmatpush2.bf16.msra.mxu0 0
        %2168 = vmatprep.subr.bf16.mxu0 0
        %2169 = vmatpush2.bf16.msra.mxu0 0
        %2170 = vmatprep.subr.bf16.mxu0 0
        %2171 = vmatpush2.bf16.msra.mxu0 0
        %2172 = vmatprep.subr.bf16.mxu0 0
        %2173 = vmatpush2.bf16.msra.mxu0 0
        %2174 = vmatprep.mubr.bf16.mxu0 0
        %2175 = vmatmul.mubr.bf16.gmra.mxu0 %v2137
        %v2176 = vpop.f32.mrf.mxu0
        %v2177 = vadd.f32 0.0, %v2176
        %v2178 = vpop.f32.mrf.mxu0
        %v2179 = vpop.f32.mrf.mxu0
        %v2180 = vadd.f32 0.0, %v2179
        %v2181 = vpop.f32.mrf.mxu0
        %2182 = vmatprep.mubr.bf16.mxu0 0
        %2183 = vmatmul.mubr.bf16.gmra.mxu0 %v2140
        %v2184 = vpop.f32.mrf.mxu0
        %v2185 = vadd.f32 0.0, %v2184
        %v2186 = vpop.f32.mrf.mxu0
        %v2187 = vpop.f32.mrf.mxu0
        %v2188 = vadd.f32 0.0, %v2187
        %v2189 = vpop.f32.mrf.mxu0
        %2190 = vdwg.mxu0
        %v2191 = vadd.f32 %v1938, %v2177
        %v2192 = vadd.f32 %v1939, %v2180
        %v2193 = vadd.f32 %v1940, %v2185
        %v2194 = vadd.f32 %v1941, %v2188
        %v2195 = vadd.f32 %v841, %v2191
        %v2196 = vadd.f32 %v842, %v2192
        %v2197 = vadd.f32 %v843, %v2193
        %v2198 = vadd.f32 %v844, %v2194
        %v2199 = vld [vmem:[%s800] sm:$0x1]
        %v2201 = vlaneseq
        %v2202 = vshrl.u32 %v2201, 7
        %v2203 = vsub.s32 0, %v2202
        %v2204 = vrot.slane %v2199, %v2203
        %v2206 = vadd.f32 %v2195, %v2204
        %v2207 = vadd.f32 %v2196, %v2204
        %v2208 = vadd.f32 %v2197, %v2204
        %v2209 = vadd.f32 %v2198, %v2204
        %v2210 = vld [vmem:[%s816] sm:$0x1]
        %v2211 = vld [vmem:[%s819] sm:$0x1]
        %2212 = vadd.xlane.f32.xlu0 %v2206
        %v2213 = vpop.xlane.xlu0 %2212
        %2214 = vadd.xlane.f32.xlu0 %v2207
        %v2215 = vpop.xlane.xlu0 %2214
        %2216 = vadd.xlane.f32.xlu0 %v2208
        %v2217 = vpop.xlane.xlu0 %2216
        %2218 = vadd.xlane.f32.xlu0 %v2209
        %v2219 = vpop.xlane.xlu0 %2218
        %v2220 = vmul.f32 %v2213, %v855
        %v2221 = vmul.f32 %v2215, %v855
        %v2222 = vmul.f32 %v2217, %v855
        %v2223 = vmul.f32 %v2219, %v855
        %v2224 = vsub.f32 %v2206, %v2220
        %v2225 = vsub.f32 %v2207, %v2221
        %v2226 = vsub.f32 %v2208, %v2222
        %v2227 = vsub.f32 %v2209, %v2223
        %v2228 = vmul.f32 %v2224, %v2224
        %v2229 = vmul.f32 %v2225, %v2225
        %v2230 = vmul.f32 %v2226, %v2226
        %v2231 = vmul.f32 %v2227, %v2227
        %2232 = vadd.xlane.f32.xlu0 %v2228
        %v2233 = vpop.xlane.xlu0 %2232
        %2234 = vadd.xlane.f32.xlu0 %v2229
        %v2235 = vpop.xlane.xlu0 %2234
        %2236 = vadd.xlane.f32.xlu0 %v2230
        %v2237 = vpop.xlane.xlu0 %2236
        %2238 = vadd.xlane.f32.xlu0 %v2231
        %v2239 = vpop.xlane.xlu0 %2238
        %v2240 = vmul.f32 %v2233, %v855
        %v2241 = vmul.f32 %v2235, %v855
        %v2242 = vmul.f32 %v2237, %v855
        %v2243 = vmul.f32 %v2239, %v855
        %v2244 = vadd.f32 %v2240, 1e-05
        %v2245 = vadd.f32 %v2241, 1e-05
        %v2246 = vadd.f32 %v2242, 1e-05
        %v2247 = vadd.f32 %v2243, 1e-05
        %v2248 = vrsqrt.pop %v2244
        %v2249 = vrsqrt.pop %v2245
        %v2250 = vrsqrt.pop %v2246
        %v2251 = vrsqrt.pop %v2247
        %v2252 = vmul.f32 %v2224, %v2248
        %v2253 = vmul.f32 %v2225, %v2249
        %v2254 = vmul.f32 %v2226, %v2250
        %v2255 = vmul.f32 %v2227, %v2251
        %v2257 = vlaneseq
        %v2258 = vshrl.u32 %v2257, 7
        %v2259 = vsub.s32 0, %v2258
        %v2260 = vrot.slane %v2210, %v2259
        %v2262 = vmul.f32 %v2252, %v2260
        %v2263 = vmul.f32 %v2253, %v2260
        %v2264 = vmul.f32 %v2254, %v2260
        %v2265 = vmul.f32 %v2255, %v2260
        %v2267 = vlaneseq
        %v2268 = vshrl.u32 %v2267, 7
        %v2269 = vsub.s32 0, %v2268
        %v2270 = vrot.slane %v2211, %v2269
        %v2272 = vadd.f32 %v2262, %v2270
        %v2273 = vadd.f32 %v2263, %v2270
        %v2274 = vadd.f32 %v2264, %v2270
        %v2275 = vadd.f32 %v2265, %v2270
        %v2276 = vpack.c.bf16 %v2273, %v2272
        %v2277 = vpack.c.bf16 %v2275, %v2274
        %v2278 = vld [vmem:[%s695] sm:$0xff]
        %v2279 = vld [vmem:[%s695 + $0x8] sm:$0xff]
        %v2280 = vld [vmem:[%s695 + $0x10] sm:$0xff]
        %v2281 = vld [vmem:[%s695 + $0x18] sm:$0xff]
        %v2282 = vld [vmem:[%s695 + $0x20] sm:$0xff]
        %v2283 = vld [vmem:[%s695 + $0x28] sm:$0xff]
        %v2284 = vld [vmem:[%s695 + $0x30] sm:$0xff]
        %v2285 = vld [vmem:[%s695 + $0x38] sm:$0xff]
        %v2286 = vld [vmem:[%s695 + $0x40] sm:$0xff]
        %v2287 = vld [vmem:[%s695 + $0x48] sm:$0xff]
        %v2288 = vld [vmem:[%s695 + $0x50] sm:$0xff]
        %v2289 = vld [vmem:[%s695 + $0x58] sm:$0xff]
        %v2290 = vld [vmem:[%s695 + $0x60] sm:$0xff]
        %v2291 = vld [vmem:[%s695 + $0x68] sm:$0xff]
        %v2292 = vld [vmem:[%s695 + $0x70] sm:$0xff]
        %v2293 = vld [vmem:[%s695 + $0x78] sm:$0xff]
        %v2294 = vld [vmem:[%s695 + $0x80] sm:$0xff]
        %v2295 = vld [vmem:[%s695 + $0x88] sm:$0xff]
        %v2296 = vld [vmem:[%s695 + $0x90] sm:$0xff]
        %v2297 = vld [vmem:[%s695 + $0x98] sm:$0xff]
        %v2298 = vld [vmem:[%s695 + $0xa0] sm:$0xff]
        %v2299 = vld [vmem:[%s695 + $0xa8] sm:$0xff]
        %v2300 = vld [vmem:[%s695 + $0xb0] sm:$0xff]
        %v2301 = vld [vmem:[%s695 + $0xb8] sm:$0xff]
        %v2302 = vld [vmem:[%s695 + $0xc0] sm:$0xff]
        %v2303 = vld [vmem:[%s695 + $0xc8] sm:$0xff]
        %v2304 = vld [vmem:[%s695 + $0xd0] sm:$0xff]
        %v2305 = vld [vmem:[%s695 + $0xd8] sm:$0xff]
        %v2306 = vld [vmem:[%s695 + $0xe0] sm:$0xff]
        %v2307 = vld [vmem:[%s695 + $0xe8] sm:$0xff]
        %v2308 = vld [vmem:[%s695 + $0xf0] sm:$0xff]
        %v2309 = vld [vmem:[%s695 + $0xf8] sm:$0xff]
        %v2310 = vld [vmem:[%s804] sm:$0xf]
        %v2312 = vlaneseq
        %v2313 = vshrl.u32 %v2312, 7
        %v2314 = vsub.s32 0, %v2313
        %v2315 = vrot.slane %v2310, %v2314
        %v2316 = vlaneseq
        %v2317 = vshrl.u32 %v2316, 7
        %v2318 = vsub.s32 1, %v2317
        %v2319 = vrot.slane %v2310, %v2318
        %v2320 = vlaneseq
        %v2321 = vshrl.u32 %v2320, 7
        %v2322 = vsub.s32 2, %v2321
        %v2323 = vrot.slane %v2310, %v2322
        %v2324 = vlaneseq
        %v2325 = vshrl.u32 %v2324, 7
        %v2326 = vsub.s32 3, %v2325
        %v2327 = vrot.slane %v2310, %v2326
        %v2364 = vunpack.c.l.b16 %v2278
        %v2365 = vunpack.c.h.b16 %v2278
        %v2366 = vunpack.c.l.b16 %v2279
        %v2367 = vunpack.c.h.b16 %v2279
        %v2368 = vunpack.c.l.b16 %v2280
        %v2369 = vunpack.c.h.b16 %v2280
        %v2370 = vunpack.c.l.b16 %v2281
        %v2371 = vunpack.c.h.b16 %v2281
        %v2372 = vunpack.c.l.b16 %v2282
        %v2373 = vunpack.c.h.b16 %v2282
        %v2374 = vunpack.c.l.b16 %v2283
        %v2375 = vunpack.c.h.b16 %v2283
        %v2376 = vunpack.c.l.b16 %v2284
        %v2377 = vunpack.c.h.b16 %v2284
        %v2378 = vunpack.c.l.b16 %v2285
        %v2379 = vunpack.c.h.b16 %v2285
        %v2380 = vunpack.c.l.b16 %v2286
        %v2381 = vunpack.c.h.b16 %v2286
        %v2382 = vunpack.c.l.b16 %v2287
        %v2383 = vunpack.c.h.b16 %v2287
        %v2384 = vunpack.c.l.b16 %v2288
        %v2385 = vunpack.c.h.b16 %v2288
        %v2386 = vunpack.c.l.b16 %v2289
        %v2387 = vunpack.c.h.b16 %v2289
        %v2388 = vunpack.c.l.b16 %v2290
        %v2389 = vunpack.c.h.b16 %v2290
        %v2390 = vunpack.c.l.b16 %v2291
        %v2391 = vunpack.c.h.b16 %v2291
        %v2392 = vunpack.c.l.b16 %v2292
        %v2393 = vunpack.c.h.b16 %v2292
        %v2394 = vunpack.c.l.b16 %v2293
        %v2395 = vunpack.c.h.b16 %v2293
        %v2396 = vunpack.c.l.b16 %v2294
        %v2397 = vunpack.c.h.b16 %v2294
        %v2398 = vunpack.c.l.b16 %v2295
        %v2399 = vunpack.c.h.b16 %v2295
        %v2400 = vunpack.c.l.b16 %v2296
        %v2401 = vunpack.c.h.b16 %v2296
        %v2402 = vunpack.c.l.b16 %v2297
        %v2403 = vunpack.c.h.b16 %v2297
        %v2404 = vunpack.c.l.b16 %v2298
        %v2405 = vunpack.c.h.b16 %v2298
        %v2406 = vunpack.c.l.b16 %v2299
        %v2407 = vunpack.c.h.b16 %v2299
        %v2408 = vunpack.c.l.b16 %v2300
        %v2409 = vunpack.c.h.b16 %v2300
        %v2410 = vunpack.c.l.b16 %v2301
        %v2411 = vunpack.c.h.b16 %v2301
        %v2412 = vunpack.c.l.b16 %v2302
        %v2413 = vunpack.c.h.b16 %v2302
        %v2414 = vunpack.c.l.b16 %v2303
        %v2415 = vunpack.c.h.b16 %v2303
        %v2416 = vunpack.c.l.b16 %v2304
        %v2417 = vunpack.c.h.b16 %v2304
        %v2418 = vunpack.c.l.b16 %v2305
        %v2419 = vunpack.c.h.b16 %v2305
        %v2420 = vunpack.c.l.b16 %v2306
        %v2421 = vunpack.c.h.b16 %v2306
        %v2422 = vunpack.c.l.b16 %v2307
        %v2423 = vunpack.c.h.b16 %v2307
        %v2424 = vunpack.c.l.b16 %v2308
        %v2425 = vunpack.c.h.b16 %v2308
        %v2426 = vunpack.c.l.b16 %v2309
        %v2427 = vunpack.c.h.b16 %v2309
        %v2428 = vpack.c.b16 %v2368, %v2364
        %v2429 = vpack.c.b16 %v2369, %v2365
        %v2430 = vpack.c.b16 %v2370, %v2366
        %v2431 = vpack.c.b16 %v2371, %v2367
        %v2432 = vpack.c.b16 %v2376, %v2372
        %v2433 = vpack.c.b16 %v2377, %v2373
        %v2434 = vpack.c.b16 %v2378, %v2374
        %v2435 = vpack.c.b16 %v2379, %v2375
        %v2436 = vpack.c.b16 %v2384, %v2380
        %v2437 = vpack.c.b16 %v2385, %v2381
        %v2438 = vpack.c.b16 %v2386, %v2382
        %v2439 = vpack.c.b16 %v2387, %v2383
        %v2440 = vpack.c.b16 %v2392, %v2388
        %v2441 = vpack.c.b16 %v2393, %v2389
        %v2442 = vpack.c.b16 %v2394, %v2390
        %v2443 = vpack.c.b16 %v2395, %v2391
        %v2444 = vpack.c.b16 %v2400, %v2396
        %v2445 = vpack.c.b16 %v2401, %v2397
        %v2446 = vpack.c.b16 %v2402, %v2398
        %v2447 = vpack.c.b16 %v2403, %v2399
        %v2448 = vpack.c.b16 %v2408, %v2404
        %v2449 = vpack.c.b16 %v2409, %v2405
        %v2450 = vpack.c.b16 %v2410, %v2406
        %v2451 = vpack.c.b16 %v2411, %v2407
        %v2452 = vpack.c.b16 %v2416, %v2412
        %v2453 = vpack.c.b16 %v2417, %v2413
        %v2454 = vpack.c.b16 %v2418, %v2414
        %v2455 = vpack.c.b16 %v2419, %v2415
        %v2456 = vpack.c.b16 %v2424, %v2420
        %v2457 = vpack.c.b16 %v2425, %v2421
        %v2458 = vpack.c.b16 %v2426, %v2422
        %v2459 = vpack.c.b16 %v2427, %v2423
        %2492 = vmatprep.subr.bf16.mxu0 %v2457
        %2493 = vmatpush1.bf16.msra.mxu0 %v2456
        %2494 = vmatprep.subr.bf16.mxu0 %v2453
        %2495 = vmatpush1.bf16.msra.mxu0 %v2452
        %2496 = vmatprep.subr.bf16.mxu0 %v2449
        %2497 = vmatpush1.bf16.msra.mxu0 %v2448
        %2498 = vmatprep.subr.bf16.mxu0 %v2445
        %2499 = vmatpush1.bf16.msra.mxu0 %v2444
        %2500 = vmatprep.subr.bf16.mxu0 %v2441
        %2501 = vmatpush1.bf16.msra.mxu0 %v2440
        %2502 = vmatprep.subr.bf16.mxu0 %v2437
        %2503 = vmatpush1.bf16.msra.mxu0 %v2436
        %2504 = vmatprep.subr.bf16.mxu0 %v2433
        %2505 = vmatpush1.bf16.msra.mxu0 %v2432
        %2506 = vmatprep.subr.bf16.mxu0 %v2429
        %2507 = vmatpush1.bf16.msra.mxu0 %v2428
        %2508 = vmatprep.subr.bf16.mxu0 0
        %2509 = vmatpush2.bf16.msra.mxu0 0
        %2510 = vmatprep.subr.bf16.mxu0 0
        %2511 = vmatpush2.bf16.msra.mxu0 0
        %2512 = vmatprep.subr.bf16.mxu0 0
        %2513 = vmatpush2.bf16.msra.mxu0 0
        %2514 = vmatprep.subr.bf16.mxu0 0
        %2515 = vmatpush2.bf16.msra.mxu0 0
        %2516 = vmatprep.subr.bf16.mxu0 0
        %2517 = vmatpush2.bf16.msra.mxu0 0
        %2518 = vmatprep.subr.bf16.mxu0 0
        %2519 = vmatpush2.bf16.msra.mxu0 0
        %2520 = vmatprep.subr.bf16.mxu0 0
        %2521 = vmatpush2.bf16.msra.mxu0 0
        %2522 = vmatprep.subr.bf16.mxu0 0
        %2523 = vmatpush2.bf16.msra.mxu0 0
        %2524 = vmatprep.mubr.bf16.mxu0 0
        %2525 = vmatmul.mubr.bf16.gmra.mxu0 %v2276
        %v2526 = vpop.f32.mrf.mxu0
        %v2527 = vadd.f32 %v2315, %v2526
        %v2528 = vpop.f32.mrf.mxu0
        %v2529 = vadd.f32 %v2319, %v2528
        %v2530 = vpop.f32.mrf.mxu0
        %v2531 = vadd.f32 %v2315, %v2530
        %v2532 = vpop.f32.mrf.mxu0
        %v2533 = vadd.f32 %v2319, %v2532
        %2534 = vmatprep.mubr.bf16.mxu0 0
        %2535 = vmatmul.mubr.bf16.gmra.mxu0 %v2277
        %v2536 = vpop.f32.mrf.mxu0
        %v2537 = vadd.f32 %v2315, %v2536
        %v2538 = vpop.f32.mrf.mxu0
        %v2539 = vadd.f32 %v2319, %v2538
        %v2540 = vpop.f32.mrf.mxu0
        %v2541 = vadd.f32 %v2315, %v2540
        %v2542 = vpop.f32.mrf.mxu0
        %v2543 = vadd.f32 %v2319, %v2542
        %2544 = vdwg.mxu0
        %2545 = vmatprep.subr.bf16.mxu0 %v2459
        %2546 = vmatpush1.bf16.msra.mxu0 %v2458
        %2547 = vmatprep.subr.bf16.mxu0 %v2455
        %2548 = vmatpush1.bf16.msra.mxu0 %v2454
        %2549 = vmatprep.subr.bf16.mxu0 %v2451
        %2550 = vmatpush1.bf16.msra.mxu0 %v2450
        %2551 = vmatprep.subr.bf16.mxu0 %v2447
        %2552 = vmatpush1.bf16.msra.mxu0 %v2446
        %2553 = vmatprep.subr.bf16.mxu0 %v2443
        %2554 = vmatpush1.bf16.msra.mxu0 %v2442
        %2555 = vmatprep.subr.bf16.mxu0 %v2439
        %2556 = vmatpush1.bf16.msra.mxu0 %v2438
        %2557 = vmatprep.subr.bf16.mxu0 %v2435
        %2558 = vmatpush1.bf16.msra.mxu0 %v2434
        %2559 = vmatprep.subr.bf16.mxu0 %v2431
        %2560 = vmatpush1.bf16.msra.mxu0 %v2430
        %2561 = vmatprep.subr.bf16.mxu0 0
        %2562 = vmatpush2.bf16.msra.mxu0 0
        %2563 = vmatprep.subr.bf16.mxu0 0
        %2564 = vmatpush2.bf16.msra.mxu0 0
        %2565 = vmatprep.subr.bf16.mxu0 0
        %2566 = vmatpush2.bf16.msra.mxu0 0
        %2567 = vmatprep.subr.bf16.mxu0 0
        %2568 = vmatpush2.bf16.msra.mxu0 0
        %2569 = vmatprep.subr.bf16.mxu0 0
        %2570 = vmatpush2.bf16.msra.mxu0 0
        %2571 = vmatprep.subr.bf16.mxu0 0
        %2572 = vmatpush2.bf16.msra.mxu0 0
        %2573 = vmatprep.subr.bf16.mxu0 0
        %2574 = vmatpush2.bf16.msra.mxu0 0
        %2575 = vmatprep.subr.bf16.mxu0 0
        %2576 = vmatpush2.bf16.msra.mxu0 0
        %2577 = vmatprep.mubr.bf16.mxu0 0
        %2578 = vmatmul.mubr.bf16.gmra.mxu0 %v2276
        %v2579 = vpop.f32.mrf.mxu0
        %v2580 = vadd.f32 %v2323, %v2579
        %v2581 = vpop.f32.mrf.mxu0
        %v2582 = vadd.f32 %v2327, %v2581
        %v2583 = vpop.f32.mrf.mxu0
        %v2584 = vadd.f32 %v2323, %v2583
        %v2585 = vpop.f32.mrf.mxu0
        %v2586 = vadd.f32 %v2327, %v2585
        %2587 = vmatprep.mubr.bf16.mxu0 0
        %2588 = vmatmul.mubr.bf16.gmra.mxu0 %v2277
        %v2589 = vpop.f32.mrf.mxu0
        %v2590 = vadd.f32 %v2323, %v2589
        %v2591 = vpop.f32.mrf.mxu0
        %v2592 = vadd.f32 %v2327, %v2591
        %v2593 = vpop.f32.mrf.mxu0
        %v2594 = vadd.f32 %v2323, %v2593
        %v2595 = vpop.f32.mrf.mxu0
        %v2596 = vadd.f32 %v2327, %v2595
        %2597 = vdwg.mxu0
        %v2598 = vmul.f32 %v2527, 0.5
        %v2599 = vmul.f32 %v2529, 0.5
        %v2600 = vmul.f32 %v2580, 0.5
        %v2601 = vmul.f32 %v2582, 0.5
        %v2602 = vmul.f32 %v2531, 0.5
        %v2603 = vmul.f32 %v2533, 0.5
        %v2604 = vmul.f32 %v2584, 0.5
        %v2605 = vmul.f32 %v2586, 0.5
        %v2606 = vmul.f32 %v2537, 0.5
        %v2607 = vmul.f32 %v2539, 0.5
        %v2608 = vmul.f32 %v2590, 0.5
        %v2609 = vmul.f32 %v2592, 0.5
        %v2610 = vmul.f32 %v2541, 0.5
        %v2611 = vmul.f32 %v2543, 0.5
        %v2612 = vmul.f32 %v2594, 0.5
        %v2613 = vmul.f32 %v2596, 0.5
        %v2614 = vmul.f32 %v2527, 0.70710677
        %v2615 = vmul.f32 %v2529, 0.70710677
        %v2616 = vmul.f32 %v2580, 0.70710677
        %v2617 = vmul.f32 %v2582, 0.70710677
        %v2618 = vmul.f32 %v2531, 0.70710677
        %v2619 = vmul.f32 %v2533, 0.70710677
        %v2620 = vmul.f32 %v2584, 0.70710677
        %v2621 = vmul.f32 %v2586, 0.70710677
        %v2622 = vmul.f32 %v2537, 0.70710677
        %v2623 = vmul.f32 %v2539, 0.70710677
        %v2624 = vmul.f32 %v2590, 0.70710677
        %v2625 = vmul.f32 %v2592, 0.70710677
        %v2626 = vmul.f32 %v2541, 0.70710677
        %v2627 = vmul.f32 %v2543, 0.70710677
        %v2628 = vmul.f32 %v2594, 0.70710677
        %v2629 = vmul.f32 %v2596, 0.70710677
        %v2630 = verf.f32.pop %v2614
        %v2631 = verf.f32.pop %v2615
        %v2632 = verf.f32.pop %v2616
        %v2633 = verf.f32.pop %v2617
        %v2634 = verf.f32.pop %v2618
        %v2635 = verf.f32.pop %v2619
        %v2636 = verf.f32.pop %v2620
        %v2637 = verf.f32.pop %v2621
        %v2638 = verf.f32.pop %v2622
        %v2639 = verf.f32.pop %v2623
        %v2640 = verf.f32.pop %v2624
        %v2641 = verf.f32.pop %v2625
        %v2642 = verf.f32.pop %v2626
        %v2643 = verf.f32.pop %v2627
        %v2644 = verf.f32.pop %v2628
        %v2645 = verf.f32.pop %v2629
        %v2646 = vadd.f32 %v2630, 1.0
        %v2647 = vadd.f32 %v2631, 1.0
        %v2648 = vadd.f32 %v2632, 1.0
        %v2649 = vadd.f32 %v2633, 1.0
        %v2650 = vadd.f32 %v2634, 1.0
        %v2651 = vadd.f32 %v2635, 1.0
        %v2652 = vadd.f32 %v2636, 1.0
        %v2653 = vadd.f32 %v2637, 1.0
        %v2654 = vadd.f32 %v2638, 1.0
        %v2655 = vadd.f32 %v2639, 1.0
        %v2656 = vadd.f32 %v2640, 1.0
        %v2657 = vadd.f32 %v2641, 1.0
        %v2658 = vadd.f32 %v2642, 1.0
        %v2659 = vadd.f32 %v2643, 1.0
        %v2660 = vadd.f32 %v2644, 1.0
        %v2661 = vadd.f32 %v2645, 1.0
        %v2662 = vmul.f32 %v2598, %v2646
        %v2663 = vmul.f32 %v2599, %v2647
        %v2664 = vmul.f32 %v2600, %v2648
        %v2665 = vmul.f32 %v2601, %v2649
        %v2666 = vmul.f32 %v2602, %v2650
        %v2667 = vmul.f32 %v2603, %v2651
        %v2668 = vmul.f32 %v2604, %v2652
        %v2669 = vmul.f32 %v2605, %v2653
        %v2670 = vmul.f32 %v2606, %v2654
        %v2671 = vmul.f32 %v2607, %v2655
        %v2672 = vmul.f32 %v2608, %v2656
        %v2673 = vmul.f32 %v2609, %v2657
        %v2674 = vmul.f32 %v2610, %v2658
        %v2675 = vmul.f32 %v2611, %v2659
        %v2676 = vmul.f32 %v2612, %v2660
        %v2677 = vmul.f32 %v2613, %v2661
        %v2678 = vpack.c.bf16 %v2666, %v2662
        %v2679 = vpack.c.bf16 %v2667, %v2663
        %v2680 = vpack.c.bf16 %v2668, %v2664
        %v2681 = vpack.c.bf16 %v2669, %v2665
        %v2682 = vpack.c.bf16 %v2674, %v2670
        %v2683 = vpack.c.bf16 %v2675, %v2671
        %v2684 = vpack.c.bf16 %v2676, %v2672
        %v2685 = vpack.c.bf16 %v2677, %v2673
        %v2686 = vld [vmem:[%s704] sm:$0xf]
        %v2687 = vld [vmem:[%s704 + $0x4] sm:$0xf]
        %v2688 = vld [vmem:[%s704 + $0x8] sm:$0xf]
        %v2689 = vld [vmem:[%s704 + $0xc] sm:$0xf]
        %v2690 = vld [vmem:[%s704 + $0x10] sm:$0xf]
        %v2691 = vld [vmem:[%s704 + $0x14] sm:$0xf]
        %v2692 = vld [vmem:[%s704 + $0x18] sm:$0xf]
        %v2693 = vld [vmem:[%s704 + $0x1c] sm:$0xf]
        %v2694 = vld [vmem:[%s704 + $0x20] sm:$0xf]
        %v2695 = vld [vmem:[%s704 + $0x24] sm:$0xf]
        %v2696 = vld [vmem:[%s704 + $0x28] sm:$0xf]
        %v2697 = vld [vmem:[%s704 + $0x2c] sm:$0xf]
        %v2698 = vld [vmem:[%s704 + $0x30] sm:$0xf]
        %v2699 = vld [vmem:[%s704 + $0x34] sm:$0xf]
        %v2700 = vld [vmem:[%s704 + $0x38] sm:$0xf]
        %v2701 = vld [vmem:[%s704 + $0x3c] sm:$0xf]
        %v2702 = vld [vmem:[%s704 + $0x40] sm:$0xf]
        %v2703 = vld [vmem:[%s704 + $0x44] sm:$0xf]
        %v2704 = vld [vmem:[%s704 + $0x48] sm:$0xf]
        %v2705 = vld [vmem:[%s704 + $0x4c] sm:$0xf]
        %v2706 = vld [vmem:[%s704 + $0x50] sm:$0xf]
        %v2707 = vld [vmem:[%s704 + $0x54] sm:$0xf]
        %v2708 = vld [vmem:[%s704 + $0x58] sm:$0xf]
        %v2709 = vld [vmem:[%s704 + $0x5c] sm:$0xf]
        %v2710 = vld [vmem:[%s704 + $0x60] sm:$0xf]
        %v2711 = vld [vmem:[%s704 + $0x64] sm:$0xf]
        %v2712 = vld [vmem:[%s704 + $0x68] sm:$0xf]
        %v2713 = vld [vmem:[%s704 + $0x6c] sm:$0xf]
        %v2714 = vld [vmem:[%s704 + $0x70] sm:$0xf]
        %v2715 = vld [vmem:[%s704 + $0x74] sm:$0xf]
        %v2716 = vld [vmem:[%s704 + $0x78] sm:$0xf]
        %v2717 = vld [vmem:[%s704 + $0x7c] sm:$0xf]
        %v2718 = vld [vmem:[%s704 + $0x80] sm:$0xf]
        %v2719 = vld [vmem:[%s704 + $0x84] sm:$0xf]
        %v2720 = vld [vmem:[%s704 + $0x88] sm:$0xf]
        %v2721 = vld [vmem:[%s704 + $0x8c] sm:$0xf]
        %v2722 = vld [vmem:[%s704 + $0x90] sm:$0xf]
        %v2723 = vld [vmem:[%s704 + $0x94] sm:$0xf]
        %v2724 = vld [vmem:[%s704 + $0x98] sm:$0xf]
        %v2725 = vld [vmem:[%s704 + $0x9c] sm:$0xf]
        %v2726 = vld [vmem:[%s704 + $0xa0] sm:$0xf]
        %v2727 = vld [vmem:[%s704 + $0xa4] sm:$0xf]
        %v2728 = vld [vmem:[%s704 + $0xa8] sm:$0xf]
        %v2729 = vld [vmem:[%s704 + $0xac] sm:$0xf]
        %v2730 = vld [vmem:[%s704 + $0xb0] sm:$0xf]
        %v2731 = vld [vmem:[%s704 + $0xb4] sm:$0xf]
        %v2732 = vld [vmem:[%s704 + $0xb8] sm:$0xf]
        %v2733 = vld [vmem:[%s704 + $0xbc] sm:$0xf]
        %v2734 = vld [vmem:[%s704 + $0xc0] sm:$0xf]
        %v2735 = vld [vmem:[%s704 + $0xc4] sm:$0xf]
        %v2736 = vld [vmem:[%s704 + $0xc8] sm:$0xf]
        %v2737 = vld [vmem:[%s704 + $0xcc] sm:$0xf]
        %v2738 = vld [vmem:[%s704 + $0xd0] sm:$0xf]
        %v2739 = vld [vmem:[%s704 + $0xd4] sm:$0xf]
        %v2740 = vld [vmem:[%s704 + $0xd8] sm:$0xf]
        %v2741 = vld [vmem:[%s704 + $0xdc] sm:$0xf]
        %v2742 = vld [vmem:[%s704 + $0xe0] sm:$0xf]
        %v2743 = vld [vmem:[%s704 + $0xe4] sm:$0xf]
        %v2744 = vld [vmem:[%s704 + $0xe8] sm:$0xf]
        %v2745 = vld [vmem:[%s704 + $0xec] sm:$0xf]
        %v2746 = vld [vmem:[%s704 + $0xf0] sm:$0xf]
        %v2747 = vld [vmem:[%s704 + $0xf4] sm:$0xf]
        %v2748 = vld [vmem:[%s704 + $0xf8] sm:$0xf]
        %v2749 = vld [vmem:[%s704 + $0xfc] sm:$0xf]
        %v2750 = vld [vmem:[%s807] sm:$0x1]
        %v2752 = vlaneseq
        %v2753 = vshrl.u32 %v2752, 7
        %v2754 = vsub.s32 0, %v2753
        %v2755 = vrot.slane %v2750, %v2754
        %v2821 = vunpack.c.l.b16 %v2686
        %v2822 = vunpack.c.l.b16 %v2687
        %v2823 = vunpack.c.l.b16 %v2688
        %v2824 = vunpack.c.l.b16 %v2689
        %v2825 = vunpack.c.l.b16 %v2690
        %v2826 = vunpack.c.l.b16 %v2691
        %v2827 = vunpack.c.l.b16 %v2692
        %v2828 = vunpack.c.l.b16 %v2693
        %v2829 = vunpack.c.l.b16 %v2694
        %v2830 = vunpack.c.l.b16 %v2695
        %v2831 = vunpack.c.l.b16 %v2696
        %v2832 = vunpack.c.l.b16 %v2697
        %v2833 = vunpack.c.l.b16 %v2698
        %v2834 = vunpack.c.l.b16 %v2699
        %v2835 = vunpack.c.l.b16 %v2700
        %v2836 = vunpack.c.l.b16 %v2701
        %v2837 = vunpack.c.l.b16 %v2702
        %v2838 = vunpack.c.l.b16 %v2703
        %v2839 = vunpack.c.l.b16 %v2704
        %v2840 = vunpack.c.l.b16 %v2705
        %v2841 = vunpack.c.l.b16 %v2706
        %v2842 = vunpack.c.l.b16 %v2707
        %v2843 = vunpack.c.l.b16 %v2708
        %v2844 = vunpack.c.l.b16 %v2709
        %v2845 = vunpack.c.l.b16 %v2710
        %v2846 = vunpack.c.l.b16 %v2711
        %v2847 = vunpack.c.l.b16 %v2712
        %v2848 = vunpack.c.l.b16 %v2713
        %v2849 = vunpack.c.l.b16 %v2714
        %v2850 = vunpack.c.l.b16 %v2715
        %v2851 = vunpack.c.l.b16 %v2716
        %v2852 = vunpack.c.l.b16 %v2717
        %v2853 = vunpack.c.l.b16 %v2718
        %v2854 = vunpack.c.l.b16 %v2719
        %v2855 = vunpack.c.l.b16 %v2720
        %v2856 = vunpack.c.l.b16 %v2721
        %v2857 = vunpack.c.l.b16 %v2722
        %v2858 = vunpack.c.l.b16 %v2723
        %v2859 = vunpack.c.l.b16 %v2724
        %v2860 = vunpack.c.l.b16 %v2725
        %v2861 = vunpack.c.l.b16 %v2726
        %v2862 = vunpack.c.l.b16 %v2727
        %v2863 = vunpack.c.l.b16 %v2728
        %v2864 = vunpack.c.l.b16 %v2729
        %v2865 = vunpack.c.l.b16 %v2730
        %v2866 = vunpack.c.l.b16 %v2731
        %v2867 = vunpack.c.l.b16 %v2732
        %v2868 = vunpack.c.l.b16 %v2733
        %v2869 = vunpack.c.l.b16 %v2734
        %v2870 = vunpack.c.l.b16 %v2735
        %v2871 = vunpack.c.l.b16 %v2736
        %v2872 = vunpack.c.l.b16 %v2737
        %v2873 = vunpack.c.l.b16 %v2738
        %v2874 = vunpack.c.l.b16 %v2739
        %v2875 = vunpack.c.l.b16 %v2740
        %v2876 = vunpack.c.l.b16 %v2741
        %v2877 = vunpack.c.l.b16 %v2742
        %v2878 = vunpack.c.l.b16 %v2743
        %v2879 = vunpack.c.l.b16 %v2744
        %v2880 = vunpack.c.l.b16 %v2745
        %v2881 = vunpack.c.l.b16 %v2746
        %v2882 = vunpack.c.l.b16 %v2747
        %v2883 = vunpack.c.l.b16 %v2748
        %v2884 = vunpack.c.l.b16 %v2749
        %v2885 = vpack.c.b16 %v2822, %v2821
        %v2886 = vpack.c.b16 %v2824, %v2823
        %v2887 = vpack.c.b16 %v2826, %v2825
        %v2888 = vpack.c.b16 %v2828, %v2827
        %v2889 = vpack.c.b16 %v2830, %v2829
        %v2890 = vpack.c.b16 %v2832, %v2831
        %v2891 = vpack.c.b16 %v2834, %v2833
        %v2892 = vpack.c.b16 %v2836, %v2835
        %v2893 = vpack.c.b16 %v2838, %v2837
        %v2894 = vpack.c.b16 %v2840, %v2839
        %v2895 = vpack.c.b16 %v2842, %v2841
        %v2896 = vpack.c.b16 %v2844, %v2843
        %v2897 = vpack.c.b16 %v2846, %v2845
        %v2898 = vpack.c.b16 %v2848, %v2847
        %v2899 = vpack.c.b16 %v2850, %v2849
        %v2900 = vpack.c.b16 %v2852, %v2851
        %v2901 = vpack.c.b16 %v2854, %v2853
        %v2902 = vpack.c.b16 %v2856, %v2855
        %v2903 = vpack.c.b16 %v2858, %v2857
        %v2904 = vpack.c.b16 %v2860, %v2859
        %v2905 = vpack.c.b16 %v2862, %v2861
        %v2906 = vpack.c.b16 %v2864, %v2863
        %v2907 = vpack.c.b16 %v2866, %v2865
        %v2908 = vpack.c.b16 %v2868, %v2867
        %v2909 = vpack.c.b16 %v2870, %v2869
        %v2910 = vpack.c.b16 %v2872, %v2871
        %v2911 = vpack.c.b16 %v2874, %v2873
        %v2912 = vpack.c.b16 %v2876, %v2875
        %v2913 = vpack.c.b16 %v2878, %v2877
        %v2914 = vpack.c.b16 %v2880, %v2879
        %v2915 = vpack.c.b16 %v2882, %v2881
        %v2916 = vpack.c.b16 %v2884, %v2883
        %2949 = vmatprep.subr.bf16.mxu0 0
        %2950 = vmatpush1.bf16.msra.mxu0 %v2892
        %2951 = vmatprep.subr.bf16.mxu0 0
        %2952 = vmatpush1.bf16.msra.mxu0 %v2891
        %2953 = vmatprep.subr.bf16.mxu0 0
        %2954 = vmatpush1.bf16.msra.mxu0 %v2890
        %2955 = vmatprep.subr.bf16.mxu0 0
        %2956 = vmatpush1.bf16.msra.mxu0 %v2889
        %2957 = vmatprep.subr.bf16.mxu0 0
        %2958 = vmatpush1.bf16.msra.mxu0 %v2888
        %2959 = vmatprep.subr.bf16.mxu0 0
        %2960 = vmatpush1.bf16.msra.mxu0 %v2887
        %2961 = vmatprep.subr.bf16.mxu0 0
        %2962 = vmatpush1.bf16.msra.mxu0 %v2886
        %2963 = vmatprep.subr.bf16.mxu0 0
        %2964 = vmatpush1.bf16.msra.mxu0 %v2885
        %2965 = vmatprep.subr.bf16.mxu0 0
        %2966 = vmatpush2.bf16.msra.mxu0 %v2900
        %2967 = vmatprep.subr.bf16.mxu0 0
        %2968 = vmatpush2.bf16.msra.mxu0 %v2899
        %2969 = vmatprep.subr.bf16.mxu0 0
        %2970 = vmatpush2.bf16.msra.mxu0 %v2898
        %2971 = vmatprep.subr.bf16.mxu0 0
        %2972 = vmatpush2.bf16.msra.mxu0 %v2897
        %2973 = vmatprep.subr.bf16.mxu0 0
        %2974 = vmatpush2.bf16.msra.mxu0 %v2896
        %2975 = vmatprep.subr.bf16.mxu0 0
        %2976 = vmatpush2.bf16.msra.mxu0 %v2895
        %2977 = vmatprep.subr.bf16.mxu0 0
        %2978 = vmatpush2.bf16.msra.mxu0 %v2894
        %2979 = vmatprep.subr.bf16.mxu0 0
        %2980 = vmatpush2.bf16.msra.mxu0 %v2893
        %2981 = vmatprep.mubr.bf16.mxu0 %v2679
        %2982 = vmatmul.mubr.bf16.gmra.mxu0 %v2678
        %v2983 = vpop.f32.mrf.mxu0
        %v2984 = vadd.f32 %v2755, %v2983
        %v2985 = vpop.f32.mrf.mxu0
        %v2986 = vpop.f32.mrf.mxu0
        %v2987 = vadd.f32 %v2755, %v2986
        %v2988 = vpop.f32.mrf.mxu0
        %2989 = vmatprep.mubr.bf16.mxu0 %v2683
        %2990 = vmatmul.mubr.bf16.gmra.mxu0 %v2682
        %v2991 = vpop.f32.mrf.mxu0
        %v2992 = vadd.f32 %v2755, %v2991
        %v2993 = vpop.f32.mrf.mxu0
        %v2994 = vpop.f32.mrf.mxu0
        %v2995 = vadd.f32 %v2755, %v2994
        %v2996 = vpop.f32.mrf.mxu0
        %2997 = vdwg.mxu0
        %2998 = vmatprep.subr.bf16.mxu0 0
        %2999 = vmatpush1.bf16.msra.mxu0 %v2908
        %3000 = vmatprep.subr.bf16.mxu0 0
        %3001 = vmatpush1.bf16.msra.mxu0 %v2907
        %3002 = vmatprep.subr.bf16.mxu0 0
        %3003 = vmatpush1.bf16.msra.mxu0 %v2906
        %3004 = vmatprep.subr.bf16.mxu0 0
        %3005 = vmatpush1.bf16.msra.mxu0 %v2905
        %3006 = vmatprep.subr.bf16.mxu0 0
        %3007 = vmatpush1.bf16.msra.mxu0 %v2904
        %3008 = vmatprep.subr.bf16.mxu0 0
        %3009 = vmatpush1.bf16.msra.mxu0 %v2903
        %3010 = vmatprep.subr.bf16.mxu0 0
        %3011 = vmatpush1.bf16.msra.mxu0 %v2902
        %3012 = vmatprep.subr.bf16.mxu0 0
        %3013 = vmatpush1.bf16.msra.mxu0 %v2901
        %3014 = vmatprep.subr.bf16.mxu0 0
        %3015 = vmatpush2.bf16.msra.mxu0 %v2916
        %3016 = vmatprep.subr.bf16.mxu0 0
        %3017 = vmatpush2.bf16.msra.mxu0 %v2915
        %3018 = vmatprep.subr.bf16.mxu0 0
        %3019 = vmatpush2.bf16.msra.mxu0 %v2914
        %3020 = vmatprep.subr.bf16.mxu0 0
        %3021 = vmatpush2.bf16.msra.mxu0 %v2913
        %3022 = vmatprep.subr.bf16.mxu0 0
        %3023 = vmatpush2.bf16.msra.mxu0 %v2912
        %3024 = vmatprep.subr.bf16.mxu0 0
        %3025 = vmatpush2.bf16.msra.mxu0 %v2911
        %3026 = vmatprep.subr.bf16.mxu0 0
        %3027 = vmatpush2.bf16.msra.mxu0 %v2910
        %3028 = vmatprep.subr.bf16.mxu0 0
        %3029 = vmatpush2.bf16.msra.mxu0 %v2909
        %3030 = vmatprep.mubr.bf16.mxu0 %v2681
        %3031 = vmatmul.mubr.bf16.gmra.mxu0 %v2680
        %v3032 = vpop.f32.mrf.mxu0
        %v3033 = vadd.f32 %v2984, %v3032
        %v3034 = vpop.f32.mrf.mxu0
        %v3035 = vpop.f32.mrf.mxu0
        %v3036 = vadd.f32 %v2987, %v3035
        %v3037 = vpop.f32.mrf.mxu0
        %3038 = vmatprep.mubr.bf16.mxu0 %v2685
        %3039 = vmatmul.mubr.bf16.gmra.mxu0 %v2684
        %v3040 = vpop.f32.mrf.mxu0
        %v3041 = vadd.f32 %v2992, %v3040
        %v3042 = vpop.f32.mrf.mxu0
        %v3043 = vpop.f32.mrf.mxu0
        %v3044 = vadd.f32 %v2995, %v3043
        %v3045 = vpop.f32.mrf.mxu0
        %3046 = vdwg.mxu0
        %v3047 = vadd.f32 %v2206, %v3033
        %v3048 = vadd.f32 %v2207, %v3036
        %v3049 = vadd.f32 %v2208, %v3041
        %v3050 = vadd.f32 %v2209, %v3044
        %3051 = vst [vmem:[#allocation2] sm:$0xff] %v3047
        %3052 = vst [vmem:[#allocation2 + $0x8] sm:$0xff] %v3048
        %3053 = vst [vmem:[#allocation2 + $0x10] sm:$0xff] %v3049
        %3054 = vst [vmem:[#allocation2 + $0x18] sm:$0xff] %v3050
        %p3055 = scmp.eq.s32.totalorder %s46, 1
        // Predicated region
        $region109: #{tpu_custom_call.1} parent=79 // pred_check
          %p3056 = pneg %p3055
        $region110: #{tpu_custom_call.1} parent=79 // pred_check_branch
          %3058 = sbr.rel (%p3056) target = $region112
        $region111: #{tpu_custom_call.1} parent=79 // pred_region
          %v3059 = vld [vmem:[%s13] sm:$0x1]
          %v3060 = vld [vmem:[%s14] sm:$0x1]
          %3061 = vadd.xlane.f32.xlu0 %v3047
          %v3062 = vpop.xlane.xlu0 %3061
          %3063 = vadd.xlane.f32.xlu0 %v3048
          %v3064 = vpop.xlane.xlu0 %3063
          %3065 = vadd.xlane.f32.xlu0 %v3049
          %v3066 = vpop.xlane.xlu0 %3065
          %3067 = vadd.xlane.f32.xlu0 %v3050
          %v3068 = vpop.xlane.xlu0 %3067
          %v3069 = vmul.f32 %v3062, %v855
          %v3070 = vmul.f32 %v3064, %v855
          %v3071 = vmul.f32 %v3066, %v855
          %v3072 = vmul.f32 %v3068, %v855
          %v3073 = vsub.f32 %v3047, %v3069
          %v3074 = vsub.f32 %v3048, %v3070
          %v3075 = vsub.f32 %v3049, %v3071
          %v3076 = vsub.f32 %v3050, %v3072
          %v3077 = vmul.f32 %v3073, %v3073
          %v3078 = vmul.f32 %v3074, %v3074
          %v3079 = vmul.f32 %v3075, %v3075
          %v3080 = vmul.f32 %v3076, %v3076
          %3081 = vadd.xlane.f32.xlu0 %v3077
          %v3082 = vpop.xlane.xlu0 %3081
          %3083 = vadd.xlane.f32.xlu0 %v3078
          %v3084 = vpop.xlane.xlu0 %3083
          %3085 = vadd.xlane.f32.xlu0 %v3079
          %v3086 = vpop.xlane.xlu0 %3085
          %3087 = vadd.xlane.f32.xlu0 %v3080
          %v3088 = vpop.xlane.xlu0 %3087
          %v3089 = vmul.f32 %v3082, %v855
          %v3090 = vmul.f32 %v3084, %v855
          %v3091 = vmul.f32 %v3086, %v855
          %v3092 = vmul.f32 %v3088, %v855
          %v3093 = vadd.f32 %v3089, 1e-05
          %v3094 = vadd.f32 %v3090, 1e-05
          %v3095 = vadd.f32 %v3091, 1e-05
          %v3096 = vadd.f32 %v3092, 1e-05
          %v3097 = vrsqrt.pop %v3093
          %v3098 = vrsqrt.pop %v3094
          %v3099 = vrsqrt.pop %v3095
          %v3100 = vrsqrt.pop %v3096
          %v3101 = vmul.f32 %v3073, %v3097
          %v3102 = vmul.f32 %v3074, %v3098
          %v3103 = vmul.f32 %v3075, %v3099
          %v3104 = vmul.f32 %v3076, %v3100
          %v3106 = vlaneseq
          %v3107 = vshrl.u32 %v3106, 7
          %v3108 = vsub.s32 0, %v3107
          %v3109 = vrot.slane %v3059, %v3108
          %v3111 = vmul.f32 %v3101, %v3109
          %v3112 = vmul.f32 %v3102, %v3109
          %v3113 = vmul.f32 %v3103, %v3109
          %v3114 = vmul.f32 %v3104, %v3109
          %v3116 = vlaneseq
          %v3117 = vshrl.u32 %v3116, 7
          %v3118 = vsub.s32 0, %v3117
          %v3119 = vrot.slane %v3060, %v3118
          %v3121 = vadd.f32 %v3111, %v3119
          %v3122 = vadd.f32 %v3112, %v3119
          %v3123 = vadd.f32 %v3113, %v3119
          %v3124 = vadd.f32 %v3114, %v3119
          %3125 = vst [vmem:[%s797] sm:$0xff] %v3121
          %3126 = vst [vmem:[%s797 + $0x8] sm:$0xff] %v3122
          %3127 = vst [vmem:[%s797 + $0x10] sm:$0xff] %v3123
          %3128 = vst [vmem:[%s797 + $0x18] sm:$0xff] %v3124
        $region112: #{tpu_custom_call.1} parent=79 // pred_fallthru
          _
        %s3129 = sand.u32 %s441, 1
        %s3130 = scalar_lea.sflag [#allocation5], %s3129
        %s3131 = sand.u32 %s441, 1
        %s3132 = smul.addr %s3131, 32
        %s3133 = scalar_lea.vmem [#allocation14], %s3132
        // Predicated region
        $region113: #{tpu_custom_call.1} parent=79 // pred_check
          %p3134 = pneg %p451
        $region114: #{tpu_custom_call.1} parent=79 // pred_check_branch
          %3136 = sbr.rel (%p3134) target = $region116
        $region115: #{tpu_custom_call.1} parent=79 // pred_region
          %s3138 = ssub.s32 512, 512
          %3139 = vsyncadd %s3130, %s3138
          %s3140 = smul.addr %s45, 4
          %s3141 = smul.addr %s3140, 128
          %s3142 = scalar_lea.hbm %s15, %s3141
          %s3143 = sshll.u32 %s3133, 4
          %s3144 = int_to_ptr.vmem [resolvable:$true] %s3143
          %3149 = dma.vmem_to_hbm [thread:$0]  %s3144, 512, %s3142, %s3130, 128, 128, 8
        $region116: #{tpu_custom_call.1} parent=79 // pred_fallthru
          _
      $region80: #{tpu_custom_call.1} parent=5 // pred_fallthru
        _
      %p3150 = scmp.le.s32.totalorder 2, %s36
      // Predicated region
      $region117: #{tpu_custom_call.1} parent=5 // pred_check
        %p3151 = pneg %p3150
      $region118: #{tpu_custom_call.1} parent=5 // pred_check_branch
        %3153 = sbr.rel (%p3151) target = $region120
      $region119: #{tpu_custom_call.1} parent=5 // pred_region
        %s3154 = ssub.s32 %s36, 2
        // Predicated region
        $region121: #{tpu_custom_call.1} parent=119 // pred_check
          %p3155 = pneg %p457
        $region122: #{tpu_custom_call.1} parent=119 // pred_check_branch
          %3157 = sbr.rel (%p3155) target = $region124
        $region123: #{tpu_custom_call.1} parent=119 // pred_region
          %s3158 = sand.u32 %s442, 1
          %s3159 = scalar_lea.sflag [#allocation5], %s3158
          %s3160 = sand.u32 %s442, 1
          %s3161 = smul.addr %s3160, 32
          %s3162 = scalar_lea.vmem [#allocation14], %s3161
          %3163 = dma.done %s3159, 512
        $region124: #{tpu_custom_call.1} parent=119 // pred_fallthru
          _
      $region120: #{tpu_custom_call.1} parent=5 // pred_fallthru
        _
    $region6: #{tpu_custom_call.1} parent=1 // loop_footer
      %s40 = sadd.s32 1, %s36
    $region7: #{tpu_custom_call.1} parent=1 // loop_footer_branch
      %35 = sbr.rel target = $region3
    $region8: #{tpu_custom_call.1} parent=1 // loop_exit
      _
    %3164 = vsyncpa [#allocation4], 1
    %s3165 = scalar_lea.sflag [#allocation4], 1
    %3166 = vsyncpa %s3165, 1
    %3167 = vsyncpa [#allocation7], 1
    %s3168 = scalar_lea.sflag [#allocation7], 1
    %3169 = vsyncpa %s3168, 1
    %3170 = vsyncpa [#allocation10], 1
    %s3171 = scalar_lea.sflag [#allocation10], 1
    %3172 = vsyncpa %s3171, 1
    %3173 = vsyncpa [#allocation13], 1
    %s3174 = scalar_lea.sflag [#allocation13], 1
    %3175 = vsyncpa %s3174, 1
    %3176 = vsyncpa [#allocation5], 1
    %s3177 = scalar_lea.sflag [#allocation5], 1
    %3178 = vsyncpa %s3177, 1

</llo_original>
